<compile_context>
chip_gen: v7x
topology: tpu7x:2x2x1
jax: 0.10.0
libtpu: 0.0.40
codegen_flags: <defaults>
</compile_context>

<pallas_src>
import jax
import jax.numpy as jnp
from jax.experimental import pallas as pl
from jax.experimental.pallas import tpu as pltpu

_TAPS = tuple((dy, dx) for dy in range(3) for dx in range(3))


def _fused_autoencoder_kernel(x_ref, w1_ref, b1_ref, w2_ref, b2_ref,
                              wt1_ref, bt1_ref, wt2_ref, bt2_ref,
                              o_ref, p1g_ref, m2p_ref, p2c_ref):
    f32 = jnp.float32

    # ---------------- conv1: 1 -> 16, 3x3, pad=1 (input pre-padded) + ReLU ----------------
    # Cin=1 / K=9 would waste the MXU -> accumulate 9 shifted VPU FMA taps, channels on lanes.
    xp = x_ref[0]                                                # (18, 18, 1) [h_pad, w_pad, cin]
    acc1 = jnp.zeros((16, 16, 16), f32)                          # [h, w, cout]
    for t, (dy, dx) in enumerate(_TAPS):
        acc1 = acc1 + xp[dy:dy + 16, dx:dx + 16, :] * w1_ref[t:t + 1, :]
    a1 = jnp.maximum(acc1 + b1_ref[...], 0.0)

    # ---------------- maxpool1 2x2/2 (fused; stays on-chip) ----------------
    a1r = a1.reshape(8, 2, 16, 16)                               # [i, dh, w, c]  (leading split)
    a1h = jnp.maximum(a1r[:, 0], a1r[:, 1])                      # (8, 16, 16)
    m1 = jnp.maximum(a1h[:, 0:15, :], a1h[:, 1:16, :])           # pooled value sits at even w
    # store in a zero-padded, stride-2-column layout so conv2's 3x3 taps remain static slices
    p1g_ref[...] = jnp.zeros((10, 20, 16), f32)
    p1g_ref[1:9, 2:17, :] = m1                                   # p1[i, j, c] -> p1g[i+1, 2j+2, c]

    # ---------------- conv2: 16 -> 4, 3x3, pad=1 + ReLU (9 shifted-window MXU dots) ----------
    acc2 = jnp.zeros((128, 4), f32)                              # valid rows: 16*h + 2*w
    for t, (dy, dx) in enumerate(_TAPS):
        patch = p1g_ref[dy:dy + 8, 2 * dx:2 * dx + 16, :].reshape(128, 16)
        acc2 = acc2 + jnp.dot(patch, w2_ref[t], preferred_element_type=f32)
    a2 = jnp.maximum(acc2 + b2_ref[...], 0.0)

    # ---------------- maxpool2 2x2/2, then compact the 16 valid pixels ----------------
    a2r = a2.reshape(4, 2, 16, 4)                                # [i2, dh, l, c]
    m2h = jnp.maximum(a2r[:, 0], a2r[:, 1])                      # (4, 16, 4), valid at l = 2*w
    m2p_ref[...] = jnp.zeros((4, 18, 4), f32)
    m2p_ref[:, 0:16, :] = m2h
    p2g = jnp.maximum(m2p_ref[:, 0:16, :], m2p_ref[:, 2:18, :]).reshape(64, 4)
    for i2 in range(4):                                          # valid rows: 16*i2 + 4*j4
        for j4 in range(4):
            src = 16 * i2 + 4 * j4
            dst = 4 * i2 + j4
            p2c_ref[dst:dst + 1, :] = p2g[src:src + 1, :]        # (16, 4): rows = 4*i2 + j4

    # ---------------- decoder ----------------
    # t_conv1 (4->16, k=2, s=2): stride==kernel -> per-pixel matmul with taps packed into
    # columns; K=4 is too shallow for the MXU -> 4 VPU FMAs.
    acc3 = jnp.zeros((16, 64), f32)
    for ci in range(4):
        acc3 = acc3 + p2c_ref[:, ci:ci + 1] * wt1_ref[ci:ci + 1, :]
    y1 = jnp.maximum(acc3 + bt1_ref[...], 0.0)                   # (16, 64)
    # t_conv2 (16->1, k=2, s=2) folded into one block-diagonal (64, 16) MXU matmul (K=64).
    y2 = jnp.dot(y1, wt2_ref[...], preferred_element_type=f32) + bt2_ref[...]   # (16, 16)
    # sigmoid: exp and approximate reciprocal both ride the EUP slot
    o_ref[0] = pl.reciprocal(1.0 + jnp.exp(-y2), approx=True)


def _prep_kernel_params(params):
    """Repack PyTorch-layout weights into the layouts the fused kernel consumes."""
    w1, b1, w2, b2, tw1, tb1, tw2, tb2 = params
    f32 = jnp.float32
    w1k = jnp.transpose(w1, (2, 3, 1, 0)).reshape(9, 16).astype(f32)      # [tap, cout]
    b1k = b1.reshape(1, 16).astype(f32)
    w2k = jnp.transpose(w2, (2, 3, 1, 0)).reshape(9, 16, 4).astype(f32)   # [tap, cin, cout]
    b2k = b2.reshape(1, 4).astype(f32)
    wt1 = jnp.transpose(tw1, (0, 2, 3, 1)).reshape(4, 64).astype(f32)     # [cin, (di,dj,cout)]
    bt1 = jnp.tile(tb1, 4).reshape(1, 64).astype(f32)
    # Fold t_conv2 into a block-diagonal (64, 16) matrix:
    #   rows: (di*2+dj)*16 + cin          (matches the t_conv1 column packing)
    #   cols: 4*(2*di+ei) + (2*dj+ej)     (raster position inside the output 4x4 sub-block)
    eye2 = jnp.eye(2, dtype=f32)
    wt2 = jnp.einsum('ad,bf,ceg->abcdefg', eye2, eye2,
                     tw2[:, 0].astype(f32)).reshape(64, 16)
    bt2 = jnp.tile(tb2, 16).reshape(1, 16).astype(f32)
    return w1k, b1k, w2k, b2k, wt1, bt1, wt2, bt2


@jax.jit
def conv_autoencoder_forward(x_nchw, params):
    f32 = jnp.float32
    n = x_nchw.shape[0]
    kparams = _prep_kernel_params(params)
    # Only pre-kernel data prep: NCHW -> zero-padded (n, 18, 18, 1) single-channel image.
    xpad = jnp.pad(x_nchw.astype(f32).reshape(n, 16, 16),
                   ((0, 0), (1, 1), (1, 1)))[..., None]

    out_blocked = pl.pallas_call(
        _fused_autoencoder_kernel,
        out_shape=jax.ShapeDtypeStruct((n, 16, 16), f32),
        grid_spec=pltpu.PrefetchScalarGridSpec(
            num_scalar_prefetch=0,
            grid=(n,),
            in_specs=[
                pl.BlockSpec((1, 18, 18, 1), lambda i: (i, 0, 0, 0)),  # padded image
                pl.BlockSpec((9, 16), lambda i: (0, 0)),               # conv1 weight
                pl.BlockSpec((1, 16), lambda i: (0, 0)),               # conv1 bias
                pl.BlockSpec((9, 16, 4), lambda i: (0, 0, 0)),         # conv2 weight
                pl.BlockSpec((1, 4), lambda i: (0, 0)),                # conv2 bias
                pl.BlockSpec((4, 64), lambda i: (0, 0)),               # t_conv1 weight (packed)
                pl.BlockSpec((1, 64), lambda i: (0, 0)),               # t_conv1 bias (tiled)
                pl.BlockSpec((64, 16), lambda i: (0, 0)),              # t_conv2 weight (block-diag)
                pl.BlockSpec((1, 16), lambda i: (0, 0)),               # t_conv2 bias (tiled)
            ],
            out_specs=pl.BlockSpec((1, 16, 16), lambda i: (i, 0, 0)),
            scratch_shapes=[
                pltpu.VMEM((10, 20, 16), jnp.float32),   # zero-padded conv2 input
                pltpu.VMEM((4, 18, 4), jnp.float32),     # pool2 staging (zero-padded tail)
                pltpu.VMEM((16, 4), jnp.float32),        # compacted pool2 output
            ]),
        compiler_params=pltpu.CompilerParams(
            dimension_semantics=("parallel",)),
    )(xpad, *kparams)

    # Kernel output is blocked: out_blocked[n, 4*i2 + j4, 4*u + v] == img[n, 4*i2 + u, 4*j4 + v].
    out = (out_blocked.reshape(n, 4, 4, 4, 4)
           .transpose(0, 1, 3, 2, 4)
           .reshape(n, 1, 16, 16))
    return out


def _reference_forward(x_nchw, params):
    """Pure-JAX (XLA) reference with PyTorch semantics, for correctness checking."""
    w1, b1, w2, b2, tw1, tb1, tw2, tb2 = params
    dn = ('NCHW', 'OIHW', 'NCHW')

    def conv_relu(x, w, b):
        y = jax.lax.conv_general_dilated(x, w, (1, 1), ((1, 1), (1, 1)),
                                         dimension_numbers=dn)
        return jnp.maximum(y + b[None, :, None, None], 0.0)

    def pool(x):
        return jax.lax.reduce_window(x, -jnp.inf, jax.lax.max,
                                     (1, 1, 2, 2), (1, 1, 2, 2), 'VALID')

    def tconv(x, w, b):
        # ConvTranspose2d(k=2, s=2): out[n,co,2i+u,2j+v] = b[co] + sum_ci x[n,ci,i,j]*w[ci,co,u,v]
        y = jnp.einsum('ncij,couv->noiujv', x, w)
        nn, co, hh, _, ww, _ = y.shape
        return y.reshape(nn, co, 2 * hh, 2 * ww) + b[None, :, None, None]

    x = pool(conv_relu(x_nchw, w1, b1))
    x = pool(conv_relu(x, w2, b2))
    x = jnp.maximum(tconv(x, tw1, tb1), 0.0)
    return jax.nn.sigmoid(tconv(x, tw2, tb2))


def init_params(key):
    ks = jax.random.split(key, 8)
    s = 0.1
    w1 = s * jax.random.normal(ks[0], (16, 1, 3, 3), jnp.float32)   # Conv2d(1,16,3,p=1)
    b1 = s * jax.random.normal(ks[1], (16,), jnp.float32)
    w2 = s * jax.random.normal(ks[2], (4, 16, 3, 3), jnp.float32)   # Conv2d(16,4,3,p=1)
    b2 = s * jax.random.normal(ks[3], (4,), jnp.float32)
    tw1 = s * jax.random.normal(ks[4], (4, 16, 2, 2), jnp.float32)  # ConvTranspose2d(4,16,2,s=2)
    tb1 = s * jax.random.normal(ks[5], (16,), jnp.float32)
    tw2 = s * jax.random.normal(ks[6], (16, 1, 2, 2), jnp.float32)  # ConvTranspose2d(16,1,2,s=2)
    tb2 = s * jax.random.normal(ks[7], (1,), jnp.float32)
    return (w1, b1, w2, b2, tw1, tb1, tw2, tb2)


if __name__ == "__main__":
    key = jax.random.PRNGKey(0)
    kx, kp = jax.random.split(key)
    x = jax.random.normal(kx, (2, 1, 16, 16), jnp.float32)  # N=2, C=1, 16x16 (MNIST-like)
    params = init_params(kp)

    out = jax.block_until_ready(conv_autoencoder_forward(x, params))

    assert out.shape == (2, 1, 16, 16), out.shape
    assert bool(jnp.all(jnp.isfinite(out)))
    # sigmoid range (kernel uses EUP approx reciprocal: may overshoot 1.0 by <~2.5e-4)
    assert bool(jnp.all((out >= 0.0) & (out <= 1.0 + 1e-3)))

    ref = _reference_forward(x, params)
    err = float(jnp.max(jnp.abs(out - ref)))
    assert err < 2e-3, f"max abs error vs reference: {err}"

    print("KERNEL_OK")
</pallas_src>

<mosaic_0001>
module attributes {stable_mosaic.version = 11 : i64} {
  func.func @_fused_autoencoder_kernel(%arg0: i32, %arg1: memref<1x18x18x1xf32, #tpu.memory_space<vmem>>, %arg2: memref<9x16xf32, #tpu.memory_space<vmem>>, %arg3: memref<1x16xf32, #tpu.memory_space<vmem>>, %arg4: memref<9x16x4xf32, #tpu.memory_space<vmem>>, %arg5: memref<1x4xf32, #tpu.memory_space<vmem>>, %arg6: memref<4x64xf32, #tpu.memory_space<vmem>>, %arg7: memref<1x64xf32, #tpu.memory_space<vmem>>, %arg8: memref<64x16xf32, #tpu.memory_space<vmem>>, %arg9: memref<1x16xf32, #tpu.memory_space<vmem>>, %arg10: memref<1x16x16xf32, #tpu.memory_space<vmem>>, %arg11: memref<10x20x16xf32, #tpu.memory_space<vmem>>, %arg12: memref<4x18x4xf32, #tpu.memory_space<vmem>>, %arg13: memref<16x4xf32, #tpu.memory_space<vmem>>) attributes {dimension_semantics = [#tpu.dimension_semantics<parallel>], iteration_bounds = array<i64: 2>, scalar_prefetch = 0 : i64, scratch_operands = 3 : i64, tpu.core_type = #tpu.core_type<tc>, window_params = [{transform_indices = @transform_0, window_bounds = array<i64: 1, 18, 18, 1>}, {pipeline_mode = #tpu.pipeline_mode<synchronous>, transform_indices = @transform_1, window_bounds = array<i64: 9, 16>}, {pipeline_mode = #tpu.pipeline_mode<synchronous>, transform_indices = @transform_2, window_bounds = array<i64: 1, 16>}, {pipeline_mode = #tpu.pipeline_mode<synchronous>, transform_indices = @transform_3, window_bounds = array<i64: 9, 16, 4>}, {pipeline_mode = #tpu.pipeline_mode<synchronous>, transform_indices = @transform_4, window_bounds = array<i64: 1, 4>}, {pipeline_mode = #tpu.pipeline_mode<synchronous>, transform_indices = @transform_5, window_bounds = array<i64: 4, 64>}, {pipeline_mode = #tpu.pipeline_mode<synchronous>, transform_indices = @transform_6, window_bounds = array<i64: 1, 64>}, {pipeline_mode = #tpu.pipeline_mode<synchronous>, transform_indices = @transform_7, window_bounds = array<i64: 64, 16>}, {pipeline_mode = #tpu.pipeline_mode<synchronous>, transform_indices = @transform_8, window_bounds = array<i64: 1, 16>}, {transform_indices = @transform_9, window_bounds = array<i64: 1, 16, 16>}]} {
    %c0 = arith.constant 0 : index
    %c0_0 = arith.constant 0 : index
    %c0_1 = arith.constant 0 : index
    %c0_2 = arith.constant 0 : index
    %0 = vector.load %arg1[%c0, %c0_0, %c0_1, %c0_2] : memref<1x18x18x1xf32, #tpu.memory_space<vmem>>, vector<1x18x18x1xf32>
    %1 = vector.shape_cast %0 : vector<1x18x18x1xf32> to vector<18x18x1xf32>
    %cst = arith.constant 0.000000e+00 : f32
    %2 = vector.broadcast %cst : f32 to vector<16x16x16xf32>
    %3 = vector.extract_strided_slice %1 {offsets = [0, 0, 0], sizes = [16, 16, 1], strides = [1, 1, 1]} : vector<18x18x1xf32> to vector<16x16x1xf32>
    %c0_3 = arith.constant 0 : index
    %c0_4 = arith.constant 0 : index
    %4 = vector.load %arg2[%c0_3, %c0_4] : memref<9x16xf32, #tpu.memory_space<vmem>>, vector<1x16xf32>
    %5 = vector.shape_cast %4 : vector<1x16xf32> to vector<1x1x16xf32>
    %6 = vector.broadcast %3 : vector<16x16x1xf32> to vector<16x16x16xf32>
    %7 = vector.broadcast %5 : vector<1x1x16xf32> to vector<16x16x16xf32>
    %8 = arith.mulf %6, %7 : vector<16x16x16xf32>
    %9 = arith.addf %2, %8 : vector<16x16x16xf32>
    %10 = vector.extract_strided_slice %1 {offsets = [0, 1, 0], sizes = [16, 16, 1], strides = [1, 1, 1]} : vector<18x18x1xf32> to vector<16x16x1xf32>
    %c1 = arith.constant 1 : index
    %c0_5 = arith.constant 0 : index
    %11 = vector.load %arg2[%c1, %c0_5] : memref<9x16xf32, #tpu.memory_space<vmem>>, vector<1x16xf32>
    %12 = vector.shape_cast %11 : vector<1x16xf32> to vector<1x1x16xf32>
    %13 = vector.broadcast %10 : vector<16x16x1xf32> to vector<16x16x16xf32>
    %14 = vector.broadcast %12 : vector<1x1x16xf32> to vector<16x16x16xf32>
    %15 = arith.mulf %13, %14 : vector<16x16x16xf32>
    %16 = arith.addf %9, %15 : vector<16x16x16xf32>
    %17 = vector.extract_strided_slice %1 {offsets = [0, 2, 0], sizes = [16, 16, 1], strides = [1, 1, 1]} : vector<18x18x1xf32> to vector<16x16x1xf32>
    %c2 = arith.constant 2 : index
    %c0_6 = arith.constant 0 : index
    %18 = vector.load %arg2[%c2, %c0_6] : memref<9x16xf32, #tpu.memory_space<vmem>>, vector<1x16xf32>
    %19 = vector.shape_cast %18 : vector<1x16xf32> to vector<1x1x16xf32>
    %20 = vector.broadcast %17 : vector<16x16x1xf32> to vector<16x16x16xf32>
    %21 = vector.broadcast %19 : vector<1x1x16xf32> to vector<16x16x16xf32>
    %22 = arith.mulf %20, %21 : vector<16x16x16xf32>
    %23 = arith.addf %16, %22 : vector<16x16x16xf32>
    %24 = vector.extract_strided_slice %1 {offsets = [1, 0, 0], sizes = [16, 16, 1], strides = [1, 1, 1]} : vector<18x18x1xf32> to vector<16x16x1xf32>
    %c3 = arith.constant 3 : index
    %c0_7 = arith.constant 0 : index
    %25 = vector.load %arg2[%c3, %c0_7] : memref<9x16xf32, #tpu.memory_space<vmem>>, vector<1x16xf32>
    %26 = vector.shape_cast %25 : vector<1x16xf32> to vector<1x1x16xf32>
    %27 = vector.broadcast %24 : vector<16x16x1xf32> to vector<16x16x16xf32>
    %28 = vector.broadcast %26 : vector<1x1x16xf32> to vector<16x16x16xf32>
    %29 = arith.mulf %27, %28 : vector<16x16x16xf32>
    %30 = arith.addf %23, %29 : vector<16x16x16xf32>
    %31 = vector.extract_strided_slice %1 {offsets = [1, 1, 0], sizes = [16, 16, 1], strides = [1, 1, 1]} : vector<18x18x1xf32> to vector<16x16x1xf32>
    %c4 = arith.constant 4 : index
    %c0_8 = arith.constant 0 : index
    %32 = vector.load %arg2[%c4, %c0_8] : memref<9x16xf32, #tpu.memory_space<vmem>>, vector<1x16xf32>
    %33 = vector.shape_cast %32 : vector<1x16xf32> to vector<1x1x16xf32>
    %34 = vector.broadcast %31 : vector<16x16x1xf32> to vector<16x16x16xf32>
    %35 = vector.broadcast %33 : vector<1x1x16xf32> to vector<16x16x16xf32>
    %36 = arith.mulf %34, %35 : vector<16x16x16xf32>
    %37 = arith.addf %30, %36 : vector<16x16x16xf32>
    %38 = vector.extract_strided_slice %1 {offsets = [1, 2, 0], sizes = [16, 16, 1], strides = [1, 1, 1]} : vector<18x18x1xf32> to vector<16x16x1xf32>
    %c5 = arith.constant 5 : index
    %c0_9 = arith.constant 0 : index
    %39 = vector.load %arg2[%c5, %c0_9] : memref<9x16xf32, #tpu.memory_space<vmem>>, vector<1x16xf32>
    %40 = vector.shape_cast %39 : vector<1x16xf32> to vector<1x1x16xf32>
    %41 = vector.broadcast %38 : vector<16x16x1xf32> to vector<16x16x16xf32>
    %42 = vector.broadcast %40 : vector<1x1x16xf32> to vector<16x16x16xf32>
    %43 = arith.mulf %41, %42 : vector<16x16x16xf32>
    %44 = arith.addf %37, %43 : vector<16x16x16xf32>
    %45 = vector.extract_strided_slice %1 {offsets = [2, 0, 0], sizes = [16, 16, 1], strides = [1, 1, 1]} : vector<18x18x1xf32> to vector<16x16x1xf32>
    %c6 = arith.constant 6 : index
    %c0_10 = arith.constant 0 : index
    %46 = vector.load %arg2[%c6, %c0_10] : memref<9x16xf32, #tpu.memory_space<vmem>>, vector<1x16xf32>
    %47 = vector.shape_cast %46 : vector<1x16xf32> to vector<1x1x16xf32>
    %48 = vector.broadcast %45 : vector<16x16x1xf32> to vector<16x16x16xf32>
    %49 = vector.broadcast %47 : vector<1x1x16xf32> to vector<16x16x16xf32>
    %50 = arith.mulf %48, %49 : vector<16x16x16xf32>
    %51 = arith.addf %44, %50 : vector<16x16x16xf32>
    %52 = vector.extract_strided_slice %1 {offsets = [2, 1, 0], sizes = [16, 16, 1], strides = [1, 1, 1]} : vector<18x18x1xf32> to vector<16x16x1xf32>
    %c7 = arith.constant 7 : index
    %c0_11 = arith.constant 0 : index
    %53 = vector.load %arg2[%c7, %c0_11] : memref<9x16xf32, #tpu.memory_space<vmem>>, vector<1x16xf32>
    %54 = vector.shape_cast %53 : vector<1x16xf32> to vector<1x1x16xf32>
    %55 = vector.broadcast %52 : vector<16x16x1xf32> to vector<16x16x16xf32>
    %56 = vector.broadcast %54 : vector<1x1x16xf32> to vector<16x16x16xf32>
    %57 = arith.mulf %55, %56 : vector<16x16x16xf32>
    %58 = arith.addf %51, %57 : vector<16x16x16xf32>
    %59 = vector.extract_strided_slice %1 {offsets = [2, 2, 0], sizes = [16, 16, 1], strides = [1, 1, 1]} : vector<18x18x1xf32> to vector<16x16x1xf32>
    %c8 = arith.constant 8 : index
    %c0_12 = arith.constant 0 : index
    %60 = vector.load %arg2[%c8, %c0_12] : memref<9x16xf32, #tpu.memory_space<vmem>>, vector<1x16xf32>
    %61 = vector.shape_cast %60 : vector<1x16xf32> to vector<1x1x16xf32>
    %62 = vector.broadcast %59 : vector<16x16x1xf32> to vector<16x16x16xf32>
    %63 = vector.broadcast %61 : vector<1x1x16xf32> to vector<16x16x16xf32>
    %64 = arith.mulf %62, %63 : vector<16x16x16xf32>
    %65 = arith.addf %58, %64 : vector<16x16x16xf32>
    %c0_13 = arith.constant 0 : index
    %c0_14 = arith.constant 0 : index
    %66 = vector.load %arg3[%c0_13, %c0_14] : memref<1x16xf32, #tpu.memory_space<vmem>>, vector<1x16xf32>
    %67 = vector.shape_cast %66 : vector<1x16xf32> to vector<1x1x16xf32>
    %68 = vector.broadcast %67 : vector<1x1x16xf32> to vector<16x16x16xf32>
    %69 = arith.addf %65, %68 : vector<16x16x16xf32>
    %cst_15 = arith.constant 0.000000e+00 : f32
    %70 = vector.broadcast %cst_15 : f32 to vector<16x16x16xf32>
    %71 = arith.maximumf %69, %70 : vector<16x16x16xf32>
    %72 = vector.shape_cast %71 : vector<16x16x16xf32> to vector<8x2x16x16xf32>
    %73 = vector.extract_strided_slice %72 {offsets = [0, 0, 0, 0], sizes = [8, 1, 16, 16], strides = [1, 1, 1, 1]} : vector<8x2x16x16xf32> to vector<8x1x16x16xf32>
    %74 = vector.shape_cast %73 : vector<8x1x16x16xf32> to vector<8x16x16xf32>
    %75 = vector.extract_strided_slice %72 {offsets = [0, 1, 0, 0], sizes = [8, 1, 16, 16], strides = [1, 1, 1, 1]} : vector<8x2x16x16xf32> to vector<8x1x16x16xf32>
    %76 = vector.shape_cast %75 : vector<8x1x16x16xf32> to vector<8x16x16xf32>
    %77 = arith.maximumf %74, %76 : vector<8x16x16xf32>
    %78 = vector.extract_strided_slice %77 {offsets = [0, 0, 0], sizes = [8, 15, 16], strides = [1, 1, 1]} : vector<8x16x16xf32> to vector<8x15x16xf32>
    %79 = vector.extract_strided_slice %77 {offsets = [0, 1, 0], sizes = [8, 15, 16], strides = [1, 1, 1]} : vector<8x16x16xf32> to vector<8x15x16xf32>
    %80 = arith.maximumf %78, %79 : vector<8x15x16xf32>
    %cst_16 = arith.constant 0.000000e+00 : f32
    %81 = vector.broadcast %cst_16 : f32 to vector<10x20x16xf32>
    %c0_17 = arith.constant 0 : index
    %c0_18 = arith.constant 0 : index
    %c0_19 = arith.constant 0 : index
    %82 = vector.load %arg11[%c0_17, %c0_18, %c0_19] : memref<10x20x16xf32, #tpu.memory_space<vmem>>, vector<10x20x16xf32>
    tpu.vector_store %arg11[%c0_17, %c0_18, %c0_19], %81 {strides = array<i32>} : memref<10x20x16xf32, #tpu.memory_space<vmem>>, vector<10x20x16xf32>,
    %c1_20 = arith.constant 1 : index
    %c2_21 = arith.constant 2 : index
    %c0_22 = arith.constant 0 : index
    %83 = vector.load %arg11[%c1_20, %c2_21, %c0_22] : memref<10x20x16xf32, #tpu.memory_space<vmem>>, vector<8x15x16xf32>
    tpu.vector_store %arg11[%c1_20, %c2_21, %c0_22], %80 {strides = array<i32>} : memref<10x20x16xf32, #tpu.memory_space<vmem>>, vector<8x15x16xf32>,
    %cst_23 = arith.constant 0.000000e+00 : f32
    %84 = vector.broadcast %cst_23 : f32 to vector<128x4xf32>
    %c0_24 = arith.constant 0 : index
    %c0_25 = arith.constant 0 : index
    %c0_26 = arith.constant 0 : index
    %85 = vector.load %arg11[%c0_24, %c0_25, %c0_26] : memref<10x20x16xf32, #tpu.memory_space<vmem>>, vector<8x16x16xf32>
    %86 = vector.shape_cast %85 : vector<8x16x16xf32> to vector<128x16xf32>
    %c0_27 = arith.constant 0 : index
    %c0_28 = arith.constant 0 : index
    %c0_29 = arith.constant 0 : index
    %87 = vector.load %arg4[%c0_27, %c0_28, %c0_29] : memref<9x16x4xf32, #tpu.memory_space<vmem>>, vector<1x16x4xf32>
    %88 = vector.shape_cast %87 : vector<1x16x4xf32> to vector<16x4xf32>
    %cst_30 = arith.constant dense<0.000000e+00> : vector<128x4xf32>
    %89 = tpu.matmul %86, %88, %cst_30 {dimension_numbers = #tpu.dot_dimension_numbers<[1], [0], [0], [1], [0, 0, 1, 1], [], []>} : vector<128x16xf32>, vector<16x4xf32>, vector<128x4xf32> -> vector<128x4xf32>
    %90 = arith.addf %84, %89 : vector<128x4xf32>
    %c0_31 = arith.constant 0 : index
    %c2_32 = arith.constant 2 : index
    %c0_33 = arith.constant 0 : index
    %91 = vector.load %arg11[%c0_31, %c2_32, %c0_33] : memref<10x20x16xf32, #tpu.memory_space<vmem>>, vector<8x16x16xf32>
    %92 = vector.shape_cast %91 : vector<8x16x16xf32> to vector<128x16xf32>
    %c1_34 = arith.constant 1 : index
    %c0_35 = arith.constant 0 : index
    %c0_36 = arith.constant 0 : index
    %93 = vector.load %arg4[%c1_34, %c0_35, %c0_36] : memref<9x16x4xf32, #tpu.memory_space<vmem>>, vector<1x16x4xf32>
    %94 = vector.shape_cast %93 : vector<1x16x4xf32> to vector<16x4xf32>
    %cst_37 = arith.constant dense<0.000000e+00> : vector<128x4xf32>
    %95 = tpu.matmul %92, %94, %cst_37 {dimension_numbers = #tpu.dot_dimension_numbers<[1], [0], [0], [1], [0, 0, 1, 1], [], []>} : vector<128x16xf32>, vector<16x4xf32>, vector<128x4xf32> -> vector<128x4xf32>
    %96 = arith.addf %90, %95 : vector<128x4xf32>
    %c0_38 = arith.constant 0 : index
    %c4_39 = arith.constant 4 : index
    %c0_40 = arith.constant 0 : index
    %97 = vector.load %arg11[%c0_38, %c4_39, %c0_40] : memref<10x20x16xf32, #tpu.memory_space<vmem>>, vector<8x16x16xf32>
    %98 = vector.shape_cast %97 : vector<8x16x16xf32> to vector<128x16xf32>
    %c2_41 = arith.constant 2 : index
    %c0_42 = arith.constant 0 : index
    %c0_43 = arith.constant 0 : index
    %99 = vector.load %arg4[%c2_41, %c0_42, %c0_43] : memref<9x16x4xf32, #tpu.memory_space<vmem>>, vector<1x16x4xf32>
    %100 = vector.shape_cast %99 : vector<1x16x4xf32> to vector<16x4xf32>
    %cst_44 = arith.constant dense<0.000000e+00> : vector<128x4xf32>
    %101 = tpu.matmul %98, %100, %cst_44 {dimension_numbers = #tpu.dot_dimension_numbers<[1], [0], [0], [1], [0, 0, 1, 1], [], []>} : vector<128x16xf32>, vector<16x4xf32>, vector<128x4xf32> -> vector<128x4xf32>
    %102 = arith.addf %96, %101 : vector<128x4xf32>
    %c1_45 = arith.constant 1 : index
    %c0_46 = arith.constant 0 : index
    %c0_47 = arith.constant 0 : index
    %103 = vector.load %arg11[%c1_45, %c0_46, %c0_47] : memref<10x20x16xf32, #tpu.memory_space<vmem>>, vector<8x16x16xf32>
    %104 = vector.shape_cast %103 : vector<8x16x16xf32> to vector<128x16xf32>
    %c3_48 = arith.constant 3 : index
    %c0_49 = arith.constant 0 : index
    %c0_50 = arith.constant 0 : index
    %105 = vector.load %arg4[%c3_48, %c0_49, %c0_50] : memref<9x16x4xf32, #tpu.memory_space<vmem>>, vector<1x16x4xf32>
    %106 = vector.shape_cast %105 : vector<1x16x4xf32> to vector<16x4xf32>
    %cst_51 = arith.constant dense<0.000000e+00> : vector<128x4xf32>
    %107 = tpu.matmul %104, %106, %cst_51 {dimension_numbers = #tpu.dot_dimension_numbers<[1], [0], [0], [1], [0, 0, 1, 1], [], []>} : vector<128x16xf32>, vector<16x4xf32>, vector<128x4xf32> -> vector<128x4xf32>
    %108 = arith.addf %102, %107 : vector<128x4xf32>
    %c1_52 = arith.constant 1 : index
    %c2_53 = arith.constant 2 : index
    %c0_54 = arith.constant 0 : index
    %109 = vector.load %arg11[%c1_52, %c2_53, %c0_54] : memref<10x20x16xf32, #tpu.memory_space<vmem>>, vector<8x16x16xf32>
    %110 = vector.shape_cast %109 : vector<8x16x16xf32> to vector<128x16xf32>
    %c4_55 = arith.constant 4 : index
    %c0_56 = arith.constant 0 : index
    %c0_57 = arith.constant 0 : index
    %111 = vector.load %arg4[%c4_55, %c0_56, %c0_57] : memref<9x16x4xf32, #tpu.memory_space<vmem>>, vector<1x16x4xf32>
    %112 = vector.shape_cast %111 : vector<1x16x4xf32> to vector<16x4xf32>
    %cst_58 = arith.constant dense<0.000000e+00> : vector<128x4xf32>
    %113 = tpu.matmul %110, %112, %cst_58 {dimension_numbers = #tpu.dot_dimension_numbers<[1], [0], [0], [1], [0, 0, 1, 1], [], []>} : vector<128x16xf32>, vector<16x4xf32>, vector<128x4xf32> -> vector<128x4xf32>
    %114 = arith.addf %108, %113 : vector<128x4xf32>
    %c1_59 = arith.constant 1 : index
    %c4_60 = arith.constant 4 : index
    %c0_61 = arith.constant 0 : index
    %115 = vector.load %arg11[%c1_59, %c4_60, %c0_61] : memref<10x20x16xf32, #tpu.memory_space<vmem>>, vector<8x16x16xf32>
    %116 = vector.shape_cast %115 : vector<8x16x16xf32> to vector<128x16xf32>
    %c5_62 = arith.constant 5 : index
    %c0_63 = arith.constant 0 : index
    %c0_64 = arith.constant 0 : index
    %117 = vector.load %arg4[%c5_62, %c0_63, %c0_64] : memref<9x16x4xf32, #tpu.memory_space<vmem>>, vector<1x16x4xf32>
    %118 = vector.shape_cast %117 : vector<1x16x4xf32> to vector<16x4xf32>
    %cst_65 = arith.constant dense<0.000000e+00> : vector<128x4xf32>
    %119 = tpu.matmul %116, %118, %cst_65 {dimension_numbers = #tpu.dot_dimension_numbers<[1], [0], [0], [1], [0, 0, 1, 1], [], []>} : vector<128x16xf32>, vector<16x4xf32>, vector<128x4xf32> -> vector<128x4xf32>
    %120 = arith.addf %114, %119 : vector<128x4xf32>
    %c2_66 = arith.constant 2 : index
    %c0_67 = arith.constant 0 : index
    %c0_68 = arith.constant 0 : index
    %121 = vector.load %arg11[%c2_66, %c0_67, %c0_68] : memref<10x20x16xf32, #tpu.memory_space<vmem>>, vector<8x16x16xf32>
    %122 = vector.shape_cast %121 : vector<8x16x16xf32> to vector<128x16xf32>
    %c6_69 = arith.constant 6 : index
    %c0_70 = arith.constant 0 : index
    %c0_71 = arith.constant 0 : index
    %123 = vector.load %arg4[%c6_69, %c0_70, %c0_71] : memref<9x16x4xf32, #tpu.memory_space<vmem>>, vector<1x16x4xf32>
    %124 = vector.shape_cast %123 : vector<1x16x4xf32> to vector<16x4xf32>
    %cst_72 = arith.constant dense<0.000000e+00> : vector<128x4xf32>
    %125 = tpu.matmul %122, %124, %cst_72 {dimension_numbers = #tpu.dot_dimension_numbers<[1], [0], [0], [1], [0, 0, 1, 1], [], []>} : vector<128x16xf32>, vector<16x4xf32>, vector<128x4xf32> -> vector<128x4xf32>
    %126 = arith.addf %120, %125 : vector<128x4xf32>
    %c2_73 = arith.constant 2 : index
    %c2_74 = arith.constant 2 : index
    %c0_75 = arith.constant 0 : index
    %127 = vector.load %arg11[%c2_73, %c2_74, %c0_75] : memref<10x20x16xf32, #tpu.memory_space<vmem>>, vector<8x16x16xf32>
    %128 = vector.shape_cast %127 : vector<8x16x16xf32> to vector<128x16xf32>
    %c7_76 = arith.constant 7 : index
    %c0_77 = arith.constant 0 : index
    %c0_78 = arith.constant 0 : index
    %129 = vector.load %arg4[%c7_76, %c0_77, %c0_78] : memref<9x16x4xf32, #tpu.memory_space<vmem>>, vector<1x16x4xf32>
    %130 = vector.shape_cast %129 : vector<1x16x4xf32> to vector<16x4xf32>
    %cst_79 = arith.constant dense<0.000000e+00> : vector<128x4xf32>
    %131 = tpu.matmul %128, %130, %cst_79 {dimension_numbers = #tpu.dot_dimension_numbers<[1], [0], [0], [1], [0, 0, 1, 1], [], []>} : vector<128x16xf32>, vector<16x4xf32>, vector<128x4xf32> -> vector<128x4xf32>
    %132 = arith.addf %126, %131 : vector<128x4xf32>
    %c2_80 = arith.constant 2 : index
    %c4_81 = arith.constant 4 : index
    %c0_82 = arith.constant 0 : index
    %133 = vector.load %arg11[%c2_80, %c4_81, %c0_82] : memref<10x20x16xf32, #tpu.memory_space<vmem>>, vector<8x16x16xf32>
    %134 = vector.shape_cast %133 : vector<8x16x16xf32> to vector<128x16xf32>
    %c8_83 = arith.constant 8 : index
    %c0_84 = arith.constant 0 : index
    %c0_85 = arith.constant 0 : index
    %135 = vector.load %arg4[%c8_83, %c0_84, %c0_85] : memref<9x16x4xf32, #tpu.memory_space<vmem>>, vector<1x16x4xf32>
    %136 = vector.shape_cast %135 : vector<1x16x4xf32> to vector<16x4xf32>
    %cst_86 = arith.constant dense<0.000000e+00> : vector<128x4xf32>
    %137 = tpu.matmul %134, %136, %cst_86 {dimension_numbers = #tpu.dot_dimension_numbers<[1], [0], [0], [1], [0, 0, 1, 1], [], []>} : vector<128x16xf32>, vector<16x4xf32>, vector<128x4xf32> -> vector<128x4xf32>
    %138 = arith.addf %132, %137 : vector<128x4xf32>
    %c0_87 = arith.constant 0 : index
    %c0_88 = arith.constant 0 : index
    %139 = vector.load %arg5[%c0_87, %c0_88] : memref<1x4xf32, #tpu.memory_space<vmem>>, vector<1x4xf32>
    %140 = vector.broadcast %139 : vector<1x4xf32> to vector<128x4xf32>
    %141 = arith.addf %138, %140 : vector<128x4xf32>
    %cst_89 = arith.constant 0.000000e+00 : f32
    %142 = vector.broadcast %cst_89 : f32 to vector<128x4xf32>
    %143 = arith.maximumf %141, %142 : vector<128x4xf32>
    %144 = vector.shape_cast %143 : vector<128x4xf32> to vector<4x2x16x4xf32>
    %145 = vector.extract_strided_slice %144 {offsets = [0, 0, 0, 0], sizes = [4, 1, 16, 4], strides = [1, 1, 1, 1]} : vector<4x2x16x4xf32> to vector<4x1x16x4xf32>
    %146 = vector.shape_cast %145 : vector<4x1x16x4xf32> to vector<4x16x4xf32>
    %147 = vector.extract_strided_slice %144 {offsets = [0, 1, 0, 0], sizes = [4, 1, 16, 4], strides = [1, 1, 1, 1]} : vector<4x2x16x4xf32> to vector<4x1x16x4xf32>
    %148 = vector.shape_cast %147 : vector<4x1x16x4xf32> to vector<4x16x4xf32>
    %149 = arith.maximumf %146, %148 : vector<4x16x4xf32>
    %cst_90 = arith.constant 0.000000e+00 : f32
    %150 = vector.broadcast %cst_90 : f32 to vector<4x18x4xf32>
    %c0_91 = arith.constant 0 : index
    %c0_92 = arith.constant 0 : index
    %c0_93 = arith.constant 0 : index
    %151 = vector.load %arg12[%c0_91, %c0_92, %c0_93] : memref<4x18x4xf32, #tpu.memory_space<vmem>>, vector<4x18x4xf32>
    tpu.vector_store %arg12[%c0_91, %c0_92, %c0_93], %150 {strides = array<i32>} : memref<4x18x4xf32, #tpu.memory_space<vmem>>, vector<4x18x4xf32>,
    %c0_94 = arith.constant 0 : index
    %c0_95 = arith.constant 0 : index
    %c0_96 = arith.constant 0 : index
    %152 = vector.load %arg12[%c0_94, %c0_95, %c0_96] : memref<4x18x4xf32, #tpu.memory_space<vmem>>, vector<4x16x4xf32>
    tpu.vector_store %arg12[%c0_94, %c0_95, %c0_96], %149 {strides = array<i32>} : memref<4x18x4xf32, #tpu.memory_space<vmem>>, vector<4x16x4xf32>,
    %c0_97 = arith.constant 0 : index
    %c0_98 = arith.constant 0 : index
    %c0_99 = arith.constant 0 : index
    %153 = vector.load %arg12[%c0_97, %c0_98, %c0_99] : memref<4x18x4xf32, #tpu.memory_space<vmem>>, vector<4x16x4xf32>
    %c0_100 = arith.constant 0 : index
    %c2_101 = arith.constant 2 : index
    %c0_102 = arith.constant 0 : index
    %154 = vector.load %arg12[%c0_100, %c2_101, %c0_102] : memref<4x18x4xf32, #tpu.memory_space<vmem>>, vector<4x16x4xf32>
    %155 = arith.maximumf %153, %154 : vector<4x16x4xf32>
    %156 = vector.shape_cast %155 : vector<4x16x4xf32> to vector<64x4xf32>
    %157 = vector.extract_strided_slice %156 {offsets = [0, 0], sizes = [1, 4], strides = [1, 1]} : vector<64x4xf32> to vector<1x4xf32>
    %c0_103 = arith.constant 0 : index
    %c0_104 = arith.constant 0 : index
    %158 = vector.load %arg13[%c0_103, %c0_104] : memref<16x4xf32, #tpu.memory_space<vmem>>, vector<1x4xf32>
    tpu.vector_store %arg13[%c0_103, %c0_104], %157 {strides = array<i32>} : memref<16x4xf32, #tpu.memory_space<vmem>>, vector<1x4xf32>,
    %159 = vector.extract_strided_slice %156 {offsets = [4, 0], sizes = [1, 4], strides = [1, 1]} : vector<64x4xf32> to vector<1x4xf32>
    %c1_105 = arith.constant 1 : index
    %c0_106 = arith.constant 0 : index
    %160 = vector.load %arg13[%c1_105, %c0_106] : memref<16x4xf32, #tpu.memory_space<vmem>>, vector<1x4xf32>
    tpu.vector_store %arg13[%c1_105, %c0_106], %159 {strides = array<i32>} : memref<16x4xf32, #tpu.memory_space<vmem>>, vector<1x4xf32>,
    %161 = vector.extract_strided_slice %156 {offsets = [8, 0], sizes = [1, 4], strides = [1, 1]} : vector<64x4xf32> to vector<1x4xf32>
    %c2_107 = arith.constant 2 : index
    %c0_108 = arith.constant 0 : index
    %162 = vector.load %arg13[%c2_107, %c0_108] : memref<16x4xf32, #tpu.memory_space<vmem>>, vector<1x4xf32>
    tpu.vector_store %arg13[%c2_107, %c0_108], %161 {strides = array<i32>} : memref<16x4xf32, #tpu.memory_space<vmem>>, vector<1x4xf32>,
    %163 = vector.extract_strided_slice %156 {offsets = [12, 0], sizes = [1, 4], strides = [1, 1]} : vector<64x4xf32> to vector<1x4xf32>
    %c3_109 = arith.constant 3 : index
    %c0_110 = arith.constant 0 : index
    %164 = vector.load %arg13[%c3_109, %c0_110] : memref<16x4xf32, #tpu.memory_space<vmem>>, vector<1x4xf32>
    tpu.vector_store %arg13[%c3_109, %c0_110], %163 {strides = array<i32>} : memref<16x4xf32, #tpu.memory_space<vmem>>, vector<1x4xf32>,
    %165 = vector.extract_strided_slice %156 {offsets = [16, 0], sizes = [1, 4], strides = [1, 1]} : vector<64x4xf32> to vector<1x4xf32>
    %c4_111 = arith.constant 4 : index
    %c0_112 = arith.constant 0 : index
    %166 = vector.load %arg13[%c4_111, %c0_112] : memref<16x4xf32, #tpu.memory_space<vmem>>, vector<1x4xf32>
    tpu.vector_store %arg13[%c4_111, %c0_112], %165 {strides = array<i32>} : memref<16x4xf32, #tpu.memory_space<vmem>>, vector<1x4xf32>,
    %167 = vector.extract_strided_slice %156 {offsets = [20, 0], sizes = [1, 4], strides = [1, 1]} : vector<64x4xf32> to vector<1x4xf32>
    %c5_113 = arith.constant 5 : index
    %c0_114 = arith.constant 0 : index
    %168 = vector.load %arg13[%c5_113, %c0_114] : memref<16x4xf32, #tpu.memory_space<vmem>>, vector<1x4xf32>
    tpu.vector_store %arg13[%c5_113, %c0_114], %167 {strides = array<i32>} : memref<16x4xf32, #tpu.memory_space<vmem>>, vector<1x4xf32>,
    %169 = vector.extract_strided_slice %156 {offsets = [24, 0], sizes = [1, 4], strides = [1, 1]} : vector<64x4xf32> to vector<1x4xf32>
    %c6_115 = arith.constant 6 : index
    %c0_116 = arith.constant 0 : index
    %170 = vector.load %arg13[%c6_115, %c0_116] : memref<16x4xf32, #tpu.memory_space<vmem>>, vector<1x4xf32>
    tpu.vector_store %arg13[%c6_115, %c0_116], %169 {strides = array<i32>} : memref<16x4xf32, #tpu.memory_space<vmem>>, vector<1x4xf32>,
    %171 = vector.extract_strided_slice %156 {offsets = [28, 0], sizes = [1, 4], strides = [1, 1]} : vector<64x4xf32> to vector<1x4xf32>
    %c7_117 = arith.constant 7 : index
    %c0_118 = arith.constant 0 : index
    %172 = vector.load %arg13[%c7_117, %c0_118] : memref<16x4xf32, #tpu.memory_space<vmem>>, vector<1x4xf32>
    tpu.vector_store %arg13[%c7_117, %c0_118], %171 {strides = array<i32>} : memref<16x4xf32, #tpu.memory_space<vmem>>, vector<1x4xf32>,
    %173 = vector.extract_strided_slice %156 {offsets = [32, 0], sizes = [1, 4], strides = [1, 1]} : vector<64x4xf32> to vector<1x4xf32>
    %c8_119 = arith.constant 8 : index
    %c0_120 = arith.constant 0 : index
    %174 = vector.load %arg13[%c8_119, %c0_120] : memref<16x4xf32, #tpu.memory_space<vmem>>, vector<1x4xf32>
    tpu.vector_store %arg13[%c8_119, %c0_120], %173 {strides = array<i32>} : memref<16x4xf32, #tpu.memory_space<vmem>>, vector<1x4xf32>,
    %175 = vector.extract_strided_slice %156 {offsets = [36, 0], sizes = [1, 4], strides = [1, 1]} : vector<64x4xf32> to vector<1x4xf32>
    %c9 = arith.constant 9 : index
    %c0_121 = arith.constant 0 : index
    %176 = vector.load %arg13[%c9, %c0_121] : memref<16x4xf32, #tpu.memory_space<vmem>>, vector<1x4xf32>
    tpu.vector_store %arg13[%c9, %c0_121], %175 {strides = array<i32>} : memref<16x4xf32, #tpu.memory_space<vmem>>, vector<1x4xf32>,
    %177 = vector.extract_strided_slice %156 {offsets = [40, 0], sizes = [1, 4], strides = [1, 1]} : vector<64x4xf32> to vector<1x4xf32>
    %c10 = arith.constant 10 : index
    %c0_122 = arith.constant 0 : index
    %178 = vector.load %arg13[%c10, %c0_122] : memref<16x4xf32, #tpu.memory_space<vmem>>, vector<1x4xf32>
    tpu.vector_store %arg13[%c10, %c0_122], %177 {strides = array<i32>} : memref<16x4xf32, #tpu.memory_space<vmem>>, vector<1x4xf32>,
    %179 = vector.extract_strided_slice %156 {offsets = [44, 0], sizes = [1, 4], strides = [1, 1]} : vector<64x4xf32> to vector<1x4xf32>
    %c11 = arith.constant 11 : index
    %c0_123 = arith.constant 0 : index
    %180 = vector.load %arg13[%c11, %c0_123] : memref<16x4xf32, #tpu.memory_space<vmem>>, vector<1x4xf32>
    tpu.vector_store %arg13[%c11, %c0_123], %179 {strides = array<i32>} : memref<16x4xf32, #tpu.memory_space<vmem>>, vector<1x4xf32>,
    %181 = vector.extract_strided_slice %156 {offsets = [48, 0], sizes = [1, 4], strides = [1, 1]} : vector<64x4xf32> to vector<1x4xf32>
    %c12 = arith.constant 12 : index
    %c0_124 = arith.constant 0 : index
    %182 = vector.load %arg13[%c12, %c0_124] : memref<16x4xf32, #tpu.memory_space<vmem>>, vector<1x4xf32>
    tpu.vector_store %arg13[%c12, %c0_124], %181 {strides = array<i32>} : memref<16x4xf32, #tpu.memory_space<vmem>>, vector<1x4xf32>,
    %183 = vector.extract_strided_slice %156 {offsets = [52, 0], sizes = [1, 4], strides = [1, 1]} : vector<64x4xf32> to vector<1x4xf32>
    %c13 = arith.constant 13 : index
    %c0_125 = arith.constant 0 : index
    %184 = vector.load %arg13[%c13, %c0_125] : memref<16x4xf32, #tpu.memory_space<vmem>>, vector<1x4xf32>
    tpu.vector_store %arg13[%c13, %c0_125], %183 {strides = array<i32>} : memref<16x4xf32, #tpu.memory_space<vmem>>, vector<1x4xf32>,
    %185 = vector.extract_strided_slice %156 {offsets = [56, 0], sizes = [1, 4], strides = [1, 1]} : vector<64x4xf32> to vector<1x4xf32>
    %c14 = arith.constant 14 : index
    %c0_126 = arith.constant 0 : index
    %186 = vector.load %arg13[%c14, %c0_126] : memref<16x4xf32, #tpu.memory_space<vmem>>, vector<1x4xf32>
    tpu.vector_store %arg13[%c14, %c0_126], %185 {strides = array<i32>} : memref<16x4xf32, #tpu.memory_space<vmem>>, vector<1x4xf32>,
    %187 = vector.extract_strided_slice %156 {offsets = [60, 0], sizes = [1, 4], strides = [1, 1]} : vector<64x4xf32> to vector<1x4xf32>
    %c15 = arith.constant 15 : index
    %c0_127 = arith.constant 0 : index
    %188 = vector.load %arg13[%c15, %c0_127] : memref<16x4xf32, #tpu.memory_space<vmem>>, vector<1x4xf32>
    tpu.vector_store %arg13[%c15, %c0_127], %187 {strides = array<i32>} : memref<16x4xf32, #tpu.memory_space<vmem>>, vector<1x4xf32>,
    %cst_128 = arith.constant 0.000000e+00 : f32
    %189 = vector.broadcast %cst_128 : f32 to vector<16x64xf32>
    %c0_129 = arith.constant 0 : index
    %c0_130 = arith.constant 0 : index
    %190 = vector.load %arg13[%c0_129, %c0_130] : memref<16x4xf32, #tpu.memory_space<vmem>>, vector<16x1xf32>
    %c0_131 = arith.constant 0 : index
    %c0_132 = arith.constant 0 : index
    %191 = vector.load %arg6[%c0_131, %c0_132] : memref<4x64xf32, #tpu.memory_space<vmem>>, vector<1x64xf32>
    %192 = vector.broadcast %190 : vector<16x1xf32> to vector<16x64xf32>
    %193 = vector.broadcast %191 : vector<1x64xf32> to vector<16x64xf32>
    %194 = arith.mulf %192, %193 : vector<16x64xf32>
    %195 = arith.addf %189, %194 : vector<16x64xf32>
    %c0_133 = arith.constant 0 : index
    %c1_134 = arith.constant 1 : index
    %196 = vector.load %arg13[%c0_133, %c1_134] : memref<16x4xf32, #tpu.memory_space<vmem>>, vector<16x1xf32>
    %c1_135 = arith.constant 1 : index
    %c0_136 = arith.constant 0 : index
    %197 = vector.load %arg6[%c1_135, %c0_136] : memref<4x64xf32, #tpu.memory_space<vmem>>, vector<1x64xf32>
    %198 = vector.broadcast %196 : vector<16x1xf32> to vector<16x64xf32>
    %199 = vector.broadcast %197 : vector<1x64xf32> to vector<16x64xf32>
    %200 = arith.mulf %198, %199 : vector<16x64xf32>
    %201 = arith.addf %195, %200 : vector<16x64xf32>
    %c0_137 = arith.constant 0 : index
    %c2_138 = arith.constant 2 : index
    %202 = vector.load %arg13[%c0_137, %c2_138] : memref<16x4xf32, #tpu.memory_space<vmem>>, vector<16x1xf32>
    %c2_139 = arith.constant 2 : index
    %c0_140 = arith.constant 0 : index
    %203 = vector.load %arg6[%c2_139, %c0_140] : memref<4x64xf32, #tpu.memory_space<vmem>>, vector<1x64xf32>
    %204 = vector.broadcast %202 : vector<16x1xf32> to vector<16x64xf32>
    %205 = vector.broadcast %203 : vector<1x64xf32> to vector<16x64xf32>
    %206 = arith.mulf %204, %205 : vector<16x64xf32>
    %207 = arith.addf %201, %206 : vector<16x64xf32>
    %c0_141 = arith.constant 0 : index
    %c3_142 = arith.constant 3 : index
    %208 = vector.load %arg13[%c0_141, %c3_142] : memref<16x4xf32, #tpu.memory_space<vmem>>, vector<16x1xf32>
    %c3_143 = arith.constant 3 : index
    %c0_144 = arith.constant 0 : index
    %209 = vector.load %arg6[%c3_143, %c0_144] : memref<4x64xf32, #tpu.memory_space<vmem>>, vector<1x64xf32>
    %210 = vector.broadcast %208 : vector<16x1xf32> to vector<16x64xf32>
    %211 = vector.broadcast %209 : vector<1x64xf32> to vector<16x64xf32>
    %212 = arith.mulf %210, %211 : vector<16x64xf32>
    %213 = arith.addf %207, %212 : vector<16x64xf32>
    %c0_145 = arith.constant 0 : index
    %c0_146 = arith.constant 0 : index
    %214 = vector.load %arg7[%c0_145, %c0_146] : memref<1x64xf32, #tpu.memory_space<vmem>>, vector<1x64xf32>
    %215 = vector.broadcast %214 : vector<1x64xf32> to vector<16x64xf32>
    %216 = arith.addf %213, %215 : vector<16x64xf32>
    %cst_147 = arith.constant 0.000000e+00 : f32
    %217 = vector.broadcast %cst_147 : f32 to vector<16x64xf32>
    %218 = arith.maximumf %216, %217 : vector<16x64xf32>
    %c0_148 = arith.constant 0 : index
    %c0_149 = arith.constant 0 : index
    %219 = vector.load %arg8[%c0_148, %c0_149] : memref<64x16xf32, #tpu.memory_space<vmem>>, vector<64x16xf32>
    %cst_150 = arith.constant dense<0.000000e+00> : vector<16x16xf32>
    %220 = tpu.matmul %218, %219, %cst_150 {dimension_numbers = #tpu.dot_dimension_numbers<[1], [0], [0], [1], [0, 0, 1, 1], [], []>} : vector<16x64xf32>, vector<64x16xf32>, vector<16x16xf32> -> vector<16x16xf32>
    %c0_151 = arith.constant 0 : index
    %c0_152 = arith.constant 0 : index
    %221 = vector.load %arg9[%c0_151, %c0_152] : memref<1x16xf32, #tpu.memory_space<vmem>>, vector<1x16xf32>
    %222 = vector.broadcast %221 : vector<1x16xf32> to vector<16x16xf32>
    %223 = arith.addf %220, %222 : vector<16x16xf32>
    %cst_153 = arith.constant 0.000000e+00 : f32
    %224 = vector.broadcast %cst_153 : f32 to vector<16x16xf32>
    %225 = arith.subf %224, %223 : vector<16x16xf32>
    %226 = math.exp %225 : vector<16x16xf32>
    %cst_154 = arith.constant 1.000000e+00 : f32
    %227 = vector.broadcast %cst_154 : f32 to vector<16x16xf32>
    %228 = arith.addf %227, %226 : vector<16x16xf32>
    %229 = tpu.reciprocal %228 {approx = true} : vector<16x16xf32> -> vector<16x16xf32>
    %c0_155 = arith.constant 0 : index
    %c0_156 = arith.constant 0 : index
    %c0_157 = arith.constant 0 : index
    %230 = vector.load %arg10[%c0_155, %c0_156, %c0_157] : memref<1x16x16xf32, #tpu.memory_space<vmem>>, vector<1x16x16xf32>
    %231 = vector.shape_cast %230 : vector<1x16x16xf32> to vector<16x16xf32>
    %232 = vector.shape_cast %229 : vector<16x16xf32> to vector<1x16x16xf32>
    tpu.vector_store %arg10[%c0_155, %c0_156, %c0_157], %232 {strides = array<i32>} : memref<1x16x16xf32, #tpu.memory_space<vmem>>, vector<1x16x16xf32>,
    return
  }
  func.func @transform_0(%arg0: i32) -> (i32, i32, i32, i32) {
    %c0_i32 = arith.constant 0 : i32
    %c0_i32_0 = arith.constant 0 : i32
    %c0_i32_1 = arith.constant 0 : i32
    %c0_i32_2 = arith.constant 0 : i32
    return %arg0, %c0_i32, %c0_i32_0, %c0_i32_1 : i32, i32, i32, i32
  }
  func.func @transform_1(%arg0: i32) -> (i32, i32) {
    %c0_i32 = arith.constant 0 : i32
    %c0_i32_0 = arith.constant 0 : i32
    %c0_i32_1 = arith.constant 0 : i32
    return %c0_i32, %c0_i32_0 : i32, i32
  }
  func.func @transform_2(%arg0: i32) -> (i32, i32) {
    %c0_i32 = arith.constant 0 : i32
    %c0_i32_0 = arith.constant 0 : i32
    %c0_i32_1 = arith.constant 0 : i32
    return %c0_i32, %c0_i32_0 : i32, i32
  }
  func.func @transform_3(%arg0: i32) -> (i32, i32, i32) {
    %c0_i32 = arith.constant 0 : i32
    %c0_i32_0 = arith.constant 0 : i32
    %c0_i32_1 = arith.constant 0 : i32
    %c0_i32_2 = arith.constant 0 : i32
    return %c0_i32, %c0_i32_0, %c0_i32_1 : i32, i32, i32
  }
  func.func @transform_4(%arg0: i32) -> (i32, i32) {
    %c0_i32 = arith.constant 0 : i32
    %c0_i32_0 = arith.constant 0 : i32
    %c0_i32_1 = arith.constant 0 : i32
    return %c0_i32, %c0_i32_0 : i32, i32
  }
  func.func @transform_5(%arg0: i32) -> (i32, i32) {
    %c0_i32 = arith.constant 0 : i32
    %c0_i32_0 = arith.constant 0 : i32
    %c0_i32_1 = arith.constant 0 : i32
    return %c0_i32, %c0_i32_0 : i32, i32
  }
  func.func @transform_6(%arg0: i32) -> (i32, i32) {
    %c0_i32 = arith.constant 0 : i32
    %c0_i32_0 = arith.constant 0 : i32
    %c0_i32_1 = arith.constant 0 : i32
    return %c0_i32, %c0_i32_0 : i32, i32
  }
  func.func @transform_7(%arg0: i32) -> (i32, i32) {
    %c0_i32 = arith.constant 0 : i32
    %c0_i32_0 = arith.constant 0 : i32
    %c0_i32_1 = arith.constant 0 : i32
    return %c0_i32, %c0_i32_0 : i32, i32
  }
  func.func @transform_8(%arg0: i32) -> (i32, i32) {
    %c0_i32 = arith.constant 0 : i32
    %c0_i32_0 = arith.constant 0 : i32
    %c0_i32_1 = arith.constant 0 : i32
    return %c0_i32, %c0_i32_0 : i32, i32
  }
  func.func @transform_9(%arg0: i32) -> (i32, i32, i32) {
    %c0_i32 = arith.constant 0 : i32
    %c0_i32_0 = arith.constant 0 : i32
    %c0_i32_1 = arith.constant 0 : i32
    return %arg0, %c0_i32, %c0_i32_0 : i32, i32, i32
  }
}

</mosaic_0001>

<llo_original>
// kernel: tile.13
$region0: #{tile.13}
  #allocation0 [shape = 's32[1]{0}', space=sflag, size = 0x4, scoped, tag = 'scoped memory for tile.13']
  %s0 = inlined_call_operand.vmem [shape: f32[16], index: 0, kind: input, shape index: {}]
  %s1 = inlined_call_operand.vmem [shape: f32[4,16], index: 1, kind: output, shape index: {}]
  // Predicated region
  $region2: #{tile.13} parent=0 // pred_check
    _
  $region3: #{tile.13} parent=0 // pred_check_branch
    %3 = sbr.rel (0) target = $region5
  $region4: #{tile.13} parent=0 // pred_region
    _
  $region5: #{tile.13} parent=0 // pred_fallthru
    _
  %v4 = vld [vmem:[%s0] ss:$0 sm:$0xff]
  %5 = vst [vmem:[%s1] sm:$0xf] %v4

// kernel: tile.14
$region0: #{tile.14}
  %s0 = inlined_call_operand.vmem [shape: f32[4,16], index: 0, kind: input, shape index: {}]
  %s1 = inlined_call_operand.vmem [shape: f32[1,64], index: 1, kind: output, shape index: {}]
  $region1: #{tile.14} parent=0
    #allocation0 [shape = 'u8[4096]{0}', space=vmem, size = 0x1000, scoped, tag = 'scoped mem for output reshape']
    #allocation1 [shape = 'u8[4096]{0}', space=vmem, size = 0x1000, scoped, tag = 'scoped mem for input reshape']
    %s3 = sshllo.u32 0, 4
    %v4 = vld [vmem:[%s0] sm:%s3]
    %5 = vst [vmem:[#allocation1] sm:%s3] %v4
    %v6 = vld [vmem:[#allocation1] sm:$0x1]
    %vm7 = vcmask 130048
    %8 = vst.msk [vmem:[#allocation0] sm:$0x1] %vm7, %v6
    %s9 = scalar_lea.vmem [#allocation1], 3
    %v10 = vld [vmem:[%s9] sm:$0x1]
    %11 = vrot.lane.b32.xlu0 %v10, 48
    %v12 = vpop.permute.xlu0 %11
    %vm13 = vcmask 523648
    %14 = vst.msk [vmem:[#allocation0] sm:$0x1] %vm13, %v12
    %s15 = scalar_lea.vmem [#allocation1], 2
    %v16 = vld [vmem:[%s15] sm:$0x1]
    %17 = vrot.lane.b32.xlu0 %v16, 32
    %v18 = vpop.permute.xlu0 %17
    %vm19 = vcmask 392448
    %20 = vst.msk [vmem:[#allocation0] sm:$0x1] %vm19, %v18
    %s21 = scalar_lea.vmem [#allocation1], 1
    %v22 = vld [vmem:[%s21] sm:$0x1]
    %23 = vrot.lane.b32.xlu0 %v22, 16
    %v24 = vpop.permute.xlu0 %23
    %vm25 = vcmask 261248
    %26 = vst.msk [vmem:[#allocation0] sm:$0x1] %vm25, %v24
    %s28 = sshllo.u32 0, 1
    %v30 = vld [vmem:[#allocation0] sm:%s28]
    %s31 = sshllo.u32 0, 1
    %32 = vst [vmem:[%s1] sm:%s31] %v30

// kernel: conv_autoencoder_forward.1
$region0: #{conv_autoencoder_forward.1}
  #allocation0 [shape = 'u32[]', space=smem, size = 0x4, offset = 0x4, fixed_abs, tag = 'smem constant byte address 0x4 - core index']
  #allocation1 [shape = 'u32[144,128]{1,0:T(1,128)}', space=vmem, size = 0x12000, scoped, tag = 'internal scratch']
  #allocation2 [shape = 'f32[10,20,16]{2,1,0:T(8,128)}', space=vmem, size = 0x1e000, scoped, tag = 'scratch operand']
  #allocation3 [shape = 'f32[4,18,4]{2,1,0:T(8,128)}', space=vmem, size = 0xc000, scoped, tag = 'scratch operand']
  #allocation4 [shape = 'f32[16,4]{1,0:T(8,128)}', space=vmem, size = 0x2000, scoped, tag = 'scratch operand']
  %s0 = inlined_call_operand.vmem [shape: f32[2,18,18,1], index: 0, kind: input, shape index: {}]
  %s1 = inlined_call_operand.vmem [shape: f32[9,16], index: 1, kind: input, shape index: {}]
  %s2 = inlined_call_operand.vmem [shape: f32[1,16], index: 2, kind: input, shape index: {}]
  %s3 = inlined_call_operand.vmem [shape: f32[9,16,4], index: 3, kind: input, shape index: {}]
  %s4 = inlined_call_operand.vmem [shape: f32[1,4], index: 4, kind: input, shape index: {}]
  %s5 = inlined_call_operand.vmem [shape: f32[4,64], index: 5, kind: input, shape index: {}]
  %s6 = inlined_call_operand.vmem [shape: f32[1,64], index: 6, kind: input, shape index: {}]
  %s7 = inlined_call_operand.vmem [shape: f32[64,16], index: 7, kind: input, shape index: {}]
  %s8 = inlined_call_operand.vmem [shape: f32[1,16], index: 8, kind: input, shape index: {}]
  %s9 = inlined_call_operand.vmem [shape: f32[2,16,16], index: 9, kind: output, shape index: {}]
  %s10 = sld [smem:[#allocation0]]
  $region69: #{conv_autoencoder_forward.1} parent=0
    _
  %s12 = ssub.s32 1, %s10
  %s13 = scalar_select 0, %s12, %s10
  loop: start=0, step=1, limit=4
  $region2: #{conv_autoencoder_forward.1} parent=0 // loop_pre_header
    _
  $region3: #{conv_autoencoder_forward.1} parent=0 // loop_header
    %s15 = sphi 0, %s19
    %p16 = scmp.ge.s32.totalorder %s15, 4
    %s25 = sphi 0, %s27
    %s28 = sphi 0, %s25
    %s29 = sphi 0, %s28
    %s45 = sphi 0, %s29
    %s49 = sphi 0, %s49
    %s51 = sphi 0, %s49
    %s52 = sphi 0, %s51
    %s66 = sphi 0, %s52
    %s70 = sphi 0, %s70
    %s72 = sphi 0, %s70
    %s73 = sphi 0, %s72
    %s87 = sphi 0, %s73
    %s91 = sphi 0, %s91
    %s93 = sphi 0, %s91
    %s94 = sphi 0, %s93
    %s108 = sphi 0, %s94
    %s112 = sphi 0, %s112
    %s114 = sphi 0, %s112
    %s115 = sphi 0, %s114
    %s129 = sphi 0, %s115
    %s133 = sphi 0, %s133
    %s135 = sphi 0, %s133
    %s136 = sphi 0, %s135
    %s150 = sphi 0, %s136
    %s154 = sphi 0, %s154
    %s156 = sphi 0, %s154
    %s157 = sphi 0, %s156
    %s171 = sphi 0, %s157
    %s175 = sphi 0, %s175
    %s177 = sphi 0, %s175
    %s178 = sphi 0, %s177
    %s192 = sphi 0, %s178
    %s196 = sphi 0, %s196
    %s198 = sphi 0, %s196
    %s199 = sphi 0, %s198
    %s213 = sphi 0, %s199
    %s219 = sphi 0, %s221
    %s222 = sphi 0, %s219
    %s223 = sphi 0, %s222
    %s239 = sphi 0, %s223
  $region4: #{conv_autoencoder_forward.1} parent=0 // loop_header_branch
    %18 = sbr.rel (%p16) target = $region8
  $region5: #{conv_autoencoder_forward.1} parent=0 // loop_body
    %s20 = ssub.s32 %s15, 1
    %s21 = ssub.s32 %s15, 2
    %s22 = sadd.s32 %s15, 1
    %s23 = ssub.s32 %s15, %s22
    %p24 = scmp.eq.s32.totalorder %s23, 0
    %s26 = sadd.s32 %s25, 1
    %s27 = scalar_select %p24, %s25, %s26
    %p30 = pneg %p24
    %p31 = scmp.eq.s32.totalorder %s15, 1
    %p32 = por %p30, %p31
    %p33 = scmp.ne.s32.totalorder %s25, %s28
    %p34 = scmp.eq.s32.totalorder %s15, 0
    %p35 = por %p33, %p34
    %p36 = scmp.ne.s32.totalorder %s25, %s28
    %p37 = scmp.eq.s32.totalorder %s20, 1
    %p38 = por %p36, %p37
    %p39 = scmp.ne.s32.totalorder %s28, %s29
    %p40 = scmp.eq.s32.totalorder %s20, 0
    %p41 = por %p39, %p40
    %p42 = scmp.ne.s32.totalorder %s28, %s29
    %p43 = scmp.eq.s32.totalorder %s21, 1
    %p44 = por %p42, %p43
    %p46 = scmp.ne.s32.totalorder %s29, %s45
    %p47 = scmp.eq.s32.totalorder %s21, 0
    %p48 = por %p46, %p47
    %s50 = sadd.s32 %s49, 1
    %p53 = scmp.eq.s32.totalorder %s15, 1
    %p54 = scmp.ne.s32.totalorder %s49, %s51
    %p55 = scmp.eq.s32.totalorder %s15, 0
    %p56 = por %p54, %p55
    %p57 = scmp.ne.s32.totalorder %s49, %s51
    %p58 = scmp.eq.s32.totalorder %s20, 1
    %p59 = por %p57, %p58
    %p60 = scmp.ne.s32.totalorder %s51, %s52
    %p61 = scmp.eq.s32.totalorder %s20, 0
    %p62 = por %p60, %p61
    %p63 = scmp.ne.s32.totalorder %s51, %s52
    %p64 = scmp.eq.s32.totalorder %s21, 1
    %p65 = por %p63, %p64
    %p67 = scmp.ne.s32.totalorder %s52, %s66
    %p68 = scmp.eq.s32.totalorder %s21, 0
    %p69 = por %p67, %p68
    %s71 = sadd.s32 %s70, 1
    %p74 = scmp.eq.s32.totalorder %s15, 1
    %p75 = scmp.ne.s32.totalorder %s70, %s72
    %p76 = scmp.eq.s32.totalorder %s15, 0
    %p77 = por %p75, %p76
    %p78 = scmp.ne.s32.totalorder %s70, %s72
    %p79 = scmp.eq.s32.totalorder %s20, 1
    %p80 = por %p78, %p79
    %p81 = scmp.ne.s32.totalorder %s72, %s73
    %p82 = scmp.eq.s32.totalorder %s20, 0
    %p83 = por %p81, %p82
    %p84 = scmp.ne.s32.totalorder %s72, %s73
    %p85 = scmp.eq.s32.totalorder %s21, 1
    %p86 = por %p84, %p85
    %p88 = scmp.ne.s32.totalorder %s73, %s87
    %p89 = scmp.eq.s32.totalorder %s21, 0
    %p90 = por %p88, %p89
    %s92 = sadd.s32 %s91, 1
    %p95 = scmp.eq.s32.totalorder %s15, 1
    %p96 = scmp.ne.s32.totalorder %s91, %s93
    %p97 = scmp.eq.s32.totalorder %s15, 0
    %p98 = por %p96, %p97
    %p99 = scmp.ne.s32.totalorder %s91, %s93
    %p100 = scmp.eq.s32.totalorder %s20, 1
    %p101 = por %p99, %p100
    %p102 = scmp.ne.s32.totalorder %s93, %s94
    %p103 = scmp.eq.s32.totalorder %s20, 0
    %p104 = por %p102, %p103
    %p105 = scmp.ne.s32.totalorder %s93, %s94
    %p106 = scmp.eq.s32.totalorder %s21, 1
    %p107 = por %p105, %p106
    %p109 = scmp.ne.s32.totalorder %s94, %s108
    %p110 = scmp.eq.s32.totalorder %s21, 0
    %p111 = por %p109, %p110
    %s113 = sadd.s32 %s112, 1
    %p116 = scmp.eq.s32.totalorder %s15, 1
    %p117 = scmp.ne.s32.totalorder %s112, %s114
    %p118 = scmp.eq.s32.totalorder %s15, 0
    %p119 = por %p117, %p118
    %p120 = scmp.ne.s32.totalorder %s112, %s114
    %p121 = scmp.eq.s32.totalorder %s20, 1
    %p122 = por %p120, %p121
    %p123 = scmp.ne.s32.totalorder %s114, %s115
    %p124 = scmp.eq.s32.totalorder %s20, 0
    %p125 = por %p123, %p124
    %p126 = scmp.ne.s32.totalorder %s114, %s115
    %p127 = scmp.eq.s32.totalorder %s21, 1
    %p128 = por %p126, %p127
    %p130 = scmp.ne.s32.totalorder %s115, %s129
    %p131 = scmp.eq.s32.totalorder %s21, 0
    %p132 = por %p130, %p131
    %s134 = sadd.s32 %s133, 1
    %p137 = scmp.eq.s32.totalorder %s15, 1
    %p138 = scmp.ne.s32.totalorder %s133, %s135
    %p139 = scmp.eq.s32.totalorder %s15, 0
    %p140 = por %p138, %p139
    %p141 = scmp.ne.s32.totalorder %s133, %s135
    %p142 = scmp.eq.s32.totalorder %s20, 1
    %p143 = por %p141, %p142
    %p144 = scmp.ne.s32.totalorder %s135, %s136
    %p145 = scmp.eq.s32.totalorder %s20, 0
    %p146 = por %p144, %p145
    %p147 = scmp.ne.s32.totalorder %s135, %s136
    %p148 = scmp.eq.s32.totalorder %s21, 1
    %p149 = por %p147, %p148
    %p151 = scmp.ne.s32.totalorder %s136, %s150
    %p152 = scmp.eq.s32.totalorder %s21, 0
    %p153 = por %p151, %p152
    %s155 = sadd.s32 %s154, 1
    %p158 = scmp.eq.s32.totalorder %s15, 1
    %p159 = scmp.ne.s32.totalorder %s154, %s156
    %p160 = scmp.eq.s32.totalorder %s15, 0
    %p161 = por %p159, %p160
    %p162 = scmp.ne.s32.totalorder %s154, %s156
    %p163 = scmp.eq.s32.totalorder %s20, 1
    %p164 = por %p162, %p163
    %p165 = scmp.ne.s32.totalorder %s156, %s157
    %p166 = scmp.eq.s32.totalorder %s20, 0
    %p167 = por %p165, %p166
    %p168 = scmp.ne.s32.totalorder %s156, %s157
    %p169 = scmp.eq.s32.totalorder %s21, 1
    %p170 = por %p168, %p169
    %p172 = scmp.ne.s32.totalorder %s157, %s171
    %p173 = scmp.eq.s32.totalorder %s21, 0
    %p174 = por %p172, %p173
    %s176 = sadd.s32 %s175, 1
    %p179 = scmp.eq.s32.totalorder %s15, 1
    %p180 = scmp.ne.s32.totalorder %s175, %s177
    %p181 = scmp.eq.s32.totalorder %s15, 0
    %p182 = por %p180, %p181
    %p183 = scmp.ne.s32.totalorder %s175, %s177
    %p184 = scmp.eq.s32.totalorder %s20, 1
    %p185 = por %p183, %p184
    %p186 = scmp.ne.s32.totalorder %s177, %s178
    %p187 = scmp.eq.s32.totalorder %s20, 0
    %p188 = por %p186, %p187
    %p189 = scmp.ne.s32.totalorder %s177, %s178
    %p190 = scmp.eq.s32.totalorder %s21, 1
    %p191 = por %p189, %p190
    %p193 = scmp.ne.s32.totalorder %s178, %s192
    %p194 = scmp.eq.s32.totalorder %s21, 0
    %p195 = por %p193, %p194
    %s197 = sadd.s32 %s196, 1
    %p200 = scmp.eq.s32.totalorder %s15, 1
    %p201 = scmp.ne.s32.totalorder %s196, %s198
    %p202 = scmp.eq.s32.totalorder %s15, 0
    %p203 = por %p201, %p202
    %p204 = scmp.ne.s32.totalorder %s196, %s198
    %p205 = scmp.eq.s32.totalorder %s20, 1
    %p206 = por %p204, %p205
    %p207 = scmp.ne.s32.totalorder %s198, %s199
    %p208 = scmp.eq.s32.totalorder %s20, 0
    %p209 = por %p207, %p208
    %p210 = scmp.ne.s32.totalorder %s198, %s199
    %p211 = scmp.eq.s32.totalorder %s21, 1
    %p212 = por %p210, %p211
    %p214 = scmp.ne.s32.totalorder %s199, %s213
    %p215 = scmp.eq.s32.totalorder %s21, 0
    %p216 = por %p214, %p215
    %s217 = ssub.s32 %s15, %s22
    %p218 = scmp.eq.s32.totalorder %s217, 0
    %s220 = sadd.s32 %s219, 1
    %s221 = scalar_select %p218, %s219, %s220
    %p224 = pneg %p218
    %p225 = scmp.eq.s32.totalorder %s15, 1
    %p226 = por %p224, %p225
    %p227 = scmp.ne.s32.totalorder %s219, %s222
    %p228 = scmp.eq.s32.totalorder %s15, 0
    %p229 = por %p227, %p228
    %p230 = scmp.ne.s32.totalorder %s219, %s222
    %p231 = scmp.eq.s32.totalorder %s20, 1
    %p232 = por %p230, %p231
    %p233 = scmp.ne.s32.totalorder %s222, %s223
    %p234 = scmp.eq.s32.totalorder %s20, 0
    %p235 = por %p233, %p234
    %p236 = scmp.ne.s32.totalorder %s222, %s223
    %p237 = scmp.eq.s32.totalorder %s21, 1
    %p238 = por %p236, %p237
    %p240 = scmp.ne.s32.totalorder %s223, %s239
    %p241 = scmp.eq.s32.totalorder %s21, 0
    %p242 = por %p240, %p241
    %p243 = scmp.le.s32.totalorder 1, %s15
    %p244 = scmp.lt.s32.totalorder %s15, 3
    %p245 = pnand %p243, %p244
    %p246 = pneg %p245
    // Predicated region
    $region9: #{conv_autoencoder_forward.1} parent=5 // pred_check
      _
    $region10: #{conv_autoencoder_forward.1} parent=5 // pred_check_branch
      %248 = sbr.rel (%p245) target = $region12
    $region11: #{conv_autoencoder_forward.1} parent=5 // pred_region
      %s249 = ssub.s32 %s15, 1
      // Predicated region
      $region13: #{conv_autoencoder_forward.1} parent=11 // pred_check
        %p250 = pneg %p62
      $region14: #{conv_autoencoder_forward.1} parent=11 // pred_check_branch
        %252 = sbr.rel (%p250) target = $region16
      $region15: #{conv_autoencoder_forward.1} parent=11 // pred_region
        _
      $region16: #{conv_autoencoder_forward.1} parent=11 // pred_fallthru
        _
      // Predicated region
      $region17: #{conv_autoencoder_forward.1} parent=11 // pred_check
        %p253 = pneg %p83
      $region18: #{conv_autoencoder_forward.1} parent=11 // pred_check_branch
        %255 = sbr.rel (%p253) target = $region20
      $region19: #{conv_autoencoder_forward.1} parent=11 // pred_region
        _
      $region20: #{conv_autoencoder_forward.1} parent=11 // pred_fallthru
        _
      // Predicated region
      $region21: #{conv_autoencoder_forward.1} parent=11 // pred_check
        %p256 = pneg %p104
      $region22: #{conv_autoencoder_forward.1} parent=11 // pred_check_branch
        %258 = sbr.rel (%p256) target = $region24
      $region23: #{conv_autoencoder_forward.1} parent=11 // pred_region
        _
      $region24: #{conv_autoencoder_forward.1} parent=11 // pred_fallthru
        _
      // Predicated region
      $region25: #{conv_autoencoder_forward.1} parent=11 // pred_check
        %p259 = pneg %p125
      $region26: #{conv_autoencoder_forward.1} parent=11 // pred_check_branch
        %261 = sbr.rel (%p259) target = $region28
      $region27: #{conv_autoencoder_forward.1} parent=11 // pred_region
        _
      $region28: #{conv_autoencoder_forward.1} parent=11 // pred_fallthru
        _
      // Predicated region
      $region29: #{conv_autoencoder_forward.1} parent=11 // pred_check
        %p262 = pneg %p146
      $region30: #{conv_autoencoder_forward.1} parent=11 // pred_check_branch
        %264 = sbr.rel (%p262) target = $region32
      $region31: #{conv_autoencoder_forward.1} parent=11 // pred_region
        _
      $region32: #{conv_autoencoder_forward.1} parent=11 // pred_fallthru
        _
      // Predicated region
      $region33: #{conv_autoencoder_forward.1} parent=11 // pred_check
        %p265 = pneg %p167
      $region34: #{conv_autoencoder_forward.1} parent=11 // pred_check_branch
        %267 = sbr.rel (%p265) target = $region36
      $region35: #{conv_autoencoder_forward.1} parent=11 // pred_region
        _
      $region36: #{conv_autoencoder_forward.1} parent=11 // pred_fallthru
        _
      // Predicated region
      $region37: #{conv_autoencoder_forward.1} parent=11 // pred_check
        %p268 = pneg %p188
      $region38: #{conv_autoencoder_forward.1} parent=11 // pred_check_branch
        %270 = sbr.rel (%p268) target = $region40
      $region39: #{conv_autoencoder_forward.1} parent=11 // pred_region
        _
      $region40: #{conv_autoencoder_forward.1} parent=11 // pred_fallthru
        _
      // Predicated region
      $region41: #{conv_autoencoder_forward.1} parent=11 // pred_check
        %p271 = pneg %p209
      $region42: #{conv_autoencoder_forward.1} parent=11 // pred_check_branch
        %273 = sbr.rel (%p271) target = $region44
      $region43: #{conv_autoencoder_forward.1} parent=11 // pred_region
        _
      $region44: #{conv_autoencoder_forward.1} parent=11 // pred_fallthru
        _
    $region12: #{conv_autoencoder_forward.1} parent=5 // pred_fallthru
      _
    %p274 = scmp.lt.s32.totalorder %s15, 2
    // Predicated region
    $region45: #{conv_autoencoder_forward.1} parent=5 // pred_check
      %p275 = pneg %p274
    $region46: #{conv_autoencoder_forward.1} parent=5 // pred_check_branch
      %277 = sbr.rel (%p275) target = $region48
    $region47: #{conv_autoencoder_forward.1} parent=5 // pred_region
      // Predicated region
      $region49: #{conv_autoencoder_forward.1} parent=47 // pred_check
        %p278 = pneg %p35
      $region50: #{conv_autoencoder_forward.1} parent=47 // pred_check_branch
        %280 = sbr.rel (%p278) target = $region52
      $region51: #{conv_autoencoder_forward.1} parent=47 // pred_region
        %p281 = scmp.lt.s32.totalorder %s15, 1
        %s282 = scalar_select %p281, %s15, 1
        %s283 = smul.addr %s282, 54
        %s284 = smul.addr %s283, 8
        %s285 = scalar_lea.vmem %s0, %s284
      $region52: #{conv_autoencoder_forward.1} parent=47 // pred_fallthru
        _
    $region48: #{conv_autoencoder_forward.1} parent=5 // pred_fallthru
      _
    %p286 = scmp.le.s32.totalorder 1, %s15
    %p287 = scmp.lt.s32.totalorder %s15, 3
    %p288 = pnand %p286, %p287
    %p289 = pneg %p288
    // Predicated region
    $region53: #{conv_autoencoder_forward.1} parent=5 // pred_check
      _
    $region54: #{conv_autoencoder_forward.1} parent=5 // pred_check_branch
      %291 = sbr.rel (%p288) target = $region56
    $region55: #{conv_autoencoder_forward.1} parent=5 // pred_region
      %s292 = ssub.s32 %s15, 1
      %p293 = scmp.lt.s32.totalorder %s20, 1
      %s294 = scalar_select %p293, %s20, 1
      %s295 = smul.addr %s294, 54
      %s296 = smul.addr %s295, 8
      %s297 = scalar_lea.vmem %s0, %s296
      %p298 = pneg %p41
      %p299 = pneg %p38
      %p300 = pneg %p62
      %p301 = pneg %p59
      %p302 = pneg %p83
      %p303 = pneg %p80
      %p304 = pneg %p104
      %p305 = pneg %p101
      %p306 = pneg %p125
      %p307 = pneg %p122
      %p308 = pneg %p146
      %p309 = pneg %p143
      %p310 = pneg %p167
      %p311 = pneg %p164
      %p312 = pneg %p188
      %p313 = pneg %p185
      %p314 = pneg %p209
      %p315 = pneg %p206
      %p316 = pneg %p235
      %p317 = pneg %p232
      %p318 = scmp.lt.s32.totalorder %s20, 1
      %s319 = scalar_select %p318, %s20, 1
      %s320 = smul.addr %s319, 2
      %s321 = smul.addr %s320, 8
      %s322 = scalar_lea.vmem %s9, %s321
      %p323 = scmp.lt.s32.totalorder %s20, 1
      %s324 = scalar_select %p323, %s20, 1
      %s325 = smul.addr %s324, 54
      %s326 = smul.addr %s325, 8
      %s327 = scalar_lea.vmem %s0, %s326
      %p328 = scmp.lt.s32.totalorder %s20, 1
      %s329 = scalar_select %p328, %s20, 1
      %s330 = smul.addr %s329, 2
      %s331 = smul.addr %s330, 8
      %s332 = scalar_lea.vmem %s9, %s331
      %v333 = vld [vmem:[%s327] sm:$0xff]
      %v334 = vld [vmem:[%s327 + $0x8] sm:$0xff]
      %v335 = vld [vmem:[%s327 + $0x10] sm:$0x3]
      %v336 = vld [vmem:[%s327 + $0x18] sm:$0xff]
      %v337 = vld [vmem:[%s327 + $0x20] sm:$0xff]
      %v338 = vld [vmem:[%s327 + $0x28] sm:$0x3]
      %v339 = vld [vmem:[%s327 + $0x30] sm:$0xff]
      %v340 = vld [vmem:[%s327 + $0x38] sm:$0xff]
      %v341 = vld [vmem:[%s327 + $0x40] sm:$0x3]
      %v342 = vld [vmem:[%s327 + $0x48] sm:$0xff]
      %v343 = vld [vmem:[%s327 + $0x50] sm:$0xff]
      %v344 = vld [vmem:[%s327 + $0x58] sm:$0x3]
      %v345 = vld [vmem:[%s327 + $0x60] sm:$0xff]
      %v346 = vld [vmem:[%s327 + $0x68] sm:$0xff]
      %v347 = vld [vmem:[%s327 + $0x70] sm:$0x3]
      %v348 = vld [vmem:[%s327 + $0x78] sm:$0xff]
      %v349 = vld [vmem:[%s327 + $0x80] sm:$0xff]
      %v350 = vld [vmem:[%s327 + $0x88] sm:$0x3]
      %v351 = vld [vmem:[%s327 + $0x90] sm:$0xff]
      %v352 = vld [vmem:[%s327 + $0x98] sm:$0xff]
      %v353 = vld [vmem:[%s327 + $0xa0] sm:$0x3]
      %v354 = vld [vmem:[%s327 + $0xa8] sm:$0xff]
      %v355 = vld [vmem:[%s327 + $0xb0] sm:$0xff]
      %v356 = vld [vmem:[%s327 + $0xb8] sm:$0x3]
      %v357 = vld [vmem:[%s327 + $0xc0] sm:$0xff]
      %v358 = vld [vmem:[%s327 + $0xc8] sm:$0xff]
      %v359 = vld [vmem:[%s327 + $0xd0] sm:$0x3]
      %v360 = vld [vmem:[%s327 + $0xd8] sm:$0xff]
      %v361 = vld [vmem:[%s327 + $0xe0] sm:$0xff]
      %v362 = vld [vmem:[%s327 + $0xe8] sm:$0x3]
      %v363 = vld [vmem:[%s327 + $0xf0] sm:$0xff]
      %v364 = vld [vmem:[%s327 + $0xf8] sm:$0xff]
      %v365 = vld [vmem:[%s327 + $0x100] sm:$0x3]
      %v366 = vld [vmem:[%s327 + $0x108] sm:$0xff]
      %v367 = vld [vmem:[%s327 + $0x110] sm:$0xff]
      %v368 = vld [vmem:[%s327 + $0x118] sm:$0x3]
      %v369 = vld [vmem:[%s327 + $0x120] sm:$0xff]
      %v370 = vld [vmem:[%s327 + $0x128] sm:$0xff]
      %v371 = vld [vmem:[%s327 + $0x130] sm:$0x3]
      %v372 = vld [vmem:[%s327 + $0x138] sm:$0xff]
      %v373 = vld [vmem:[%s327 + $0x140] sm:$0xff]
      %v374 = vld [vmem:[%s327 + $0x148] sm:$0x3]
      %v375 = vld [vmem:[%s327 + $0x150] sm:$0xff]
      %v376 = vld [vmem:[%s327 + $0x158] sm:$0xff]
      %v377 = vld [vmem:[%s327 + $0x160] sm:$0x3]
      %v378 = vld [vmem:[%s327 + $0x168] sm:$0xff]
      %v379 = vld [vmem:[%s327 + $0x170] sm:$0xff]
      %v380 = vld [vmem:[%s327 + $0x178] sm:$0x3]
      %v381 = vld [vmem:[%s327 + $0x180] sm:$0xff]
      %v382 = vld [vmem:[%s327 + $0x188] sm:$0xff]
      %v383 = vld [vmem:[%s327 + $0x190] sm:$0x3]
      %v384 = vld [vmem:[%s327 + $0x198] sm:$0xff]
      %v385 = vld [vmem:[%s327 + $0x1a0] sm:$0xff]
      %v386 = vld [vmem:[%s327 + $0x1a8] sm:$0x3]
      %v387 = vld [vmem:[%s1] sm:$0x1]
      %389 = vset.pattern.permute.xlu0 0
      %390 = vperm.xlu0 %389, %v333
      %v391 = vpop.permute.xlu0 %390
      %394 = vset.pattern.permute.xlu0 0
      %395 = vperm.xlu0 %394, %v334
      %v396 = vpop.permute.xlu0 %395
      %399 = vset.pattern.permute.xlu0 0
      %400 = vperm.xlu0 %399, %v336
      %v401 = vpop.permute.xlu0 %400
      %404 = vset.pattern.permute.xlu0 0
      %405 = vperm.xlu0 %404, %v337
      %v406 = vpop.permute.xlu0 %405
      %409 = vset.pattern.permute.xlu0 0
      %410 = vperm.xlu0 %409, %v339
      %v411 = vpop.permute.xlu0 %410
      %414 = vset.pattern.permute.xlu0 0
      %415 = vperm.xlu0 %414, %v340
      %v416 = vpop.permute.xlu0 %415
      %419 = vset.pattern.permute.xlu0 0
      %420 = vperm.xlu0 %419, %v342
      %v421 = vpop.permute.xlu0 %420
      %424 = vset.pattern.permute.xlu0 0
      %425 = vperm.xlu0 %424, %v343
      %v426 = vpop.permute.xlu0 %425
      %429 = vset.pattern.permute.xlu0 0
      %430 = vperm.xlu0 %429, %v345
      %v431 = vpop.permute.xlu0 %430
      %434 = vset.pattern.permute.xlu0 0
      %435 = vperm.xlu0 %434, %v346
      %v436 = vpop.permute.xlu0 %435
      %439 = vset.pattern.permute.xlu0 0
      %440 = vperm.xlu0 %439, %v348
      %v441 = vpop.permute.xlu0 %440
      %444 = vset.pattern.permute.xlu0 0
      %445 = vperm.xlu0 %444, %v349
      %v446 = vpop.permute.xlu0 %445
      %449 = vset.pattern.permute.xlu0 0
      %450 = vperm.xlu0 %449, %v351
      %v451 = vpop.permute.xlu0 %450
      %454 = vset.pattern.permute.xlu0 0
      %455 = vperm.xlu0 %454, %v352
      %v456 = vpop.permute.xlu0 %455
      %459 = vset.pattern.permute.xlu0 0
      %460 = vperm.xlu0 %459, %v354
      %v461 = vpop.permute.xlu0 %460
      %464 = vset.pattern.permute.xlu0 0
      %465 = vperm.xlu0 %464, %v355
      %v466 = vpop.permute.xlu0 %465
      %469 = vset.pattern.permute.xlu0 0
      %470 = vperm.xlu0 %469, %v357
      %v471 = vpop.permute.xlu0 %470
      %474 = vset.pattern.permute.xlu0 0
      %475 = vperm.xlu0 %474, %v358
      %v476 = vpop.permute.xlu0 %475
      %479 = vset.pattern.permute.xlu0 0
      %480 = vperm.xlu0 %479, %v360
      %v481 = vpop.permute.xlu0 %480
      %484 = vset.pattern.permute.xlu0 0
      %485 = vperm.xlu0 %484, %v361
      %v486 = vpop.permute.xlu0 %485
      %489 = vset.pattern.permute.xlu0 0
      %490 = vperm.xlu0 %489, %v363
      %v491 = vpop.permute.xlu0 %490
      %494 = vset.pattern.permute.xlu0 0
      %495 = vperm.xlu0 %494, %v364
      %v496 = vpop.permute.xlu0 %495
      %499 = vset.pattern.permute.xlu0 0
      %500 = vperm.xlu0 %499, %v366
      %v501 = vpop.permute.xlu0 %500
      %504 = vset.pattern.permute.xlu0 0
      %505 = vperm.xlu0 %504, %v367
      %v506 = vpop.permute.xlu0 %505
      %509 = vset.pattern.permute.xlu0 0
      %510 = vperm.xlu0 %509, %v369
      %v511 = vpop.permute.xlu0 %510
      %514 = vset.pattern.permute.xlu0 0
      %515 = vperm.xlu0 %514, %v370
      %v516 = vpop.permute.xlu0 %515
      %519 = vset.pattern.permute.xlu0 0
      %520 = vperm.xlu0 %519, %v372
      %v521 = vpop.permute.xlu0 %520
      %524 = vset.pattern.permute.xlu0 0
      %525 = vperm.xlu0 %524, %v373
      %v526 = vpop.permute.xlu0 %525
      %529 = vset.pattern.permute.xlu0 0
      %530 = vperm.xlu0 %529, %v375
      %v531 = vpop.permute.xlu0 %530
      %534 = vset.pattern.permute.xlu0 0
      %535 = vperm.xlu0 %534, %v376
      %v536 = vpop.permute.xlu0 %535
      %539 = vset.pattern.permute.xlu0 0
      %540 = vperm.xlu0 %539, %v378
      %v541 = vpop.permute.xlu0 %540
      %544 = vset.pattern.permute.xlu0 0
      %545 = vperm.xlu0 %544, %v379
      %v546 = vpop.permute.xlu0 %545
      %v548 = vlaneseq
      %v549 = vshrl.u32 %v548, 7
      %v550 = vsub.s32 0, %v549
      %v551 = vrot.slane %v387, %v550
      %v552 = vmul.f32 %v391, %v551
      %v553 = vmul.f32 %v396, %v551
      %v554 = vmul.f32 %v401, %v551
      %v555 = vmul.f32 %v406, %v551
      %v556 = vmul.f32 %v411, %v551
      %v557 = vmul.f32 %v416, %v551
      %v558 = vmul.f32 %v421, %v551
      %v559 = vmul.f32 %v426, %v551
      %v560 = vmul.f32 %v431, %v551
      %v561 = vmul.f32 %v436, %v551
      %v562 = vmul.f32 %v441, %v551
      %v563 = vmul.f32 %v446, %v551
      %v564 = vmul.f32 %v451, %v551
      %v565 = vmul.f32 %v456, %v551
      %v566 = vmul.f32 %v461, %v551
      %v567 = vmul.f32 %v466, %v551
      %v568 = vmul.f32 %v471, %v551
      %v569 = vmul.f32 %v476, %v551
      %v570 = vmul.f32 %v481, %v551
      %v571 = vmul.f32 %v486, %v551
      %v572 = vmul.f32 %v491, %v551
      %v573 = vmul.f32 %v496, %v551
      %v574 = vmul.f32 %v501, %v551
      %v575 = vmul.f32 %v506, %v551
      %v576 = vmul.f32 %v511, %v551
      %v577 = vmul.f32 %v516, %v551
      %v578 = vmul.f32 %v521, %v551
      %v579 = vmul.f32 %v526, %v551
      %v580 = vmul.f32 %v531, %v551
      %v581 = vmul.f32 %v536, %v551
      %v582 = vmul.f32 %v541, %v551
      %v583 = vmul.f32 %v546, %v551
      %v584 = vadd.f32 %v552, 0.0
      %v585 = vadd.f32 %v553, 0.0
      %v586 = vadd.f32 %v554, 0.0
      %v587 = vadd.f32 %v555, 0.0
      %v588 = vadd.f32 %v556, 0.0
      %v589 = vadd.f32 %v557, 0.0
      %v590 = vadd.f32 %v558, 0.0
      %v591 = vadd.f32 %v559, 0.0
      %v592 = vadd.f32 %v560, 0.0
      %v593 = vadd.f32 %v561, 0.0
      %v594 = vadd.f32 %v562, 0.0
      %v595 = vadd.f32 %v563, 0.0
      %v596 = vadd.f32 %v564, 0.0
      %v597 = vadd.f32 %v565, 0.0
      %v598 = vadd.f32 %v566, 0.0
      %v599 = vadd.f32 %v567, 0.0
      %v600 = vadd.f32 %v568, 0.0
      %v601 = vadd.f32 %v569, 0.0
      %v602 = vadd.f32 %v570, 0.0
      %v603 = vadd.f32 %v571, 0.0
      %v604 = vadd.f32 %v572, 0.0
      %v605 = vadd.f32 %v573, 0.0
      %v606 = vadd.f32 %v574, 0.0
      %v607 = vadd.f32 %v575, 0.0
      %v608 = vadd.f32 %v576, 0.0
      %v609 = vadd.f32 %v577, 0.0
      %v610 = vadd.f32 %v578, 0.0
      %v611 = vadd.f32 %v579, 0.0
      %v612 = vadd.f32 %v580, 0.0
      %v613 = vadd.f32 %v581, 0.0
      %v614 = vadd.f32 %v582, 0.0
      %v615 = vadd.f32 %v583, 0.0
      %v616 = vld [vmem:[%s1 + $0x1] sm:$0x1]
      %618 = vset.pattern.permute.xlu0 0
      %619 = vperm.xlu0 %618, %v335
      %v620 = vpop.permute.xlu0 %619
      %623 = vset.pattern.permute.xlu0 0
      %624 = vperm.xlu0 %623, %v338
      %v625 = vpop.permute.xlu0 %624
      %628 = vset.pattern.permute.xlu0 0
      %629 = vperm.xlu0 %628, %v341
      %v630 = vpop.permute.xlu0 %629
      %633 = vset.pattern.permute.xlu0 0
      %634 = vperm.xlu0 %633, %v344
      %v635 = vpop.permute.xlu0 %634
      %638 = vset.pattern.permute.xlu0 0
      %639 = vperm.xlu0 %638, %v347
      %v640 = vpop.permute.xlu0 %639
      %643 = vset.pattern.permute.xlu0 0
      %644 = vperm.xlu0 %643, %v350
      %v645 = vpop.permute.xlu0 %644
      %648 = vset.pattern.permute.xlu0 0
      %649 = vperm.xlu0 %648, %v353
      %v650 = vpop.permute.xlu0 %649
      %653 = vset.pattern.permute.xlu0 0
      %654 = vperm.xlu0 %653, %v356
      %v655 = vpop.permute.xlu0 %654
      %658 = vset.pattern.permute.xlu0 0
      %659 = vperm.xlu0 %658, %v359
      %v660 = vpop.permute.xlu0 %659
      %663 = vset.pattern.permute.xlu0 0
      %664 = vperm.xlu0 %663, %v362
      %v665 = vpop.permute.xlu0 %664
      %668 = vset.pattern.permute.xlu0 0
      %669 = vperm.xlu0 %668, %v365
      %v670 = vpop.permute.xlu0 %669
      %673 = vset.pattern.permute.xlu0 0
      %674 = vperm.xlu0 %673, %v368
      %v675 = vpop.permute.xlu0 %674
      %678 = vset.pattern.permute.xlu0 0
      %679 = vperm.xlu0 %678, %v371
      %v680 = vpop.permute.xlu0 %679
      %683 = vset.pattern.permute.xlu0 0
      %684 = vperm.xlu0 %683, %v374
      %v685 = vpop.permute.xlu0 %684
      %688 = vset.pattern.permute.xlu0 0
      %689 = vperm.xlu0 %688, %v377
      %v690 = vpop.permute.xlu0 %689
      %693 = vset.pattern.permute.xlu0 0
      %694 = vperm.xlu0 %693, %v380
      %v695 = vpop.permute.xlu0 %694
      %v697 = vlaneseq
      %v698 = vshrl.u32 %v697, 7
      %v699 = vsub.s32 0, %v698
      %v700 = vrot.slane %v616, %v699
      %v701 = vmul.f32 %v391, %v700
      %v702 = vmul.f32 %v396, %v700
      %v703 = vmul.f32 %v620, %v700
      %v704 = vmul.f32 %v401, %v700
      %v705 = vmul.f32 %v406, %v700
      %v706 = vmul.f32 %v625, %v700
      %v707 = vmul.f32 %v411, %v700
      %v708 = vmul.f32 %v416, %v700
      %v709 = vmul.f32 %v630, %v700
      %v710 = vmul.f32 %v421, %v700
      %v711 = vmul.f32 %v426, %v700
      %v712 = vmul.f32 %v635, %v700
      %v713 = vmul.f32 %v431, %v700
      %v714 = vmul.f32 %v436, %v700
      %v715 = vmul.f32 %v640, %v700
      %v716 = vmul.f32 %v441, %v700
      %v717 = vmul.f32 %v446, %v700
      %v718 = vmul.f32 %v645, %v700
      %v719 = vmul.f32 %v451, %v700
      %v720 = vmul.f32 %v456, %v700
      %v721 = vmul.f32 %v650, %v700
      %v722 = vmul.f32 %v461, %v700
      %v723 = vmul.f32 %v466, %v700
      %v724 = vmul.f32 %v655, %v700
      %v725 = vmul.f32 %v471, %v700
      %v726 = vmul.f32 %v476, %v700
      %v727 = vmul.f32 %v660, %v700
      %v728 = vmul.f32 %v481, %v700
      %v729 = vmul.f32 %v486, %v700
      %v730 = vmul.f32 %v665, %v700
      %v731 = vmul.f32 %v491, %v700
      %v732 = vmul.f32 %v496, %v700
      %v733 = vmul.f32 %v670, %v700
      %v734 = vmul.f32 %v501, %v700
      %v735 = vmul.f32 %v506, %v700
      %v736 = vmul.f32 %v675, %v700
      %v737 = vmul.f32 %v511, %v700
      %v738 = vmul.f32 %v516, %v700
      %v739 = vmul.f32 %v680, %v700
      %v740 = vmul.f32 %v521, %v700
      %v741 = vmul.f32 %v526, %v700
      %v742 = vmul.f32 %v685, %v700
      %v743 = vmul.f32 %v531, %v700
      %v744 = vmul.f32 %v536, %v700
      %v745 = vmul.f32 %v690, %v700
      %v746 = vmul.f32 %v541, %v700
      %v747 = vmul.f32 %v546, %v700
      %v748 = vmul.f32 %v695, %v700
      %vm797 = vcmask 1046528
      %v798 = vrot.slane %v701, 1
      %v799 = vrot.slane %v702, 1
      %v800 = vsel %vm797, %v798, %v799
      %v801 = vrot.slane %v703, 1
      %v802 = vsel %vm797, %v799, %v801
      %v803 = vrot.slane %v704, 1
      %v804 = vrot.slane %v705, 1
      %v805 = vsel %vm797, %v803, %v804
      %v806 = vrot.slane %v706, 1
      %v807 = vsel %vm797, %v804, %v806
      %v808 = vrot.slane %v707, 1
      %v809 = vrot.slane %v708, 1
      %v810 = vsel %vm797, %v808, %v809
      %v811 = vrot.slane %v709, 1
      %v812 = vsel %vm797, %v809, %v811
      %v813 = vrot.slane %v710, 1
      %v814 = vrot.slane %v711, 1
      %v815 = vsel %vm797, %v813, %v814
      %v816 = vrot.slane %v712, 1
      %v817 = vsel %vm797, %v814, %v816
      %v818 = vrot.slane %v713, 1
      %v819 = vrot.slane %v714, 1
      %v820 = vsel %vm797, %v818, %v819
      %v821 = vrot.slane %v715, 1
      %v822 = vsel %vm797, %v819, %v821
      %v823 = vrot.slane %v716, 1
      %v824 = vrot.slane %v717, 1
      %v825 = vsel %vm797, %v823, %v824
      %v826 = vrot.slane %v718, 1
      %v827 = vsel %vm797, %v824, %v826
      %v828 = vrot.slane %v719, 1
      %v829 = vrot.slane %v720, 1
      %v830 = vsel %vm797, %v828, %v829
      %v831 = vrot.slane %v721, 1
      %v832 = vsel %vm797, %v829, %v831
      %v833 = vrot.slane %v722, 1
      %v834 = vrot.slane %v723, 1
      %v835 = vsel %vm797, %v833, %v834
      %v836 = vrot.slane %v724, 1
      %v837 = vsel %vm797, %v834, %v836
      %v838 = vrot.slane %v725, 1
      %v839 = vrot.slane %v726, 1
      %v840 = vsel %vm797, %v838, %v839
      %v841 = vrot.slane %v727, 1
      %v842 = vsel %vm797, %v839, %v841
      %v843 = vrot.slane %v728, 1
      %v844 = vrot.slane %v729, 1
      %v845 = vsel %vm797, %v843, %v844
      %v846 = vrot.slane %v730, 1
      %v847 = vsel %vm797, %v844, %v846
      %v848 = vrot.slane %v731, 1
      %v849 = vrot.slane %v732, 1
      %v850 = vsel %vm797, %v848, %v849
      %v851 = vrot.slane %v733, 1
      %v852 = vsel %vm797, %v849, %v851
      %v853 = vrot.slane %v734, 1
      %v854 = vrot.slane %v735, 1
      %v855 = vsel %vm797, %v853, %v854
      %v856 = vrot.slane %v736, 1
      %v857 = vsel %vm797, %v854, %v856
      %v858 = vrot.slane %v737, 1
      %v859 = vrot.slane %v738, 1
      %v860 = vsel %vm797, %v858, %v859
      %v861 = vrot.slane %v739, 1
      %v862 = vsel %vm797, %v859, %v861
      %v863 = vrot.slane %v740, 1
      %v864 = vrot.slane %v741, 1
      %v865 = vsel %vm797, %v863, %v864
      %v866 = vrot.slane %v742, 1
      %v867 = vsel %vm797, %v864, %v866
      %v868 = vrot.slane %v743, 1
      %v869 = vrot.slane %v744, 1
      %v870 = vsel %vm797, %v868, %v869
      %v871 = vrot.slane %v745, 1
      %v872 = vsel %vm797, %v869, %v871
      %v873 = vrot.slane %v746, 1
      %v874 = vrot.slane %v747, 1
      %v875 = vsel %vm797, %v873, %v874
      %v876 = vrot.slane %v748, 1
      %v877 = vsel %vm797, %v874, %v876
      %v910 = vadd.f32 %v584, %v800
      %v911 = vadd.f32 %v585, %v802
      %v912 = vadd.f32 %v586, %v805
      %v913 = vadd.f32 %v587, %v807
      %v914 = vadd.f32 %v588, %v810
      %v915 = vadd.f32 %v589, %v812
      %v916 = vadd.f32 %v590, %v815
      %v917 = vadd.f32 %v591, %v817
      %v918 = vadd.f32 %v592, %v820
      %v919 = vadd.f32 %v593, %v822
      %v920 = vadd.f32 %v594, %v825
      %v921 = vadd.f32 %v595, %v827
      %v922 = vadd.f32 %v596, %v830
      %v923 = vadd.f32 %v597, %v832
      %v924 = vadd.f32 %v598, %v835
      %v925 = vadd.f32 %v599, %v837
      %v926 = vadd.f32 %v600, %v840
      %v927 = vadd.f32 %v601, %v842
      %v928 = vadd.f32 %v602, %v845
      %v929 = vadd.f32 %v603, %v847
      %v930 = vadd.f32 %v604, %v850
      %v931 = vadd.f32 %v605, %v852
      %v932 = vadd.f32 %v606, %v855
      %v933 = vadd.f32 %v607, %v857
      %v934 = vadd.f32 %v608, %v860
      %v935 = vadd.f32 %v609, %v862
      %v936 = vadd.f32 %v610, %v865
      %v937 = vadd.f32 %v611, %v867
      %v938 = vadd.f32 %v612, %v870
      %v939 = vadd.f32 %v613, %v872
      %v940 = vadd.f32 %v614, %v875
      %v941 = vadd.f32 %v615, %v877
      %v942 = vld [vmem:[%s1 + $0x2] sm:$0x1]
      %v943 = vlaneseq
      %v944 = vshrl.u32 %v943, 7
      %v945 = vsub.s32 0, %v944
      %v946 = vrot.slane %v942, %v945
      %v947 = vmul.f32 %v391, %v946
      %v948 = vmul.f32 %v396, %v946
      %v949 = vmul.f32 %v620, %v946
      %v950 = vmul.f32 %v401, %v946
      %v951 = vmul.f32 %v406, %v946
      %v952 = vmul.f32 %v625, %v946
      %v953 = vmul.f32 %v411, %v946
      %v954 = vmul.f32 %v416, %v946
      %v955 = vmul.f32 %v630, %v946
      %v956 = vmul.f32 %v421, %v946
      %v957 = vmul.f32 %v426, %v946
      %v958 = vmul.f32 %v635, %v946
      %v959 = vmul.f32 %v431, %v946
      %v960 = vmul.f32 %v436, %v946
      %v961 = vmul.f32 %v640, %v946
      %v962 = vmul.f32 %v441, %v946
      %v963 = vmul.f32 %v446, %v946
      %v964 = vmul.f32 %v645, %v946
      %v965 = vmul.f32 %v451, %v946
      %v966 = vmul.f32 %v456, %v946
      %v967 = vmul.f32 %v650, %v946
      %v968 = vmul.f32 %v461, %v946
      %v969 = vmul.f32 %v466, %v946
      %v970 = vmul.f32 %v655, %v946
      %v971 = vmul.f32 %v471, %v946
      %v972 = vmul.f32 %v476, %v946
      %v973 = vmul.f32 %v660, %v946
      %v974 = vmul.f32 %v481, %v946
      %v975 = vmul.f32 %v486, %v946
      %v976 = vmul.f32 %v665, %v946
      %v977 = vmul.f32 %v491, %v946
      %v978 = vmul.f32 %v496, %v946
      %v979 = vmul.f32 %v670, %v946
      %v980 = vmul.f32 %v501, %v946
      %v981 = vmul.f32 %v506, %v946
      %v982 = vmul.f32 %v675, %v946
      %v983 = vmul.f32 %v511, %v946
      %v984 = vmul.f32 %v516, %v946
      %v985 = vmul.f32 %v680, %v946
      %v986 = vmul.f32 %v521, %v946
      %v987 = vmul.f32 %v526, %v946
      %v988 = vmul.f32 %v685, %v946
      %v989 = vmul.f32 %v531, %v946
      %v990 = vmul.f32 %v536, %v946
      %v991 = vmul.f32 %v690, %v946
      %v992 = vmul.f32 %v541, %v946
      %v993 = vmul.f32 %v546, %v946
      %v994 = vmul.f32 %v695, %v946
      %vm1043 = vcmask 1045504
      %v1044 = vrot.slane %v947, 2
      %v1045 = vrot.slane %v948, 2
      %v1046 = vsel %vm1043, %v1044, %v1045
      %v1047 = vrot.slane %v949, 2
      %v1048 = vsel %vm1043, %v1045, %v1047
      %v1049 = vrot.slane %v950, 2
      %v1050 = vrot.slane %v951, 2
      %v1051 = vsel %vm1043, %v1049, %v1050
      %v1052 = vrot.slane %v952, 2
      %v1053 = vsel %vm1043, %v1050, %v1052
      %v1054 = vrot.slane %v953, 2
      %v1055 = vrot.slane %v954, 2
      %v1056 = vsel %vm1043, %v1054, %v1055
      %v1057 = vrot.slane %v955, 2
      %v1058 = vsel %vm1043, %v1055, %v1057
      %v1059 = vrot.slane %v956, 2
      %v1060 = vrot.slane %v957, 2
      %v1061 = vsel %vm1043, %v1059, %v1060
      %v1062 = vrot.slane %v958, 2
      %v1063 = vsel %vm1043, %v1060, %v1062
      %v1064 = vrot.slane %v959, 2
      %v1065 = vrot.slane %v960, 2
      %v1066 = vsel %vm1043, %v1064, %v1065
      %v1067 = vrot.slane %v961, 2
      %v1068 = vsel %vm1043, %v1065, %v1067
      %v1069 = vrot.slane %v962, 2
      %v1070 = vrot.slane %v963, 2
      %v1071 = vsel %vm1043, %v1069, %v1070
      %v1072 = vrot.slane %v964, 2
      %v1073 = vsel %vm1043, %v1070, %v1072
      %v1074 = vrot.slane %v965, 2
      %v1075 = vrot.slane %v966, 2
      %v1076 = vsel %vm1043, %v1074, %v1075
      %v1077 = vrot.slane %v967, 2
      %v1078 = vsel %vm1043, %v1075, %v1077
      %v1079 = vrot.slane %v968, 2
      %v1080 = vrot.slane %v969, 2
      %v1081 = vsel %vm1043, %v1079, %v1080
      %v1082 = vrot.slane %v970, 2
      %v1083 = vsel %vm1043, %v1080, %v1082
      %v1084 = vrot.slane %v971, 2
      %v1085 = vrot.slane %v972, 2
      %v1086 = vsel %vm1043, %v1084, %v1085
      %v1087 = vrot.slane %v973, 2
      %v1088 = vsel %vm1043, %v1085, %v1087
      %v1089 = vrot.slane %v974, 2
      %v1090 = vrot.slane %v975, 2
      %v1091 = vsel %vm1043, %v1089, %v1090
      %v1092 = vrot.slane %v976, 2
      %v1093 = vsel %vm1043, %v1090, %v1092
      %v1094 = vrot.slane %v977, 2
      %v1095 = vrot.slane %v978, 2
      %v1096 = vsel %vm1043, %v1094, %v1095
      %v1097 = vrot.slane %v979, 2
      %v1098 = vsel %vm1043, %v1095, %v1097
      %v1099 = vrot.slane %v980, 2
      %v1100 = vrot.slane %v981, 2
      %v1101 = vsel %vm1043, %v1099, %v1100
      %v1102 = vrot.slane %v982, 2
      %v1103 = vsel %vm1043, %v1100, %v1102
      %v1104 = vrot.slane %v983, 2
      %v1105 = vrot.slane %v984, 2
      %v1106 = vsel %vm1043, %v1104, %v1105
      %v1107 = vrot.slane %v985, 2
      %v1108 = vsel %vm1043, %v1105, %v1107
      %v1109 = vrot.slane %v986, 2
      %v1110 = vrot.slane %v987, 2
      %v1111 = vsel %vm1043, %v1109, %v1110
      %v1112 = vrot.slane %v988, 2
      %v1113 = vsel %vm1043, %v1110, %v1112
      %v1114 = vrot.slane %v989, 2
      %v1115 = vrot.slane %v990, 2
      %v1116 = vsel %vm1043, %v1114, %v1115
      %v1117 = vrot.slane %v991, 2
      %v1118 = vsel %vm1043, %v1115, %v1117
      %v1119 = vrot.slane %v992, 2
      %v1120 = vrot.slane %v993, 2
      %v1121 = vsel %vm1043, %v1119, %v1120
      %v1122 = vrot.slane %v994, 2
      %v1123 = vsel %vm1043, %v1120, %v1122
      %v1156 = vadd.f32 %v910, %v1046
      %v1157 = vadd.f32 %v911, %v1048
      %v1158 = vadd.f32 %v912, %v1051
      %v1159 = vadd.f32 %v913, %v1053
      %v1160 = vadd.f32 %v914, %v1056
      %v1161 = vadd.f32 %v915, %v1058
      %v1162 = vadd.f32 %v916, %v1061
      %v1163 = vadd.f32 %v917, %v1063
      %v1164 = vadd.f32 %v918, %v1066
      %v1165 = vadd.f32 %v919, %v1068
      %v1166 = vadd.f32 %v920, %v1071
      %v1167 = vadd.f32 %v921, %v1073
      %v1168 = vadd.f32 %v922, %v1076
      %v1169 = vadd.f32 %v923, %v1078
      %v1170 = vadd.f32 %v924, %v1081
      %v1171 = vadd.f32 %v925, %v1083
      %v1172 = vadd.f32 %v926, %v1086
      %v1173 = vadd.f32 %v927, %v1088
      %v1174 = vadd.f32 %v928, %v1091
      %v1175 = vadd.f32 %v929, %v1093
      %v1176 = vadd.f32 %v930, %v1096
      %v1177 = vadd.f32 %v931, %v1098
      %v1178 = vadd.f32 %v932, %v1101
      %v1179 = vadd.f32 %v933, %v1103
      %v1180 = vadd.f32 %v934, %v1106
      %v1181 = vadd.f32 %v935, %v1108
      %v1182 = vadd.f32 %v936, %v1111
      %v1183 = vadd.f32 %v937, %v1113
      %v1184 = vadd.f32 %v938, %v1116
      %v1185 = vadd.f32 %v939, %v1118
      %v1186 = vadd.f32 %v940, %v1121
      %v1187 = vadd.f32 %v941, %v1123
      %v1188 = vld [vmem:[%s1 + $0x3] sm:$0x1]
      %1190 = vset.pattern.permute.xlu0 0
      %1191 = vperm.xlu0 %1190, %v381
      %v1192 = vpop.permute.xlu0 %1191
      %1195 = vset.pattern.permute.xlu0 0
      %1196 = vperm.xlu0 %1195, %v382
      %v1197 = vpop.permute.xlu0 %1196
      %v1199 = vlaneseq
      %v1200 = vshrl.u32 %v1199, 7
      %v1201 = vsub.s32 0, %v1200
      %v1202 = vrot.slane %v1188, %v1201
      %v1203 = vmul.f32 %v401, %v1202
      %v1204 = vmul.f32 %v406, %v1202
      %v1205 = vmul.f32 %v411, %v1202
      %v1206 = vmul.f32 %v416, %v1202
      %v1207 = vmul.f32 %v421, %v1202
      %v1208 = vmul.f32 %v426, %v1202
      %v1209 = vmul.f32 %v431, %v1202
      %v1210 = vmul.f32 %v436, %v1202
      %v1211 = vmul.f32 %v441, %v1202
      %v1212 = vmul.f32 %v446, %v1202
      %v1213 = vmul.f32 %v451, %v1202
      %v1214 = vmul.f32 %v456, %v1202
      %v1215 = vmul.f32 %v461, %v1202
      %v1216 = vmul.f32 %v466, %v1202
      %v1217 = vmul.f32 %v471, %v1202
      %v1218 = vmul.f32 %v476, %v1202
      %v1219 = vmul.f32 %v481, %v1202
      %v1220 = vmul.f32 %v486, %v1202
      %v1221 = vmul.f32 %v491, %v1202
      %v1222 = vmul.f32 %v496, %v1202
      %v1223 = vmul.f32 %v501, %v1202
      %v1224 = vmul.f32 %v506, %v1202
      %v1225 = vmul.f32 %v511, %v1202
      %v1226 = vmul.f32 %v516, %v1202
      %v1227 = vmul.f32 %v521, %v1202
      %v1228 = vmul.f32 %v526, %v1202
      %v1229 = vmul.f32 %v531, %v1202
      %v1230 = vmul.f32 %v536, %v1202
      %v1231 = vmul.f32 %v541, %v1202
      %v1232 = vmul.f32 %v546, %v1202
      %v1233 = vmul.f32 %v1192, %v1202
      %v1234 = vmul.f32 %v1197, %v1202
      %v1235 = vadd.f32 %v1156, %v1203
      %v1236 = vadd.f32 %v1157, %v1204
      %v1237 = vadd.f32 %v1158, %v1205
      %v1238 = vadd.f32 %v1159, %v1206
      %v1239 = vadd.f32 %v1160, %v1207
      %v1240 = vadd.f32 %v1161, %v1208
      %v1241 = vadd.f32 %v1162, %v1209
      %v1242 = vadd.f32 %v1163, %v1210
      %v1243 = vadd.f32 %v1164, %v1211
      %v1244 = vadd.f32 %v1165, %v1212
      %v1245 = vadd.f32 %v1166, %v1213
      %v1246 = vadd.f32 %v1167, %v1214
      %v1247 = vadd.f32 %v1168, %v1215
      %v1248 = vadd.f32 %v1169, %v1216
      %v1249 = vadd.f32 %v1170, %v1217
      %v1250 = vadd.f32 %v1171, %v1218
      %v1251 = vadd.f32 %v1172, %v1219
      %v1252 = vadd.f32 %v1173, %v1220
      %v1253 = vadd.f32 %v1174, %v1221
      %v1254 = vadd.f32 %v1175, %v1222
      %v1255 = vadd.f32 %v1176, %v1223
      %v1256 = vadd.f32 %v1177, %v1224
      %v1257 = vadd.f32 %v1178, %v1225
      %v1258 = vadd.f32 %v1179, %v1226
      %v1259 = vadd.f32 %v1180, %v1227
      %v1260 = vadd.f32 %v1181, %v1228
      %v1261 = vadd.f32 %v1182, %v1229
      %v1262 = vadd.f32 %v1183, %v1230
      %v1263 = vadd.f32 %v1184, %v1231
      %v1264 = vadd.f32 %v1185, %v1232
      %v1265 = vadd.f32 %v1186, %v1233
      %v1266 = vadd.f32 %v1187, %v1234
      %v1267 = vld [vmem:[%s1 + $0x4] sm:$0x1]
      %1269 = vset.pattern.permute.xlu0 0
      %1270 = vperm.xlu0 %1269, %v383
      %v1271 = vpop.permute.xlu0 %1270
      %v1273 = vlaneseq
      %v1274 = vshrl.u32 %v1273, 7
      %v1275 = vsub.s32 0, %v1274
      %v1276 = vrot.slane %v1267, %v1275
      %v1277 = vmul.f32 %v401, %v1276
      %v1278 = vmul.f32 %v406, %v1276
      %v1279 = vmul.f32 %v625, %v1276
      %v1280 = vmul.f32 %v411, %v1276
      %v1281 = vmul.f32 %v416, %v1276
      %v1282 = vmul.f32 %v630, %v1276
      %v1283 = vmul.f32 %v421, %v1276
      %v1284 = vmul.f32 %v426, %v1276
      %v1285 = vmul.f32 %v635, %v1276
      %v1286 = vmul.f32 %v431, %v1276
      %v1287 = vmul.f32 %v436, %v1276
      %v1288 = vmul.f32 %v640, %v1276
      %v1289 = vmul.f32 %v441, %v1276
      %v1290 = vmul.f32 %v446, %v1276
      %v1291 = vmul.f32 %v645, %v1276
      %v1292 = vmul.f32 %v451, %v1276
      %v1293 = vmul.f32 %v456, %v1276
      %v1294 = vmul.f32 %v650, %v1276
      %v1295 = vmul.f32 %v461, %v1276
      %v1296 = vmul.f32 %v466, %v1276
      %v1297 = vmul.f32 %v655, %v1276
      %v1298 = vmul.f32 %v471, %v1276
      %v1299 = vmul.f32 %v476, %v1276
      %v1300 = vmul.f32 %v660, %v1276
      %v1301 = vmul.f32 %v481, %v1276
      %v1302 = vmul.f32 %v486, %v1276
      %v1303 = vmul.f32 %v665, %v1276
      %v1304 = vmul.f32 %v491, %v1276
      %v1305 = vmul.f32 %v496, %v1276
      %v1306 = vmul.f32 %v670, %v1276
      %v1307 = vmul.f32 %v501, %v1276
      %v1308 = vmul.f32 %v506, %v1276
      %v1309 = vmul.f32 %v675, %v1276
      %v1310 = vmul.f32 %v511, %v1276
      %v1311 = vmul.f32 %v516, %v1276
      %v1312 = vmul.f32 %v680, %v1276
      %v1313 = vmul.f32 %v521, %v1276
      %v1314 = vmul.f32 %v526, %v1276
      %v1315 = vmul.f32 %v685, %v1276
      %v1316 = vmul.f32 %v531, %v1276
      %v1317 = vmul.f32 %v536, %v1276
      %v1318 = vmul.f32 %v690, %v1276
      %v1319 = vmul.f32 %v541, %v1276
      %v1320 = vmul.f32 %v546, %v1276
      %v1321 = vmul.f32 %v695, %v1276
      %v1322 = vmul.f32 %v1192, %v1276
      %v1323 = vmul.f32 %v1197, %v1276
      %v1324 = vmul.f32 %v1271, %v1276
      %v1373 = vrot.slane %v1277, 1
      %v1374 = vrot.slane %v1278, 1
      %v1375 = vsel %vm797, %v1373, %v1374
      %v1376 = vrot.slane %v1279, 1
      %v1377 = vsel %vm797, %v1374, %v1376
      %v1378 = vrot.slane %v1280, 1
      %v1379 = vrot.slane %v1281, 1
      %v1380 = vsel %vm797, %v1378, %v1379
      %v1381 = vrot.slane %v1282, 1
      %v1382 = vsel %vm797, %v1379, %v1381
      %v1383 = vrot.slane %v1283, 1
      %v1384 = vrot.slane %v1284, 1
      %v1385 = vsel %vm797, %v1383, %v1384
      %v1386 = vrot.slane %v1285, 1
      %v1387 = vsel %vm797, %v1384, %v1386
      %v1388 = vrot.slane %v1286, 1
      %v1389 = vrot.slane %v1287, 1
      %v1390 = vsel %vm797, %v1388, %v1389
      %v1391 = vrot.slane %v1288, 1
      %v1392 = vsel %vm797, %v1389, %v1391
      %v1393 = vrot.slane %v1289, 1
      %v1394 = vrot.slane %v1290, 1
      %v1395 = vsel %vm797, %v1393, %v1394
      %v1396 = vrot.slane %v1291, 1
      %v1397 = vsel %vm797, %v1394, %v1396
      %v1398 = vrot.slane %v1292, 1
      %v1399 = vrot.slane %v1293, 1
      %v1400 = vsel %vm797, %v1398, %v1399
      %v1401 = vrot.slane %v1294, 1
      %v1402 = vsel %vm797, %v1399, %v1401
      %v1403 = vrot.slane %v1295, 1
      %v1404 = vrot.slane %v1296, 1
      %v1405 = vsel %vm797, %v1403, %v1404
      %v1406 = vrot.slane %v1297, 1
      %v1407 = vsel %vm797, %v1404, %v1406
      %v1408 = vrot.slane %v1298, 1
      %v1409 = vrot.slane %v1299, 1
      %v1410 = vsel %vm797, %v1408, %v1409
      %v1411 = vrot.slane %v1300, 1
      %v1412 = vsel %vm797, %v1409, %v1411
      %v1413 = vrot.slane %v1301, 1
      %v1414 = vrot.slane %v1302, 1
      %v1415 = vsel %vm797, %v1413, %v1414
      %v1416 = vrot.slane %v1303, 1
      %v1417 = vsel %vm797, %v1414, %v1416
      %v1418 = vrot.slane %v1304, 1
      %v1419 = vrot.slane %v1305, 1
      %v1420 = vsel %vm797, %v1418, %v1419
      %v1421 = vrot.slane %v1306, 1
      %v1422 = vsel %vm797, %v1419, %v1421
      %v1423 = vrot.slane %v1307, 1
      %v1424 = vrot.slane %v1308, 1
      %v1425 = vsel %vm797, %v1423, %v1424
      %v1426 = vrot.slane %v1309, 1
      %v1427 = vsel %vm797, %v1424, %v1426
      %v1428 = vrot.slane %v1310, 1
      %v1429 = vrot.slane %v1311, 1
      %v1430 = vsel %vm797, %v1428, %v1429
      %v1431 = vrot.slane %v1312, 1
      %v1432 = vsel %vm797, %v1429, %v1431
      %v1433 = vrot.slane %v1313, 1
      %v1434 = vrot.slane %v1314, 1
      %v1435 = vsel %vm797, %v1433, %v1434
      %v1436 = vrot.slane %v1315, 1
      %v1437 = vsel %vm797, %v1434, %v1436
      %v1438 = vrot.slane %v1316, 1
      %v1439 = vrot.slane %v1317, 1
      %v1440 = vsel %vm797, %v1438, %v1439
      %v1441 = vrot.slane %v1318, 1
      %v1442 = vsel %vm797, %v1439, %v1441
      %v1443 = vrot.slane %v1319, 1
      %v1444 = vrot.slane %v1320, 1
      %v1445 = vsel %vm797, %v1443, %v1444
      %v1446 = vrot.slane %v1321, 1
      %v1447 = vsel %vm797, %v1444, %v1446
      %v1448 = vrot.slane %v1322, 1
      %v1449 = vrot.slane %v1323, 1
      %v1450 = vsel %vm797, %v1448, %v1449
      %v1451 = vrot.slane %v1324, 1
      %v1452 = vsel %vm797, %v1449, %v1451
      %v1485 = vadd.f32 %v1235, %v1375
      %v1486 = vadd.f32 %v1236, %v1377
      %v1487 = vadd.f32 %v1237, %v1380
      %v1488 = vadd.f32 %v1238, %v1382
      %v1489 = vadd.f32 %v1239, %v1385
      %v1490 = vadd.f32 %v1240, %v1387
      %v1491 = vadd.f32 %v1241, %v1390
      %v1492 = vadd.f32 %v1242, %v1392
      %v1493 = vadd.f32 %v1243, %v1395
      %v1494 = vadd.f32 %v1244, %v1397
      %v1495 = vadd.f32 %v1245, %v1400
      %v1496 = vadd.f32 %v1246, %v1402
      %v1497 = vadd.f32 %v1247, %v1405
      %v1498 = vadd.f32 %v1248, %v1407
      %v1499 = vadd.f32 %v1249, %v1410
      %v1500 = vadd.f32 %v1250, %v1412
      %v1501 = vadd.f32 %v1251, %v1415
      %v1502 = vadd.f32 %v1252, %v1417
      %v1503 = vadd.f32 %v1253, %v1420
      %v1504 = vadd.f32 %v1254, %v1422
      %v1505 = vadd.f32 %v1255, %v1425
      %v1506 = vadd.f32 %v1256, %v1427
      %v1507 = vadd.f32 %v1257, %v1430
      %v1508 = vadd.f32 %v1258, %v1432
      %v1509 = vadd.f32 %v1259, %v1435
      %v1510 = vadd.f32 %v1260, %v1437
      %v1511 = vadd.f32 %v1261, %v1440
      %v1512 = vadd.f32 %v1262, %v1442
      %v1513 = vadd.f32 %v1263, %v1445
      %v1514 = vadd.f32 %v1264, %v1447
      %v1515 = vadd.f32 %v1265, %v1450
      %v1516 = vadd.f32 %v1266, %v1452
      %v1517 = vld [vmem:[%s1 + $0x5] sm:$0x1]
      %v1518 = vlaneseq
      %v1519 = vshrl.u32 %v1518, 7
      %v1520 = vsub.s32 0, %v1519
      %v1521 = vrot.slane %v1517, %v1520
      %v1522 = vmul.f32 %v401, %v1521
      %v1523 = vmul.f32 %v406, %v1521
      %v1524 = vmul.f32 %v625, %v1521
      %v1525 = vmul.f32 %v411, %v1521
      %v1526 = vmul.f32 %v416, %v1521
      %v1527 = vmul.f32 %v630, %v1521
      %v1528 = vmul.f32 %v421, %v1521
      %v1529 = vmul.f32 %v426, %v1521
      %v1530 = vmul.f32 %v635, %v1521
      %v1531 = vmul.f32 %v431, %v1521
      %v1532 = vmul.f32 %v436, %v1521
      %v1533 = vmul.f32 %v640, %v1521
      %v1534 = vmul.f32 %v441, %v1521
      %v1535 = vmul.f32 %v446, %v1521
      %v1536 = vmul.f32 %v645, %v1521
      %v1537 = vmul.f32 %v451, %v1521
      %v1538 = vmul.f32 %v456, %v1521
      %v1539 = vmul.f32 %v650, %v1521
      %v1540 = vmul.f32 %v461, %v1521
      %v1541 = vmul.f32 %v466, %v1521
      %v1542 = vmul.f32 %v655, %v1521
      %v1543 = vmul.f32 %v471, %v1521
      %v1544 = vmul.f32 %v476, %v1521
      %v1545 = vmul.f32 %v660, %v1521
      %v1546 = vmul.f32 %v481, %v1521
      %v1547 = vmul.f32 %v486, %v1521
      %v1548 = vmul.f32 %v665, %v1521
      %v1549 = vmul.f32 %v491, %v1521
      %v1550 = vmul.f32 %v496, %v1521
      %v1551 = vmul.f32 %v670, %v1521
      %v1552 = vmul.f32 %v501, %v1521
      %v1553 = vmul.f32 %v506, %v1521
      %v1554 = vmul.f32 %v675, %v1521
      %v1555 = vmul.f32 %v511, %v1521
      %v1556 = vmul.f32 %v516, %v1521
      %v1557 = vmul.f32 %v680, %v1521
      %v1558 = vmul.f32 %v521, %v1521
      %v1559 = vmul.f32 %v526, %v1521
      %v1560 = vmul.f32 %v685, %v1521
      %v1561 = vmul.f32 %v531, %v1521
      %v1562 = vmul.f32 %v536, %v1521
      %v1563 = vmul.f32 %v690, %v1521
      %v1564 = vmul.f32 %v541, %v1521
      %v1565 = vmul.f32 %v546, %v1521
      %v1566 = vmul.f32 %v695, %v1521
      %v1567 = vmul.f32 %v1192, %v1521
      %v1568 = vmul.f32 %v1197, %v1521
      %v1569 = vmul.f32 %v1271, %v1521
      %v1618 = vrot.slane %v1522, 2
      %v1619 = vrot.slane %v1523, 2
      %v1620 = vsel %vm1043, %v1618, %v1619
      %v1621 = vrot.slane %v1524, 2
      %v1622 = vsel %vm1043, %v1619, %v1621
      %v1623 = vrot.slane %v1525, 2
      %v1624 = vrot.slane %v1526, 2
      %v1625 = vsel %vm1043, %v1623, %v1624
      %v1626 = vrot.slane %v1527, 2
      %v1627 = vsel %vm1043, %v1624, %v1626
      %v1628 = vrot.slane %v1528, 2
      %v1629 = vrot.slane %v1529, 2
      %v1630 = vsel %vm1043, %v1628, %v1629
      %v1631 = vrot.slane %v1530, 2
      %v1632 = vsel %vm1043, %v1629, %v1631
      %v1633 = vrot.slane %v1531, 2
      %v1634 = vrot.slane %v1532, 2
      %v1635 = vsel %vm1043, %v1633, %v1634
      %v1636 = vrot.slane %v1533, 2
      %v1637 = vsel %vm1043, %v1634, %v1636
      %v1638 = vrot.slane %v1534, 2
      %v1639 = vrot.slane %v1535, 2
      %v1640 = vsel %vm1043, %v1638, %v1639
      %v1641 = vrot.slane %v1536, 2
      %v1642 = vsel %vm1043, %v1639, %v1641
      %v1643 = vrot.slane %v1537, 2
      %v1644 = vrot.slane %v1538, 2
      %v1645 = vsel %vm1043, %v1643, %v1644
      %v1646 = vrot.slane %v1539, 2
      %v1647 = vsel %vm1043, %v1644, %v1646
      %v1648 = vrot.slane %v1540, 2
      %v1649 = vrot.slane %v1541, 2
      %v1650 = vsel %vm1043, %v1648, %v1649
      %v1651 = vrot.slane %v1542, 2
      %v1652 = vsel %vm1043, %v1649, %v1651
      %v1653 = vrot.slane %v1543, 2
      %v1654 = vrot.slane %v1544, 2
      %v1655 = vsel %vm1043, %v1653, %v1654
      %v1656 = vrot.slane %v1545, 2
      %v1657 = vsel %vm1043, %v1654, %v1656
      %v1658 = vrot.slane %v1546, 2
      %v1659 = vrot.slane %v1547, 2
      %v1660 = vsel %vm1043, %v1658, %v1659
      %v1661 = vrot.slane %v1548, 2
      %v1662 = vsel %vm1043, %v1659, %v1661
      %v1663 = vrot.slane %v1549, 2
      %v1664 = vrot.slane %v1550, 2
      %v1665 = vsel %vm1043, %v1663, %v1664
      %v1666 = vrot.slane %v1551, 2
      %v1667 = vsel %vm1043, %v1664, %v1666
      %v1668 = vrot.slane %v1552, 2
      %v1669 = vrot.slane %v1553, 2
      %v1670 = vsel %vm1043, %v1668, %v1669
      %v1671 = vrot.slane %v1554, 2
      %v1672 = vsel %vm1043, %v1669, %v1671
      %v1673 = vrot.slane %v1555, 2
      %v1674 = vrot.slane %v1556, 2
      %v1675 = vsel %vm1043, %v1673, %v1674
      %v1676 = vrot.slane %v1557, 2
      %v1677 = vsel %vm1043, %v1674, %v1676
      %v1678 = vrot.slane %v1558, 2
      %v1679 = vrot.slane %v1559, 2
      %v1680 = vsel %vm1043, %v1678, %v1679
      %v1681 = vrot.slane %v1560, 2
      %v1682 = vsel %vm1043, %v1679, %v1681
      %v1683 = vrot.slane %v1561, 2
      %v1684 = vrot.slane %v1562, 2
      %v1685 = vsel %vm1043, %v1683, %v1684
      %v1686 = vrot.slane %v1563, 2
      %v1687 = vsel %vm1043, %v1684, %v1686
      %v1688 = vrot.slane %v1564, 2
      %v1689 = vrot.slane %v1565, 2
      %v1690 = vsel %vm1043, %v1688, %v1689
      %v1691 = vrot.slane %v1566, 2
      %v1692 = vsel %vm1043, %v1689, %v1691
      %v1693 = vrot.slane %v1567, 2
      %v1694 = vrot.slane %v1568, 2
      %v1695 = vsel %vm1043, %v1693, %v1694
      %v1696 = vrot.slane %v1569, 2
      %v1697 = vsel %vm1043, %v1694, %v1696
      %v1730 = vadd.f32 %v1485, %v1620
      %v1731 = vadd.f32 %v1486, %v1622
      %v1732 = vadd.f32 %v1487, %v1625
      %v1733 = vadd.f32 %v1488, %v1627
      %v1734 = vadd.f32 %v1489, %v1630
      %v1735 = vadd.f32 %v1490, %v1632
      %v1736 = vadd.f32 %v1491, %v1635
      %v1737 = vadd.f32 %v1492, %v1637
      %v1738 = vadd.f32 %v1493, %v1640
      %v1739 = vadd.f32 %v1494, %v1642
      %v1740 = vadd.f32 %v1495, %v1645
      %v1741 = vadd.f32 %v1496, %v1647
      %v1742 = vadd.f32 %v1497, %v1650
      %v1743 = vadd.f32 %v1498, %v1652
      %v1744 = vadd.f32 %v1499, %v1655
      %v1745 = vadd.f32 %v1500, %v1657
      %v1746 = vadd.f32 %v1501, %v1660
      %v1747 = vadd.f32 %v1502, %v1662
      %v1748 = vadd.f32 %v1503, %v1665
      %v1749 = vadd.f32 %v1504, %v1667
      %v1750 = vadd.f32 %v1505, %v1670
      %v1751 = vadd.f32 %v1506, %v1672
      %v1752 = vadd.f32 %v1507, %v1675
      %v1753 = vadd.f32 %v1508, %v1677
      %v1754 = vadd.f32 %v1509, %v1680
      %v1755 = vadd.f32 %v1510, %v1682
      %v1756 = vadd.f32 %v1511, %v1685
      %v1757 = vadd.f32 %v1512, %v1687
      %v1758 = vadd.f32 %v1513, %v1690
      %v1759 = vadd.f32 %v1514, %v1692
      %v1760 = vadd.f32 %v1515, %v1695
      %v1761 = vadd.f32 %v1516, %v1697
      %v1762 = vld [vmem:[%s1 + $0x6] sm:$0x1]
      %1764 = vset.pattern.permute.xlu0 0
      %1765 = vperm.xlu0 %1764, %v384
      %v1766 = vpop.permute.xlu0 %1765
      %1769 = vset.pattern.permute.xlu0 0
      %1770 = vperm.xlu0 %1769, %v385
      %v1771 = vpop.permute.xlu0 %1770
      %v1773 = vlaneseq
      %v1774 = vshrl.u32 %v1773, 7
      %v1775 = vsub.s32 0, %v1774
      %v1776 = vrot.slane %v1762, %v1775
      %v1777 = vmul.f32 %v411, %v1776
      %v1778 = vmul.f32 %v416, %v1776
      %v1779 = vmul.f32 %v421, %v1776
      %v1780 = vmul.f32 %v426, %v1776
      %v1781 = vmul.f32 %v431, %v1776
      %v1782 = vmul.f32 %v436, %v1776
      %v1783 = vmul.f32 %v441, %v1776
      %v1784 = vmul.f32 %v446, %v1776
      %v1785 = vmul.f32 %v451, %v1776
      %v1786 = vmul.f32 %v456, %v1776
      %v1787 = vmul.f32 %v461, %v1776
      %v1788 = vmul.f32 %v466, %v1776
      %v1789 = vmul.f32 %v471, %v1776
      %v1790 = vmul.f32 %v476, %v1776
      %v1791 = vmul.f32 %v481, %v1776
      %v1792 = vmul.f32 %v486, %v1776
      %v1793 = vmul.f32 %v491, %v1776
      %v1794 = vmul.f32 %v496, %v1776
      %v1795 = vmul.f32 %v501, %v1776
      %v1796 = vmul.f32 %v506, %v1776
      %v1797 = vmul.f32 %v511, %v1776
      %v1798 = vmul.f32 %v516, %v1776
      %v1799 = vmul.f32 %v521, %v1776
      %v1800 = vmul.f32 %v526, %v1776
      %v1801 = vmul.f32 %v531, %v1776
      %v1802 = vmul.f32 %v536, %v1776
      %v1803 = vmul.f32 %v541, %v1776
      %v1804 = vmul.f32 %v546, %v1776
      %v1805 = vmul.f32 %v1192, %v1776
      %v1806 = vmul.f32 %v1197, %v1776
      %v1807 = vmul.f32 %v1766, %v1776
      %v1808 = vmul.f32 %v1771, %v1776
      %v1809 = vadd.f32 %v1730, %v1777
      %v1810 = vadd.f32 %v1731, %v1778
      %v1811 = vadd.f32 %v1732, %v1779
      %v1812 = vadd.f32 %v1733, %v1780
      %v1813 = vadd.f32 %v1734, %v1781
      %v1814 = vadd.f32 %v1735, %v1782
      %v1815 = vadd.f32 %v1736, %v1783
      %v1816 = vadd.f32 %v1737, %v1784
      %v1817 = vadd.f32 %v1738, %v1785
      %v1818 = vadd.f32 %v1739, %v1786
      %v1819 = vadd.f32 %v1740, %v1787
      %v1820 = vadd.f32 %v1741, %v1788
      %v1821 = vadd.f32 %v1742, %v1789
      %v1822 = vadd.f32 %v1743, %v1790
      %v1823 = vadd.f32 %v1744, %v1791
      %v1824 = vadd.f32 %v1745, %v1792
      %v1825 = vadd.f32 %v1746, %v1793
      %v1826 = vadd.f32 %v1747, %v1794
      %v1827 = vadd.f32 %v1748, %v1795
      %v1828 = vadd.f32 %v1749, %v1796
      %v1829 = vadd.f32 %v1750, %v1797
      %v1830 = vadd.f32 %v1751, %v1798
      %v1831 = vadd.f32 %v1752, %v1799
      %v1832 = vadd.f32 %v1753, %v1800
      %v1833 = vadd.f32 %v1754, %v1801
      %v1834 = vadd.f32 %v1755, %v1802
      %v1835 = vadd.f32 %v1756, %v1803
      %v1836 = vadd.f32 %v1757, %v1804
      %v1837 = vadd.f32 %v1758, %v1805
      %v1838 = vadd.f32 %v1759, %v1806
      %v1839 = vadd.f32 %v1760, %v1807
      %v1840 = vadd.f32 %v1761, %v1808
      %v1841 = vld [vmem:[%s1 + $0x7] sm:$0x1]
      %1843 = vset.pattern.permute.xlu0 0
      %1844 = vperm.xlu0 %1843, %v386
      %v1845 = vpop.permute.xlu0 %1844
      %v1847 = vlaneseq
      %v1848 = vshrl.u32 %v1847, 7
      %v1849 = vsub.s32 0, %v1848
      %v1850 = vrot.slane %v1841, %v1849
      %v1851 = vmul.f32 %v411, %v1850
      %v1852 = vmul.f32 %v416, %v1850
      %v1853 = vmul.f32 %v630, %v1850
      %v1854 = vmul.f32 %v421, %v1850
      %v1855 = vmul.f32 %v426, %v1850
      %v1856 = vmul.f32 %v635, %v1850
      %v1857 = vmul.f32 %v431, %v1850
      %v1858 = vmul.f32 %v436, %v1850
      %v1859 = vmul.f32 %v640, %v1850
      %v1860 = vmul.f32 %v441, %v1850
      %v1861 = vmul.f32 %v446, %v1850
      %v1862 = vmul.f32 %v645, %v1850
      %v1863 = vmul.f32 %v451, %v1850
      %v1864 = vmul.f32 %v456, %v1850
      %v1865 = vmul.f32 %v650, %v1850
      %v1866 = vmul.f32 %v461, %v1850
      %v1867 = vmul.f32 %v466, %v1850
      %v1868 = vmul.f32 %v655, %v1850
      %v1869 = vmul.f32 %v471, %v1850
      %v1870 = vmul.f32 %v476, %v1850
      %v1871 = vmul.f32 %v660, %v1850
      %v1872 = vmul.f32 %v481, %v1850
      %v1873 = vmul.f32 %v486, %v1850
      %v1874 = vmul.f32 %v665, %v1850
      %v1875 = vmul.f32 %v491, %v1850
      %v1876 = vmul.f32 %v496, %v1850
      %v1877 = vmul.f32 %v670, %v1850
      %v1878 = vmul.f32 %v501, %v1850
      %v1879 = vmul.f32 %v506, %v1850
      %v1880 = vmul.f32 %v675, %v1850
      %v1881 = vmul.f32 %v511, %v1850
      %v1882 = vmul.f32 %v516, %v1850
      %v1883 = vmul.f32 %v680, %v1850
      %v1884 = vmul.f32 %v521, %v1850
      %v1885 = vmul.f32 %v526, %v1850
      %v1886 = vmul.f32 %v685, %v1850
      %v1887 = vmul.f32 %v531, %v1850
      %v1888 = vmul.f32 %v536, %v1850
      %v1889 = vmul.f32 %v690, %v1850
      %v1890 = vmul.f32 %v541, %v1850
      %v1891 = vmul.f32 %v546, %v1850
      %v1892 = vmul.f32 %v695, %v1850
      %v1893 = vmul.f32 %v1192, %v1850
      %v1894 = vmul.f32 %v1197, %v1850
      %v1895 = vmul.f32 %v1271, %v1850
      %v1896 = vmul.f32 %v1766, %v1850
      %v1897 = vmul.f32 %v1771, %v1850
      %v1898 = vmul.f32 %v1845, %v1850
      %v1947 = vrot.slane %v1851, 1
      %v1948 = vrot.slane %v1852, 1
      %v1949 = vsel %vm797, %v1947, %v1948
      %v1950 = vrot.slane %v1853, 1
      %v1951 = vsel %vm797, %v1948, %v1950
      %v1952 = vrot.slane %v1854, 1
      %v1953 = vrot.slane %v1855, 1
      %v1954 = vsel %vm797, %v1952, %v1953
      %v1955 = vrot.slane %v1856, 1
      %v1956 = vsel %vm797, %v1953, %v1955
      %v1957 = vrot.slane %v1857, 1
      %v1958 = vrot.slane %v1858, 1
      %v1959 = vsel %vm797, %v1957, %v1958
      %v1960 = vrot.slane %v1859, 1
      %v1961 = vsel %vm797, %v1958, %v1960
      %v1962 = vrot.slane %v1860, 1
      %v1963 = vrot.slane %v1861, 1
      %v1964 = vsel %vm797, %v1962, %v1963
      %v1965 = vrot.slane %v1862, 1
      %v1966 = vsel %vm797, %v1963, %v1965
      %v1967 = vrot.slane %v1863, 1
      %v1968 = vrot.slane %v1864, 1
      %v1969 = vsel %vm797, %v1967, %v1968
      %v1970 = vrot.slane %v1865, 1
      %v1971 = vsel %vm797, %v1968, %v1970
      %v1972 = vrot.slane %v1866, 1
      %v1973 = vrot.slane %v1867, 1
      %v1974 = vsel %vm797, %v1972, %v1973
      %v1975 = vrot.slane %v1868, 1
      %v1976 = vsel %vm797, %v1973, %v1975
      %v1977 = vrot.slane %v1869, 1
      %v1978 = vrot.slane %v1870, 1
      %v1979 = vsel %vm797, %v1977, %v1978
      %v1980 = vrot.slane %v1871, 1
      %v1981 = vsel %vm797, %v1978, %v1980
      %v1982 = vrot.slane %v1872, 1
      %v1983 = vrot.slane %v1873, 1
      %v1984 = vsel %vm797, %v1982, %v1983
      %v1985 = vrot.slane %v1874, 1
      %v1986 = vsel %vm797, %v1983, %v1985
      %v1987 = vrot.slane %v1875, 1
      %v1988 = vrot.slane %v1876, 1
      %v1989 = vsel %vm797, %v1987, %v1988
      %v1990 = vrot.slane %v1877, 1
      %v1991 = vsel %vm797, %v1988, %v1990
      %v1992 = vrot.slane %v1878, 1
      %v1993 = vrot.slane %v1879, 1
      %v1994 = vsel %vm797, %v1992, %v1993
      %v1995 = vrot.slane %v1880, 1
      %v1996 = vsel %vm797, %v1993, %v1995
      %v1997 = vrot.slane %v1881, 1
      %v1998 = vrot.slane %v1882, 1
      %v1999 = vsel %vm797, %v1997, %v1998
      %v2000 = vrot.slane %v1883, 1
      %v2001 = vsel %vm797, %v1998, %v2000
      %v2002 = vrot.slane %v1884, 1
      %v2003 = vrot.slane %v1885, 1
      %v2004 = vsel %vm797, %v2002, %v2003
      %v2005 = vrot.slane %v1886, 1
      %v2006 = vsel %vm797, %v2003, %v2005
      %v2007 = vrot.slane %v1887, 1
      %v2008 = vrot.slane %v1888, 1
      %v2009 = vsel %vm797, %v2007, %v2008
      %v2010 = vrot.slane %v1889, 1
      %v2011 = vsel %vm797, %v2008, %v2010
      %v2012 = vrot.slane %v1890, 1
      %v2013 = vrot.slane %v1891, 1
      %v2014 = vsel %vm797, %v2012, %v2013
      %v2015 = vrot.slane %v1892, 1
      %v2016 = vsel %vm797, %v2013, %v2015
      %v2017 = vrot.slane %v1893, 1
      %v2018 = vrot.slane %v1894, 1
      %v2019 = vsel %vm797, %v2017, %v2018
      %v2020 = vrot.slane %v1895, 1
      %v2021 = vsel %vm797, %v2018, %v2020
      %v2022 = vrot.slane %v1896, 1
      %v2023 = vrot.slane %v1897, 1
      %v2024 = vsel %vm797, %v2022, %v2023
      %v2025 = vrot.slane %v1898, 1
      %v2026 = vsel %vm797, %v2023, %v2025
      %v2059 = vadd.f32 %v1809, %v1949
      %v2060 = vadd.f32 %v1810, %v1951
      %v2061 = vadd.f32 %v1811, %v1954
      %v2062 = vadd.f32 %v1812, %v1956
      %v2063 = vadd.f32 %v1813, %v1959
      %v2064 = vadd.f32 %v1814, %v1961
      %v2065 = vadd.f32 %v1815, %v1964
      %v2066 = vadd.f32 %v1816, %v1966
      %v2067 = vadd.f32 %v1817, %v1969
      %v2068 = vadd.f32 %v1818, %v1971
      %v2069 = vadd.f32 %v1819, %v1974
      %v2070 = vadd.f32 %v1820, %v1976
      %v2071 = vadd.f32 %v1821, %v1979
      %v2072 = vadd.f32 %v1822, %v1981
      %v2073 = vadd.f32 %v1823, %v1984
      %v2074 = vadd.f32 %v1824, %v1986
      %v2075 = vadd.f32 %v1825, %v1989
      %v2076 = vadd.f32 %v1826, %v1991
      %v2077 = vadd.f32 %v1827, %v1994
      %v2078 = vadd.f32 %v1828, %v1996
      %v2079 = vadd.f32 %v1829, %v1999
      %v2080 = vadd.f32 %v1830, %v2001
      %v2081 = vadd.f32 %v1831, %v2004
      %v2082 = vadd.f32 %v1832, %v2006
      %v2083 = vadd.f32 %v1833, %v2009
      %v2084 = vadd.f32 %v1834, %v2011
      %v2085 = vadd.f32 %v1835, %v2014
      %v2086 = vadd.f32 %v1836, %v2016
      %v2087 = vadd.f32 %v1837, %v2019
      %v2088 = vadd.f32 %v1838, %v2021
      %v2089 = vadd.f32 %v1839, %v2024
      %v2090 = vadd.f32 %v1840, %v2026
      %v2091 = vld [vmem:[%s1 + $0x8] sm:$0x1]
      %v2092 = vlaneseq
      %v2093 = vshrl.u32 %v2092, 7
      %v2094 = vsub.s32 0, %v2093
      %v2095 = vrot.slane %v2091, %v2094
      %v2096 = vmul.f32 %v411, %v2095
      %v2097 = vmul.f32 %v416, %v2095
      %v2098 = vmul.f32 %v630, %v2095
      %v2099 = vmul.f32 %v421, %v2095
      %v2100 = vmul.f32 %v426, %v2095
      %v2101 = vmul.f32 %v635, %v2095
      %v2102 = vmul.f32 %v431, %v2095
      %v2103 = vmul.f32 %v436, %v2095
      %v2104 = vmul.f32 %v640, %v2095
      %v2105 = vmul.f32 %v441, %v2095
      %v2106 = vmul.f32 %v446, %v2095
      %v2107 = vmul.f32 %v645, %v2095
      %v2108 = vmul.f32 %v451, %v2095
      %v2109 = vmul.f32 %v456, %v2095
      %v2110 = vmul.f32 %v650, %v2095
      %v2111 = vmul.f32 %v461, %v2095
      %v2112 = vmul.f32 %v466, %v2095
      %v2113 = vmul.f32 %v655, %v2095
      %v2114 = vmul.f32 %v471, %v2095
      %v2115 = vmul.f32 %v476, %v2095
      %v2116 = vmul.f32 %v660, %v2095
      %v2117 = vmul.f32 %v481, %v2095
      %v2118 = vmul.f32 %v486, %v2095
      %v2119 = vmul.f32 %v665, %v2095
      %v2120 = vmul.f32 %v491, %v2095
      %v2121 = vmul.f32 %v496, %v2095
      %v2122 = vmul.f32 %v670, %v2095
      %v2123 = vmul.f32 %v501, %v2095
      %v2124 = vmul.f32 %v506, %v2095
      %v2125 = vmul.f32 %v675, %v2095
      %v2126 = vmul.f32 %v511, %v2095
      %v2127 = vmul.f32 %v516, %v2095
      %v2128 = vmul.f32 %v680, %v2095
      %v2129 = vmul.f32 %v521, %v2095
      %v2130 = vmul.f32 %v526, %v2095
      %v2131 = vmul.f32 %v685, %v2095
      %v2132 = vmul.f32 %v531, %v2095
      %v2133 = vmul.f32 %v536, %v2095
      %v2134 = vmul.f32 %v690, %v2095
      %v2135 = vmul.f32 %v541, %v2095
      %v2136 = vmul.f32 %v546, %v2095
      %v2137 = vmul.f32 %v695, %v2095
      %v2138 = vmul.f32 %v1192, %v2095
      %v2139 = vmul.f32 %v1197, %v2095
      %v2140 = vmul.f32 %v1271, %v2095
      %v2141 = vmul.f32 %v1766, %v2095
      %v2142 = vmul.f32 %v1771, %v2095
      %v2143 = vmul.f32 %v1845, %v2095
      %v2192 = vrot.slane %v2096, 2
      %v2193 = vrot.slane %v2097, 2
      %v2194 = vsel %vm1043, %v2192, %v2193
      %v2195 = vrot.slane %v2098, 2
      %v2196 = vsel %vm1043, %v2193, %v2195
      %v2197 = vrot.slane %v2099, 2
      %v2198 = vrot.slane %v2100, 2
      %v2199 = vsel %vm1043, %v2197, %v2198
      %v2200 = vrot.slane %v2101, 2
      %v2201 = vsel %vm1043, %v2198, %v2200
      %v2202 = vrot.slane %v2102, 2
      %v2203 = vrot.slane %v2103, 2
      %v2204 = vsel %vm1043, %v2202, %v2203
      %v2205 = vrot.slane %v2104, 2
      %v2206 = vsel %vm1043, %v2203, %v2205
      %v2207 = vrot.slane %v2105, 2
      %v2208 = vrot.slane %v2106, 2
      %v2209 = vsel %vm1043, %v2207, %v2208
      %v2210 = vrot.slane %v2107, 2
      %v2211 = vsel %vm1043, %v2208, %v2210
      %v2212 = vrot.slane %v2108, 2
      %v2213 = vrot.slane %v2109, 2
      %v2214 = vsel %vm1043, %v2212, %v2213
      %v2215 = vrot.slane %v2110, 2
      %v2216 = vsel %vm1043, %v2213, %v2215
      %v2217 = vrot.slane %v2111, 2
      %v2218 = vrot.slane %v2112, 2
      %v2219 = vsel %vm1043, %v2217, %v2218
      %v2220 = vrot.slane %v2113, 2
      %v2221 = vsel %vm1043, %v2218, %v2220
      %v2222 = vrot.slane %v2114, 2
      %v2223 = vrot.slane %v2115, 2
      %v2224 = vsel %vm1043, %v2222, %v2223
      %v2225 = vrot.slane %v2116, 2
      %v2226 = vsel %vm1043, %v2223, %v2225
      %v2227 = vrot.slane %v2117, 2
      %v2228 = vrot.slane %v2118, 2
      %v2229 = vsel %vm1043, %v2227, %v2228
      %v2230 = vrot.slane %v2119, 2
      %v2231 = vsel %vm1043, %v2228, %v2230
      %v2232 = vrot.slane %v2120, 2
      %v2233 = vrot.slane %v2121, 2
      %v2234 = vsel %vm1043, %v2232, %v2233
      %v2235 = vrot.slane %v2122, 2
      %v2236 = vsel %vm1043, %v2233, %v2235
      %v2237 = vrot.slane %v2123, 2
      %v2238 = vrot.slane %v2124, 2
      %v2239 = vsel %vm1043, %v2237, %v2238
      %v2240 = vrot.slane %v2125, 2
      %v2241 = vsel %vm1043, %v2238, %v2240
      %v2242 = vrot.slane %v2126, 2
      %v2243 = vrot.slane %v2127, 2
      %v2244 = vsel %vm1043, %v2242, %v2243
      %v2245 = vrot.slane %v2128, 2
      %v2246 = vsel %vm1043, %v2243, %v2245
      %v2247 = vrot.slane %v2129, 2
      %v2248 = vrot.slane %v2130, 2
      %v2249 = vsel %vm1043, %v2247, %v2248
      %v2250 = vrot.slane %v2131, 2
      %v2251 = vsel %vm1043, %v2248, %v2250
      %v2252 = vrot.slane %v2132, 2
      %v2253 = vrot.slane %v2133, 2
      %v2254 = vsel %vm1043, %v2252, %v2253
      %v2255 = vrot.slane %v2134, 2
      %v2256 = vsel %vm1043, %v2253, %v2255
      %v2257 = vrot.slane %v2135, 2
      %v2258 = vrot.slane %v2136, 2
      %v2259 = vsel %vm1043, %v2257, %v2258
      %v2260 = vrot.slane %v2137, 2
      %v2261 = vsel %vm1043, %v2258, %v2260
      %v2262 = vrot.slane %v2138, 2
      %v2263 = vrot.slane %v2139, 2
      %v2264 = vsel %vm1043, %v2262, %v2263
      %v2265 = vrot.slane %v2140, 2
      %v2266 = vsel %vm1043, %v2263, %v2265
      %v2267 = vrot.slane %v2141, 2
      %v2268 = vrot.slane %v2142, 2
      %v2269 = vsel %vm1043, %v2267, %v2268
      %v2270 = vrot.slane %v2143, 2
      %v2271 = vsel %vm1043, %v2268, %v2270
      %v2304 = vadd.f32 %v2059, %v2194
      %v2305 = vadd.f32 %v2060, %v2196
      %v2306 = vadd.f32 %v2061, %v2199
      %v2307 = vadd.f32 %v2062, %v2201
      %v2308 = vadd.f32 %v2063, %v2204
      %v2309 = vadd.f32 %v2064, %v2206
      %v2310 = vadd.f32 %v2065, %v2209
      %v2311 = vadd.f32 %v2066, %v2211
      %v2312 = vadd.f32 %v2067, %v2214
      %v2313 = vadd.f32 %v2068, %v2216
      %v2314 = vadd.f32 %v2069, %v2219
      %v2315 = vadd.f32 %v2070, %v2221
      %v2316 = vadd.f32 %v2071, %v2224
      %v2317 = vadd.f32 %v2072, %v2226
      %v2318 = vadd.f32 %v2073, %v2229
      %v2319 = vadd.f32 %v2074, %v2231
      %v2320 = vadd.f32 %v2075, %v2234
      %v2321 = vadd.f32 %v2076, %v2236
      %v2322 = vadd.f32 %v2077, %v2239
      %v2323 = vadd.f32 %v2078, %v2241
      %v2324 = vadd.f32 %v2079, %v2244
      %v2325 = vadd.f32 %v2080, %v2246
      %v2326 = vadd.f32 %v2081, %v2249
      %v2327 = vadd.f32 %v2082, %v2251
      %v2328 = vadd.f32 %v2083, %v2254
      %v2329 = vadd.f32 %v2084, %v2256
      %v2330 = vadd.f32 %v2085, %v2259
      %v2331 = vadd.f32 %v2086, %v2261
      %v2332 = vadd.f32 %v2087, %v2264
      %v2333 = vadd.f32 %v2088, %v2266
      %v2334 = vadd.f32 %v2089, %v2269
      %v2335 = vadd.f32 %v2090, %v2271
      %v2336 = vld [vmem:[%s2] sm:$0x1]
      %v2338 = vlaneseq
      %v2339 = vshrl.u32 %v2338, 7
      %v2340 = vsub.s32 0, %v2339
      %v2341 = vrot.slane %v2336, %v2340
      %v2343 = vadd.f32 %v2304, %v2341
      %v2344 = vadd.f32 %v2305, %v2341
      %v2345 = vadd.f32 %v2306, %v2341
      %v2346 = vadd.f32 %v2307, %v2341
      %v2347 = vadd.f32 %v2308, %v2341
      %v2348 = vadd.f32 %v2309, %v2341
      %v2349 = vadd.f32 %v2310, %v2341
      %v2350 = vadd.f32 %v2311, %v2341
      %v2351 = vadd.f32 %v2312, %v2341
      %v2352 = vadd.f32 %v2313, %v2341
      %v2353 = vadd.f32 %v2314, %v2341
      %v2354 = vadd.f32 %v2315, %v2341
      %v2355 = vadd.f32 %v2316, %v2341
      %v2356 = vadd.f32 %v2317, %v2341
      %v2357 = vadd.f32 %v2318, %v2341
      %v2358 = vadd.f32 %v2319, %v2341
      %v2359 = vadd.f32 %v2320, %v2341
      %v2360 = vadd.f32 %v2321, %v2341
      %v2361 = vadd.f32 %v2322, %v2341
      %v2362 = vadd.f32 %v2323, %v2341
      %v2363 = vadd.f32 %v2324, %v2341
      %v2364 = vadd.f32 %v2325, %v2341
      %v2365 = vadd.f32 %v2326, %v2341
      %v2366 = vadd.f32 %v2327, %v2341
      %v2367 = vadd.f32 %v2328, %v2341
      %v2368 = vadd.f32 %v2329, %v2341
      %v2369 = vadd.f32 %v2330, %v2341
      %v2370 = vadd.f32 %v2331, %v2341
      %v2371 = vadd.f32 %v2332, %v2341
      %v2372 = vadd.f32 %v2333, %v2341
      %v2373 = vadd.f32 %v2334, %v2341
      %v2374 = vadd.f32 %v2335, %v2341
      %v2375 = vmax.f32 %v2343, 0.0
      %v2376 = vmax.f32 %v2344, 0.0
      %v2377 = vmax.f32 %v2345, 0.0
      %v2378 = vmax.f32 %v2346, 0.0
      %v2379 = vmax.f32 %v2347, 0.0
      %v2380 = vmax.f32 %v2348, 0.0
      %v2381 = vmax.f32 %v2349, 0.0
      %v2382 = vmax.f32 %v2350, 0.0
      %v2383 = vmax.f32 %v2351, 0.0
      %v2384 = vmax.f32 %v2352, 0.0
      %v2385 = vmax.f32 %v2353, 0.0
      %v2386 = vmax.f32 %v2354, 0.0
      %v2387 = vmax.f32 %v2355, 0.0
      %v2388 = vmax.f32 %v2356, 0.0
      %v2389 = vmax.f32 %v2357, 0.0
      %v2390 = vmax.f32 %v2358, 0.0
      %v2391 = vmax.f32 %v2359, 0.0
      %v2392 = vmax.f32 %v2360, 0.0
      %v2393 = vmax.f32 %v2361, 0.0
      %v2394 = vmax.f32 %v2362, 0.0
      %v2395 = vmax.f32 %v2363, 0.0
      %v2396 = vmax.f32 %v2364, 0.0
      %v2397 = vmax.f32 %v2365, 0.0
      %v2398 = vmax.f32 %v2366, 0.0
      %v2399 = vmax.f32 %v2367, 0.0
      %v2400 = vmax.f32 %v2368, 0.0
      %v2401 = vmax.f32 %v2369, 0.0
      %v2402 = vmax.f32 %v2370, 0.0
      %v2403 = vmax.f32 %v2371, 0.0
      %v2404 = vmax.f32 %v2372, 0.0
      %v2405 = vmax.f32 %v2373, 0.0
      %v2406 = vmax.f32 %v2374, 0.0
      %v2407 = vmax.f32 %v2375, %v2377
      %v2408 = vmax.f32 %v2376, %v2378
      %v2409 = vmax.f32 %v2379, %v2381
      %v2410 = vmax.f32 %v2380, %v2382
      %v2411 = vmax.f32 %v2383, %v2385
      %v2412 = vmax.f32 %v2384, %v2386
      %v2413 = vmax.f32 %v2387, %v2389
      %v2414 = vmax.f32 %v2388, %v2390
      %v2415 = vmax.f32 %v2391, %v2393
      %v2416 = vmax.f32 %v2392, %v2394
      %v2417 = vmax.f32 %v2395, %v2397
      %v2418 = vmax.f32 %v2396, %v2398
      %v2419 = vmax.f32 %v2399, %v2401
      %v2420 = vmax.f32 %v2400, %v2402
      %v2421 = vmax.f32 %v2403, %v2405
      %v2422 = vmax.f32 %v2404, %v2406
      %v2439 = vrot.slane %v2407, 1
      %v2440 = vrot.slane %v2408, 1
      %v2441 = vsel %vm797, %v2439, %v2440
      %v2442 = vrot.slane %v2409, 1
      %v2443 = vrot.slane %v2410, 1
      %v2444 = vsel %vm797, %v2442, %v2443
      %v2445 = vrot.slane %v2411, 1
      %v2446 = vrot.slane %v2412, 1
      %v2447 = vsel %vm797, %v2445, %v2446
      %v2448 = vrot.slane %v2413, 1
      %v2449 = vrot.slane %v2414, 1
      %v2450 = vsel %vm797, %v2448, %v2449
      %v2451 = vrot.slane %v2415, 1
      %v2452 = vrot.slane %v2416, 1
      %v2453 = vsel %vm797, %v2451, %v2452
      %v2454 = vrot.slane %v2417, 1
      %v2455 = vrot.slane %v2418, 1
      %v2456 = vsel %vm797, %v2454, %v2455
      %v2457 = vrot.slane %v2419, 1
      %v2458 = vrot.slane %v2420, 1
      %v2459 = vsel %vm797, %v2457, %v2458
      %v2460 = vrot.slane %v2421, 1
      %v2461 = vrot.slane %v2422, 1
      %v2462 = vsel %vm797, %v2460, %v2461
      %v2479 = vmax.f32 %v2407, %v2441
      %v2480 = vmax.f32 %v2408, %v2440
      %v2481 = vmax.f32 %v2409, %v2444
      %v2482 = vmax.f32 %v2410, %v2443
      %v2483 = vmax.f32 %v2411, %v2447
      %v2484 = vmax.f32 %v2412, %v2446
      %v2485 = vmax.f32 %v2413, %v2450
      %v2486 = vmax.f32 %v2414, %v2449
      %v2487 = vmax.f32 %v2415, %v2453
      %v2488 = vmax.f32 %v2416, %v2452
      %v2489 = vmax.f32 %v2417, %v2456
      %v2490 = vmax.f32 %v2418, %v2455
      %v2491 = vmax.f32 %v2419, %v2459
      %v2492 = vmax.f32 %v2420, %v2458
      %v2493 = vmax.f32 %v2421, %v2462
      %v2494 = vmax.f32 %v2422, %v2461
      %vm2495 = vcmask 130048
      %2496 = vst.msk [vmem:[#allocation2] sm:$0xff] %vm2495, 0.0
      %2497 = vst.msk [vmem:[#allocation2 + $0x8] sm:$0xff] %vm2495, 0.0
      %vm2498 = vcmask 125952
      %2499 = vst.msk [vmem:[#allocation2 + $0x10] sm:$0xf] %vm2498, 0.0
      %2500 = vst.msk [vmem:[#allocation2 + $0x18] sm:$0xff] %vm2495, 0.0
      %2501 = vst.msk [vmem:[#allocation2 + $0x20] sm:$0xff] %vm2495, 0.0
      %2502 = vst.msk [vmem:[#allocation2 + $0x28] sm:$0xf] %vm2498, 0.0
      %2503 = vst.msk [vmem:[#allocation2 + $0x30] sm:$0xff] %vm2495, 0.0
      %2504 = vst.msk [vmem:[#allocation2 + $0x38] sm:$0xff] %vm2495, 0.0
      %2505 = vst.msk [vmem:[#allocation2 + $0x40] sm:$0xf] %vm2498, 0.0
      %2506 = vst.msk [vmem:[#allocation2 + $0x48] sm:$0xff] %vm2495, 0.0
      %2507 = vst.msk [vmem:[#allocation2 + $0x50] sm:$0xff] %vm2495, 0.0
      %2508 = vst.msk [vmem:[#allocation2 + $0x58] sm:$0xf] %vm2498, 0.0
      %2509 = vst.msk [vmem:[#allocation2 + $0x60] sm:$0xff] %vm2495, 0.0
      %2510 = vst.msk [vmem:[#allocation2 + $0x68] sm:$0xff] %vm2495, 0.0
      %2511 = vst.msk [vmem:[#allocation2 + $0x70] sm:$0xf] %vm2498, 0.0
      %2512 = vst.msk [vmem:[#allocation2 + $0x78] sm:$0xff] %vm2495, 0.0
      %2513 = vst.msk [vmem:[#allocation2 + $0x80] sm:$0xff] %vm2495, 0.0
      %2514 = vst.msk [vmem:[#allocation2 + $0x88] sm:$0xf] %vm2498, 0.0
      %2515 = vst.msk [vmem:[#allocation2 + $0x90] sm:$0xff] %vm2495, 0.0
      %2516 = vst.msk [vmem:[#allocation2 + $0x98] sm:$0xff] %vm2495, 0.0
      %2517 = vst.msk [vmem:[#allocation2 + $0xa0] sm:$0xf] %vm2498, 0.0
      %2518 = vst.msk [vmem:[#allocation2 + $0xa8] sm:$0xff] %vm2495, 0.0
      %2519 = vst.msk [vmem:[#allocation2 + $0xb0] sm:$0xff] %vm2495, 0.0
      %2520 = vst.msk [vmem:[#allocation2 + $0xb8] sm:$0xf] %vm2498, 0.0
      %2521 = vst.msk [vmem:[#allocation2 + $0xc0] sm:$0xff] %vm2495, 0.0
      %2522 = vst.msk [vmem:[#allocation2 + $0xc8] sm:$0xff] %vm2495, 0.0
      %2523 = vst.msk [vmem:[#allocation2 + $0xd0] sm:$0xf] %vm2498, 0.0
      %2524 = vst.msk [vmem:[#allocation2 + $0xd8] sm:$0xff] %vm2495, 0.0
      %2525 = vst.msk [vmem:[#allocation2 + $0xe0] sm:$0xff] %vm2495, 0.0
      %2526 = vst.msk [vmem:[#allocation2 + $0xe8] sm:$0xf] %vm2498, 0.0
      %s2527 = scalar_lea.vmem [#allocation2], 24
      %2528 = vst.msk [vmem:[%s2527 + $0x2] sm:$0xff] %vm2495, %v2479
      %vm2529 = vcmask 129024
      %2530 = vst.msk [vmem:[%s2527 + $0xa] sm:$0x7f] %vm2529, %v2480
      %2531 = vst.msk [vmem:[%s2527 + $0x1a] sm:$0xff] %vm2495, %v2481
      %2532 = vst.msk [vmem:[%s2527 + $0x22] sm:$0x7f] %vm2529, %v2482
      %2533 = vst.msk [vmem:[%s2527 + $0x32] sm:$0xff] %vm2495, %v2483
      %2534 = vst.msk [vmem:[%s2527 + $0x3a] sm:$0x7f] %vm2529, %v2484
      %2535 = vst.msk [vmem:[%s2527 + $0x4a] sm:$0xff] %vm2495, %v2485
      %2536 = vst.msk [vmem:[%s2527 + $0x52] sm:$0x7f] %vm2529, %v2486
      %2537 = vst.msk [vmem:[%s2527 + $0x62] sm:$0xff] %vm2495, %v2487
      %2538 = vst.msk [vmem:[%s2527 + $0x6a] sm:$0x7f] %vm2529, %v2488
      %2539 = vst.msk [vmem:[%s2527 + $0x7a] sm:$0xff] %vm2495, %v2489
      %2540 = vst.msk [vmem:[%s2527 + $0x82] sm:$0x7f] %vm2529, %v2490
      %2541 = vst.msk [vmem:[%s2527 + $0x92] sm:$0xff] %vm2495, %v2491
      %2542 = vst.msk [vmem:[%s2527 + $0x9a] sm:$0x7f] %vm2529, %v2492
      %2543 = vst.msk [vmem:[%s2527 + $0xaa] sm:$0xff] %vm2495, %v2493
      %2544 = vst.msk [vmem:[%s2527 + $0xb2] sm:$0x7f] %vm2529, %v2494
      %v2545 = vld [vmem:[#allocation2] sm:$0xff]
      %v2546 = vld [vmem:[#allocation2 + $0x8] sm:$0xff]
      %v2547 = vld [vmem:[#allocation2 + $0x18] sm:$0xff]
      %v2548 = vld [vmem:[#allocation2 + $0x20] sm:$0xff]
      %v2549 = vld [vmem:[#allocation2 + $0x30] sm:$0xff]
      %v2550 = vld [vmem:[#allocation2 + $0x38] sm:$0xff]
      %v2551 = vld [vmem:[#allocation2 + $0x48] sm:$0xff]
      %v2552 = vld [vmem:[#allocation2 + $0x50] sm:$0xff]
      %v2553 = vld [vmem:[#allocation2 + $0x60] sm:$0xff]
      %v2554 = vld [vmem:[#allocation2 + $0x68] sm:$0xff]
      %v2555 = vld [vmem:[#allocation2 + $0x78] sm:$0xff]
      %v2556 = vld [vmem:[#allocation2 + $0x80] sm:$0xff]
      %v2557 = vld [vmem:[#allocation2 + $0x90] sm:$0xff]
      %v2558 = vld [vmem:[#allocation2 + $0x98] sm:$0xff]
      %v2559 = vld [vmem:[#allocation2 + $0xa8] sm:$0xff]
      %v2560 = vld [vmem:[#allocation2 + $0xb0] sm:$0xff]
      %v2561 = vld [vmem:[%s3] sm:$0xff]
      %v2562 = vld [vmem:[%s3 + $0x8] sm:$0xff]
      %v2563 = vld [vmem:[#allocation2 + $0x2] sm:$0xff]
      %v2564 = vld [vmem:[#allocation2 + $0xa] sm:$0xff]
      %v2565 = vld [vmem:[#allocation2 + $0x1a] sm:$0xff]
      %v2566 = vld [vmem:[#allocation2 + $0x22] sm:$0xff]
      %v2567 = vld [vmem:[#allocation2 + $0x32] sm:$0xff]
      %v2568 = vld [vmem:[#allocation2 + $0x3a] sm:$0xff]
      %v2569 = vld [vmem:[#allocation2 + $0x4a] sm:$0xff]
      %v2570 = vld [vmem:[#allocation2 + $0x52] sm:$0xff]
      %v2571 = vld [vmem:[#allocation2 + $0x62] sm:$0xff]
      %v2572 = vld [vmem:[#allocation2 + $0x6a] sm:$0xff]
      %v2573 = vld [vmem:[#allocation2 + $0x7a] sm:$0xff]
      %v2574 = vld [vmem:[#allocation2 + $0x82] sm:$0xff]
      %v2575 = vld [vmem:[#allocation2 + $0x92] sm:$0xff]
      %v2576 = vld [vmem:[#allocation2 + $0x9a] sm:$0xff]
      %v2577 = vld [vmem:[#allocation2 + $0xaa] sm:$0xff]
      %v2578 = vld [vmem:[#allocation2 + $0xb2] sm:$0xff]
      %s2579 = scalar_lea.vmem %s3, 16
      %v2580 = vld [vmem:[%s2579] sm:$0xff]
      %v2581 = vld [vmem:[%s2579 + $0x8] sm:$0xff]
      %v2583 = vsel %vm2495, %v2563, 0
      %v2586 = vsel %vm2495, %v2564, 0
      %v2589 = vsel %vm2495, %v2565, 0
      %v2592 = vsel %vm2495, %v2566, 0
      %v2595 = vsel %vm2495, %v2567, 0
      %v2598 = vsel %vm2495, %v2568, 0
      %v2601 = vsel %vm2495, %v2569, 0
      %v2604 = vsel %vm2495, %v2570, 0
      %v2607 = vsel %vm2495, %v2571, 0
      %v2610 = vsel %vm2495, %v2572, 0
      %v2613 = vsel %vm2495, %v2573, 0
      %v2616 = vsel %vm2495, %v2574, 0
      %v2619 = vsel %vm2495, %v2575, 0
      %v2622 = vsel %vm2495, %v2576, 0
      %v2625 = vsel %vm2495, %v2577, 0
      %v2628 = vsel %vm2495, %v2578, 0
      %2630 = vmatprep.subr.mxu0 0.0
      %2631 = vmatpush1.msra.mxu0 %v2580
      %2632 = vmatprep.subr.mxu0 0.0
      %2633 = vmatpush1.msra.mxu0 %v2581
      %2634 = vmatprep.subr.mxu0 0.0
      %2635 = vmatpush1.msra.mxu0 0.0
      %2636 = vmatprep.subr.mxu0 0.0
      %2637 = vmatpush1.msra.mxu0 0.0
      %2638 = vmatprep.subr.mxu0 0.0
      %2639 = vmatpush1.msra.mxu0 0.0
      %2640 = vmatprep.subr.mxu0 0.0
      %2641 = vmatpush1.msra.mxu0 0.0
      %2642 = vmatprep.subr.mxu0 0.0
      %2643 = vmatpush1.msra.mxu0 0.0
      %2644 = vmatprep.subr.mxu0 0.0
      %2645 = vmatpush1.msra.mxu0 0.0
      %2646 = vmatprep.subr.mxu0 0.0
      %2647 = vmatpush1.msra.mxu0 0.0
      %2648 = vmatprep.subr.mxu0 0.0
      %2649 = vmatpush1.msra.mxu0 0.0
      %2650 = vmatprep.subr.mxu0 0.0
      %2651 = vmatpush1.msra.mxu0 0.0
      %2652 = vmatprep.subr.mxu0 0.0
      %2653 = vmatpush1.msra.mxu0 0.0
      %2654 = vmatprep.subr.mxu0 0.0
      %2655 = vmatpush1.msra.mxu0 0.0
      %2656 = vmatprep.subr.mxu0 0.0
      %2657 = vmatpush1.msra.mxu0 0.0
      %2658 = vmatprep.subr.mxu0 0.0
      %2659 = vmatpush1.msra.mxu0 0.0
      %2660 = vmatprep.subr.mxu0 0.0
      %2661 = vmatpush1.msra.mxu0 0.0
      %2662 = vmatprep.subr.mxu0 0.0
      %2663 = vmatpush1.msra.mxu0 0.0
      %2664 = vmatprep.subr.mxu0 0.0
      %2665 = vmatpush1.msra.mxu0 0.0
      %2666 = vmatprep.subr.mxu0 0.0
      %2667 = vmatpush1.msra.mxu0 0.0
      %2668 = vmatprep.subr.mxu0 0.0
      %2669 = vmatpush1.msra.mxu0 0.0
      %2670 = vmatprep.subr.mxu0 0.0
      %2671 = vmatpush1.msra.mxu0 0.0
      %2672 = vmatprep.subr.mxu0 0.0
      %2673 = vmatpush1.msra.mxu0 0.0
      %2674 = vmatprep.subr.mxu0 0.0
      %2675 = vmatpush1.msra.mxu0 0.0
      %2676 = vmatprep.subr.mxu0 0.0
      %2677 = vmatpush1.msra.mxu0 0.0
      %2678 = vmatprep.subr.mxu0 0.0
      %2679 = vmatpush1.msra.mxu0 0.0
      %2680 = vmatprep.subr.mxu0 0.0
      %2681 = vmatpush1.msra.mxu0 0.0
      %2682 = vmatprep.subr.mxu0 0.0
      %2683 = vmatpush1.msra.mxu0 0.0
      %2684 = vmatprep.subr.mxu0 0.0
      %2685 = vmatpush1.msra.mxu0 0.0
      %2686 = vmatprep.subr.mxu0 0.0
      %2687 = vmatpush1.msra.mxu0 0.0
      %2688 = vmatprep.subr.mxu0 0.0
      %2689 = vmatpush1.msra.mxu0 0.0
      %2690 = vmatprep.subr.mxu0 0.0
      %2691 = vmatpush1.msra.mxu0 0.0
      %2692 = vmatprep.subr.mxu0 0.0
      %2693 = vmatpush1.msra.mxu0 0.0
      %2694 = vmatprep.mubr.f32.mxu0 0.0
      %2695 = vmatmul.mubr.f32.gmra.mrb[0].mxu0 %v2583
      %v2696 = vpop.f32.mrb[0].mxu0
      %v2697 = vadd.f32 0.0, %v2696
      %v2698 = vpop.f32.mrb[0].mxu0
      %2699 = vmatprep.mubr.f32.mxu0 0.0
      %2700 = vmatmul.mubr.f32.gmra.mrb[0].mxu0 %v2586
      %v2701 = vpop.f32.mrb[0].mxu0
      %v2702 = vadd.f32 0.0, %v2701
      %v2703 = vpop.f32.mrb[0].mxu0
      %2704 = vmatprep.mubr.f32.mxu0 0.0
      %2705 = vmatmul.mubr.f32.gmra.mrb[0].mxu0 %v2589
      %v2706 = vpop.f32.mrb[0].mxu0
      %v2707 = vadd.f32 0.0, %v2706
      %v2708 = vpop.f32.mrb[0].mxu0
      %2709 = vmatprep.mubr.f32.mxu0 0.0
      %2710 = vmatmul.mubr.f32.gmra.mrb[0].mxu0 %v2592
      %v2711 = vpop.f32.mrb[0].mxu0
      %v2712 = vadd.f32 0.0, %v2711
      %v2713 = vpop.f32.mrb[0].mxu0
      %2714 = vmatprep.mubr.f32.mxu0 0.0
      %2715 = vmatmul.mubr.f32.gmra.mrb[0].mxu0 %v2595
      %v2716 = vpop.f32.mrb[0].mxu0
      %v2717 = vadd.f32 0.0, %v2716
      %v2718 = vpop.f32.mrb[0].mxu0
      %2719 = vmatprep.mubr.f32.mxu0 0.0
      %2720 = vmatmul.mubr.f32.gmra.mrb[0].mxu0 %v2598
      %v2721 = vpop.f32.mrb[0].mxu0
      %v2722 = vadd.f32 0.0, %v2721
      %v2723 = vpop.f32.mrb[0].mxu0
      %2724 = vmatprep.mubr.f32.mxu0 0.0
      %2725 = vmatmul.mubr.f32.gmra.mrb[0].mxu0 %v2601
      %v2726 = vpop.f32.mrb[0].mxu0
      %v2727 = vadd.f32 0.0, %v2726
      %v2728 = vpop.f32.mrb[0].mxu0
      %2729 = vmatprep.mubr.f32.mxu0 0.0
      %2730 = vmatmul.mubr.f32.gmra.mrb[0].mxu0 %v2604
      %v2731 = vpop.f32.mrb[0].mxu0
      %v2732 = vadd.f32 0.0, %v2731
      %v2733 = vpop.f32.mrb[0].mxu0
      %2734 = vmatprep.mubr.f32.mxu0 0.0
      %2735 = vmatmul.mubr.f32.gmra.mrb[0].mxu0 %v2607
      %v2736 = vpop.f32.mrb[0].mxu0
      %v2737 = vadd.f32 0.0, %v2736
      %v2738 = vpop.f32.mrb[0].mxu0
      %2739 = vmatprep.mubr.f32.mxu0 0.0
      %2740 = vmatmul.mubr.f32.gmra.mrb[0].mxu0 %v2610
      %v2741 = vpop.f32.mrb[0].mxu0
      %v2742 = vadd.f32 0.0, %v2741
      %v2743 = vpop.f32.mrb[0].mxu0
      %2744 = vmatprep.mubr.f32.mxu0 0.0
      %2745 = vmatmul.mubr.f32.gmra.mrb[0].mxu0 %v2613
      %v2746 = vpop.f32.mrb[0].mxu0
      %v2747 = vadd.f32 0.0, %v2746
      %v2748 = vpop.f32.mrb[0].mxu0
      %2749 = vmatprep.mubr.f32.mxu0 0.0
      %2750 = vmatmul.mubr.f32.gmra.mrb[0].mxu0 %v2616
      %v2751 = vpop.f32.mrb[0].mxu0
      %v2752 = vadd.f32 0.0, %v2751
      %v2753 = vpop.f32.mrb[0].mxu0
      %2754 = vmatprep.mubr.f32.mxu0 0.0
      %2755 = vmatmul.mubr.f32.gmra.mrb[0].mxu0 %v2619
      %v2756 = vpop.f32.mrb[0].mxu0
      %v2757 = vadd.f32 0.0, %v2756
      %v2758 = vpop.f32.mrb[0].mxu0
      %2759 = vmatprep.mubr.f32.mxu0 0.0
      %2760 = vmatmul.mubr.f32.gmra.mrb[0].mxu0 %v2622
      %v2761 = vpop.f32.mrb[0].mxu0
      %v2762 = vadd.f32 0.0, %v2761
      %v2763 = vpop.f32.mrb[0].mxu0
      %2764 = vmatprep.mubr.f32.mxu0 0.0
      %2765 = vmatmul.mubr.f32.gmra.mrb[0].mxu0 %v2625
      %v2766 = vpop.f32.mrb[0].mxu0
      %v2767 = vadd.f32 0.0, %v2766
      %v2768 = vpop.f32.mrb[0].mxu0
      %2769 = vmatprep.mubr.f32.mxu0 0.0
      %2770 = vmatmul.mubr.f32.gmra.mrb[0].mxu0 %v2628
      %v2771 = vpop.f32.mrb[0].mxu0
      %v2772 = vadd.f32 0.0, %v2771
      %v2773 = vpop.f32.mrb[0].mxu0
      %2774 = vdwg.mxu0
      %v2776 = vsel %vm2495, %v2545, 0
      %v2779 = vsel %vm2495, %v2546, 0
      %v2782 = vsel %vm2495, %v2547, 0
      %v2785 = vsel %vm2495, %v2548, 0
      %v2788 = vsel %vm2495, %v2549, 0
      %v2791 = vsel %vm2495, %v2550, 0
      %v2794 = vsel %vm2495, %v2551, 0
      %v2797 = vsel %vm2495, %v2552, 0
      %v2800 = vsel %vm2495, %v2553, 0
      %v2803 = vsel %vm2495, %v2554, 0
      %v2806 = vsel %vm2495, %v2555, 0
      %v2809 = vsel %vm2495, %v2556, 0
      %v2812 = vsel %vm2495, %v2557, 0
      %v2815 = vsel %vm2495, %v2558, 0
      %v2818 = vsel %vm2495, %v2559, 0
      %v2821 = vsel %vm2495, %v2560, 0
      %2823 = vmatprep.subr.mxu0 0.0
      %2824 = vmatpush1.msra.mxu0 %v2561
      %2825 = vmatprep.subr.mxu0 0.0
      %2826 = vmatpush1.msra.mxu0 %v2562
      %2827 = vmatprep.subr.mxu0 0.0
      %2828 = vmatpush1.msra.mxu0 0.0
      %2829 = vmatprep.subr.mxu0 0.0
      %2830 = vmatpush1.msra.mxu0 0.0
      %2831 = vmatprep.subr.mxu0 0.0
      %2832 = vmatpush1.msra.mxu0 0.0
      %2833 = vmatprep.subr.mxu0 0.0
      %2834 = vmatpush1.msra.mxu0 0.0
      %2835 = vmatprep.subr.mxu0 0.0
      %2836 = vmatpush1.msra.mxu0 0.0
      %2837 = vmatprep.subr.mxu0 0.0
      %2838 = vmatpush1.msra.mxu0 0.0
      %2839 = vmatprep.subr.mxu0 0.0
      %2840 = vmatpush1.msra.mxu0 0.0
      %2841 = vmatprep.subr.mxu0 0.0
      %2842 = vmatpush1.msra.mxu0 0.0
      %2843 = vmatprep.subr.mxu0 0.0
      %2844 = vmatpush1.msra.mxu0 0.0
      %2845 = vmatprep.subr.mxu0 0.0
      %2846 = vmatpush1.msra.mxu0 0.0
      %2847 = vmatprep.subr.mxu0 0.0
      %2848 = vmatpush1.msra.mxu0 0.0
      %2849 = vmatprep.subr.mxu0 0.0
      %2850 = vmatpush1.msra.mxu0 0.0
      %2851 = vmatprep.subr.mxu0 0.0
      %2852 = vmatpush1.msra.mxu0 0.0
      %2853 = vmatprep.subr.mxu0 0.0
      %2854 = vmatpush1.msra.mxu0 0.0
      %2855 = vmatprep.subr.mxu0 0.0
      %2856 = vmatpush1.msra.mxu0 0.0
      %2857 = vmatprep.subr.mxu0 0.0
      %2858 = vmatpush1.msra.mxu0 0.0
      %2859 = vmatprep.subr.mxu0 0.0
      %2860 = vmatpush1.msra.mxu0 0.0
      %2861 = vmatprep.subr.mxu0 0.0
      %2862 = vmatpush1.msra.mxu0 0.0
      %2863 = vmatprep.subr.mxu0 0.0
      %2864 = vmatpush1.msra.mxu0 0.0
      %2865 = vmatprep.subr.mxu0 0.0
      %2866 = vmatpush1.msra.mxu0 0.0
      %2867 = vmatprep.subr.mxu0 0.0
      %2868 = vmatpush1.msra.mxu0 0.0
      %2869 = vmatprep.subr.mxu0 0.0
      %2870 = vmatpush1.msra.mxu0 0.0
      %2871 = vmatprep.subr.mxu0 0.0
      %2872 = vmatpush1.msra.mxu0 0.0
      %2873 = vmatprep.subr.mxu0 0.0
      %2874 = vmatpush1.msra.mxu0 0.0
      %2875 = vmatprep.subr.mxu0 0.0
      %2876 = vmatpush1.msra.mxu0 0.0
      %2877 = vmatprep.subr.mxu0 0.0
      %2878 = vmatpush1.msra.mxu0 0.0
      %2879 = vmatprep.subr.mxu0 0.0
      %2880 = vmatpush1.msra.mxu0 0.0
      %2881 = vmatprep.subr.mxu0 0.0
      %2882 = vmatpush1.msra.mxu0 0.0
      %2883 = vmatprep.subr.mxu0 0.0
      %2884 = vmatpush1.msra.mxu0 0.0
      %2885 = vmatprep.subr.mxu0 0.0
      %2886 = vmatpush1.msra.mxu0 0.0
      %2887 = vmatprep.mubr.f32.mxu0 0.0
      %2888 = vmatmul.mubr.f32.gmra.mrb[0].mxu0 %v2776
      %v2889 = vpop.f32.mrb[0].mxu0
      %v2890 = vadd.f32 %v2697, %v2889
      %v2891 = vpop.f32.mrb[0].mxu0
      %2892 = vmatprep.mubr.f32.mxu0 0.0
      %2893 = vmatmul.mubr.f32.gmra.mrb[0].mxu0 %v2779
      %v2894 = vpop.f32.mrb[0].mxu0
      %v2895 = vadd.f32 %v2702, %v2894
      %v2896 = vpop.f32.mrb[0].mxu0
      %2897 = vmatprep.mubr.f32.mxu0 0.0
      %2898 = vmatmul.mubr.f32.gmra.mrb[0].mxu0 %v2782
      %v2899 = vpop.f32.mrb[0].mxu0
      %v2900 = vadd.f32 %v2707, %v2899
      %v2901 = vpop.f32.mrb[0].mxu0
      %2902 = vmatprep.mubr.f32.mxu0 0.0
      %2903 = vmatmul.mubr.f32.gmra.mrb[0].mxu0 %v2785
      %v2904 = vpop.f32.mrb[0].mxu0
      %v2905 = vadd.f32 %v2712, %v2904
      %v2906 = vpop.f32.mrb[0].mxu0
      %2907 = vmatprep.mubr.f32.mxu0 0.0
      %2908 = vmatmul.mubr.f32.gmra.mrb[0].mxu0 %v2788
      %v2909 = vpop.f32.mrb[0].mxu0
      %v2910 = vadd.f32 %v2717, %v2909
      %v2911 = vpop.f32.mrb[0].mxu0
      %2912 = vmatprep.mubr.f32.mxu0 0.0
      %2913 = vmatmul.mubr.f32.gmra.mrb[0].mxu0 %v2791
      %v2914 = vpop.f32.mrb[0].mxu0
      %v2915 = vadd.f32 %v2722, %v2914
      %v2916 = vpop.f32.mrb[0].mxu0
      %2917 = vmatprep.mubr.f32.mxu0 0.0
      %2918 = vmatmul.mubr.f32.gmra.mrb[0].mxu0 %v2794
      %v2919 = vpop.f32.mrb[0].mxu0
      %v2920 = vadd.f32 %v2727, %v2919
      %v2921 = vpop.f32.mrb[0].mxu0
      %2922 = vmatprep.mubr.f32.mxu0 0.0
      %2923 = vmatmul.mubr.f32.gmra.mrb[0].mxu0 %v2797
      %v2924 = vpop.f32.mrb[0].mxu0
      %v2925 = vadd.f32 %v2732, %v2924
      %v2926 = vpop.f32.mrb[0].mxu0
      %2927 = vmatprep.mubr.f32.mxu0 0.0
      %2928 = vmatmul.mubr.f32.gmra.mrb[0].mxu0 %v2800
      %v2929 = vpop.f32.mrb[0].mxu0
      %v2930 = vadd.f32 %v2737, %v2929
      %v2931 = vpop.f32.mrb[0].mxu0
      %2932 = vmatprep.mubr.f32.mxu0 0.0
      %2933 = vmatmul.mubr.f32.gmra.mrb[0].mxu0 %v2803
      %v2934 = vpop.f32.mrb[0].mxu0
      %v2935 = vadd.f32 %v2742, %v2934
      %v2936 = vpop.f32.mrb[0].mxu0
      %2937 = vmatprep.mubr.f32.mxu0 0.0
      %2938 = vmatmul.mubr.f32.gmra.mrb[0].mxu0 %v2806
      %v2939 = vpop.f32.mrb[0].mxu0
      %v2940 = vadd.f32 %v2747, %v2939
      %v2941 = vpop.f32.mrb[0].mxu0
      %2942 = vmatprep.mubr.f32.mxu0 0.0
      %2943 = vmatmul.mubr.f32.gmra.mrb[0].mxu0 %v2809
      %v2944 = vpop.f32.mrb[0].mxu0
      %v2945 = vadd.f32 %v2752, %v2944
      %v2946 = vpop.f32.mrb[0].mxu0
      %2947 = vmatprep.mubr.f32.mxu0 0.0
      %2948 = vmatmul.mubr.f32.gmra.mrb[0].mxu0 %v2812
      %v2949 = vpop.f32.mrb[0].mxu0
      %v2950 = vadd.f32 %v2757, %v2949
      %v2951 = vpop.f32.mrb[0].mxu0
      %2952 = vmatprep.mubr.f32.mxu0 0.0
      %2953 = vmatmul.mubr.f32.gmra.mrb[0].mxu0 %v2815
      %v2954 = vpop.f32.mrb[0].mxu0
      %v2955 = vadd.f32 %v2762, %v2954
      %v2956 = vpop.f32.mrb[0].mxu0
      %2957 = vmatprep.mubr.f32.mxu0 0.0
      %2958 = vmatmul.mubr.f32.gmra.mrb[0].mxu0 %v2818
      %v2959 = vpop.f32.mrb[0].mxu0
      %v2960 = vadd.f32 %v2767, %v2959
      %v2961 = vpop.f32.mrb[0].mxu0
      %2962 = vmatprep.mubr.f32.mxu0 0.0
      %2963 = vmatmul.mubr.f32.gmra.mrb[0].mxu0 %v2821
      %v2964 = vpop.f32.mrb[0].mxu0
      %v2965 = vadd.f32 %v2772, %v2964
      %v2966 = vpop.f32.mrb[0].mxu0
      %2967 = vdwg.mxu0
      %v2968 = vld [vmem:[#allocation2 + $0x4] sm:$0xff]
      %v2969 = vld [vmem:[#allocation2 + $0xc] sm:$0xff]
      %v2970 = vld [vmem:[#allocation2 + $0x1c] sm:$0xff]
      %v2971 = vld [vmem:[#allocation2 + $0x24] sm:$0xff]
      %v2972 = vld [vmem:[#allocation2 + $0x34] sm:$0xff]
      %v2973 = vld [vmem:[#allocation2 + $0x3c] sm:$0xff]
      %v2974 = vld [vmem:[#allocation2 + $0x4c] sm:$0xff]
      %v2975 = vld [vmem:[#allocation2 + $0x54] sm:$0xff]
      %v2976 = vld [vmem:[#allocation2 + $0x64] sm:$0xff]
      %v2977 = vld [vmem:[#allocation2 + $0x6c] sm:$0xff]
      %v2978 = vld [vmem:[#allocation2 + $0x7c] sm:$0xff]
      %v2979 = vld [vmem:[#allocation2 + $0x84] sm:$0xff]
      %v2980 = vld [vmem:[#allocation2 + $0x94] sm:$0xff]
      %v2981 = vld [vmem:[#allocation2 + $0x9c] sm:$0xff]
      %v2982 = vld [vmem:[#allocation2 + $0xac] sm:$0xff]
      %v2983 = vld [vmem:[#allocation2 + $0xb4] sm:$0xff]
      %s2984 = scalar_lea.vmem %s3, 32
      %v2985 = vld [vmem:[%s2984] sm:$0xff]
      %v2986 = vld [vmem:[%s2984 + $0x8] sm:$0xff]
      %v2988 = vsel %vm2495, %v2968, 0
      %v2991 = vsel %vm2495, %v2969, 0
      %v2994 = vsel %vm2495, %v2970, 0
      %v2997 = vsel %vm2495, %v2971, 0
      %v3000 = vsel %vm2495, %v2972, 0
      %v3003 = vsel %vm2495, %v2973, 0
      %v3006 = vsel %vm2495, %v2974, 0
      %v3009 = vsel %vm2495, %v2975, 0
      %v3012 = vsel %vm2495, %v2976, 0
      %v3015 = vsel %vm2495, %v2977, 0
      %v3018 = vsel %vm2495, %v2978, 0
      %v3021 = vsel %vm2495, %v2979, 0
      %v3024 = vsel %vm2495, %v2980, 0
      %v3027 = vsel %vm2495, %v2981, 0
      %v3030 = vsel %vm2495, %v2982, 0
      %v3033 = vsel %vm2495, %v2983, 0
      %3035 = vmatprep.subr.mxu0 0.0
      %3036 = vmatpush1.msra.mxu0 %v2985
      %3037 = vmatprep.subr.mxu0 0.0
      %3038 = vmatpush1.msra.mxu0 %v2986
      %3039 = vmatprep.subr.mxu0 0.0
      %3040 = vmatpush1.msra.mxu0 0.0
      %3041 = vmatprep.subr.mxu0 0.0
      %3042 = vmatpush1.msra.mxu0 0.0
      %3043 = vmatprep.subr.mxu0 0.0
      %3044 = vmatpush1.msra.mxu0 0.0
      %3045 = vmatprep.subr.mxu0 0.0
      %3046 = vmatpush1.msra.mxu0 0.0
      %3047 = vmatprep.subr.mxu0 0.0
      %3048 = vmatpush1.msra.mxu0 0.0
      %3049 = vmatprep.subr.mxu0 0.0
      %3050 = vmatpush1.msra.mxu0 0.0
      %3051 = vmatprep.subr.mxu0 0.0
      %3052 = vmatpush1.msra.mxu0 0.0
      %3053 = vmatprep.subr.mxu0 0.0
      %3054 = vmatpush1.msra.mxu0 0.0
      %3055 = vmatprep.subr.mxu0 0.0
      %3056 = vmatpush1.msra.mxu0 0.0
      %3057 = vmatprep.subr.mxu0 0.0
      %3058 = vmatpush1.msra.mxu0 0.0
      %3059 = vmatprep.subr.mxu0 0.0
      %3060 = vmatpush1.msra.mxu0 0.0
      %3061 = vmatprep.subr.mxu0 0.0
      %3062 = vmatpush1.msra.mxu0 0.0
      %3063 = vmatprep.subr.mxu0 0.0
      %3064 = vmatpush1.msra.mxu0 0.0
      %3065 = vmatprep.subr.mxu0 0.0
      %3066 = vmatpush1.msra.mxu0 0.0
      %3067 = vmatprep.subr.mxu0 0.0
      %3068 = vmatpush1.msra.mxu0 0.0
      %3069 = vmatprep.subr.mxu0 0.0
      %3070 = vmatpush1.msra.mxu0 0.0
      %3071 = vmatprep.subr.mxu0 0.0
      %3072 = vmatpush1.msra.mxu0 0.0
      %3073 = vmatprep.subr.mxu0 0.0
      %3074 = vmatpush1.msra.mxu0 0.0
      %3075 = vmatprep.subr.mxu0 0.0
      %3076 = vmatpush1.msra.mxu0 0.0
      %3077 = vmatprep.subr.mxu0 0.0
      %3078 = vmatpush1.msra.mxu0 0.0
      %3079 = vmatprep.subr.mxu0 0.0
      %3080 = vmatpush1.msra.mxu0 0.0
      %3081 = vmatprep.subr.mxu0 0.0
      %3082 = vmatpush1.msra.mxu0 0.0
      %3083 = vmatprep.subr.mxu0 0.0
      %3084 = vmatpush1.msra.mxu0 0.0
      %3085 = vmatprep.subr.mxu0 0.0
      %3086 = vmatpush1.msra.mxu0 0.0
      %3087 = vmatprep.subr.mxu0 0.0
      %3088 = vmatpush1.msra.mxu0 0.0
      %3089 = vmatprep.subr.mxu0 0.0
      %3090 = vmatpush1.msra.mxu0 0.0
      %3091 = vmatprep.subr.mxu0 0.0
      %3092 = vmatpush1.msra.mxu0 0.0
      %3093 = vmatprep.subr.mxu0 0.0
      %3094 = vmatpush1.msra.mxu0 0.0
      %3095 = vmatprep.subr.mxu0 0.0
      %3096 = vmatpush1.msra.mxu0 0.0
      %3097 = vmatprep.subr.mxu0 0.0
      %3098 = vmatpush1.msra.mxu0 0.0
      %3099 = vmatprep.mubr.f32.mxu0 0.0
      %3100 = vmatmul.mubr.f32.gmra.mrb[0].mxu0 %v2988
      %v3101 = vpop.f32.mrb[0].mxu0
      %v3102 = vadd.f32 0.0, %v3101
      %v3103 = vpop.f32.mrb[0].mxu0
      %3104 = vmatprep.mubr.f32.mxu0 0.0
      %3105 = vmatmul.mubr.f32.gmra.mrb[0].mxu0 %v2991
      %v3106 = vpop.f32.mrb[0].mxu0
      %v3107 = vadd.f32 0.0, %v3106
      %v3108 = vpop.f32.mrb[0].mxu0
      %3109 = vmatprep.mubr.f32.mxu0 0.0
      %3110 = vmatmul.mubr.f32.gmra.mrb[0].mxu0 %v2994
      %v3111 = vpop.f32.mrb[0].mxu0
      %v3112 = vadd.f32 0.0, %v3111
      %v3113 = vpop.f32.mrb[0].mxu0
      %3114 = vmatprep.mubr.f32.mxu0 0.0
      %3115 = vmatmul.mubr.f32.gmra.mrb[0].mxu0 %v2997
      %v3116 = vpop.f32.mrb[0].mxu0
      %v3117 = vadd.f32 0.0, %v3116
      %v3118 = vpop.f32.mrb[0].mxu0
      %3119 = vmatprep.mubr.f32.mxu0 0.0
      %3120 = vmatmul.mubr.f32.gmra.mrb[0].mxu0 %v3000
      %v3121 = vpop.f32.mrb[0].mxu0
      %v3122 = vadd.f32 0.0, %v3121
      %v3123 = vpop.f32.mrb[0].mxu0
      %3124 = vmatprep.mubr.f32.mxu0 0.0
      %3125 = vmatmul.mubr.f32.gmra.mrb[0].mxu0 %v3003
      %v3126 = vpop.f32.mrb[0].mxu0
      %v3127 = vadd.f32 0.0, %v3126
      %v3128 = vpop.f32.mrb[0].mxu0
      %3129 = vmatprep.mubr.f32.mxu0 0.0
      %3130 = vmatmul.mubr.f32.gmra.mrb[0].mxu0 %v3006
      %v3131 = vpop.f32.mrb[0].mxu0
      %v3132 = vadd.f32 0.0, %v3131
      %v3133 = vpop.f32.mrb[0].mxu0
      %3134 = vmatprep.mubr.f32.mxu0 0.0
      %3135 = vmatmul.mubr.f32.gmra.mrb[0].mxu0 %v3009
      %v3136 = vpop.f32.mrb[0].mxu0
      %v3137 = vadd.f32 0.0, %v3136
      %v3138 = vpop.f32.mrb[0].mxu0
      %3139 = vmatprep.mubr.f32.mxu0 0.0
      %3140 = vmatmul.mubr.f32.gmra.mrb[0].mxu0 %v3012
      %v3141 = vpop.f32.mrb[0].mxu0
      %v3142 = vadd.f32 0.0, %v3141
      %v3143 = vpop.f32.mrb[0].mxu0
      %3144 = vmatprep.mubr.f32.mxu0 0.0
      %3145 = vmatmul.mubr.f32.gmra.mrb[0].mxu0 %v3015
      %v3146 = vpop.f32.mrb[0].mxu0
      %v3147 = vadd.f32 0.0, %v3146
      %v3148 = vpop.f32.mrb[0].mxu0
      %3149 = vmatprep.mubr.f32.mxu0 0.0
      %3150 = vmatmul.mubr.f32.gmra.mrb[0].mxu0 %v3018
      %v3151 = vpop.f32.mrb[0].mxu0
      %v3152 = vadd.f32 0.0, %v3151
      %v3153 = vpop.f32.mrb[0].mxu0
      %3154 = vmatprep.mubr.f32.mxu0 0.0
      %3155 = vmatmul.mubr.f32.gmra.mrb[0].mxu0 %v3021
      %v3156 = vpop.f32.mrb[0].mxu0
      %v3157 = vadd.f32 0.0, %v3156
      %v3158 = vpop.f32.mrb[0].mxu0
      %3159 = vmatprep.mubr.f32.mxu0 0.0
      %3160 = vmatmul.mubr.f32.gmra.mrb[0].mxu0 %v3024
      %v3161 = vpop.f32.mrb[0].mxu0
      %v3162 = vadd.f32 0.0, %v3161
      %v3163 = vpop.f32.mrb[0].mxu0
      %3164 = vmatprep.mubr.f32.mxu0 0.0
      %3165 = vmatmul.mubr.f32.gmra.mrb[0].mxu0 %v3027
      %v3166 = vpop.f32.mrb[0].mxu0
      %v3167 = vadd.f32 0.0, %v3166
      %v3168 = vpop.f32.mrb[0].mxu0
      %3169 = vmatprep.mubr.f32.mxu0 0.0
      %3170 = vmatmul.mubr.f32.gmra.mrb[0].mxu0 %v3030
      %v3171 = vpop.f32.mrb[0].mxu0
      %v3172 = vadd.f32 0.0, %v3171
      %v3173 = vpop.f32.mrb[0].mxu0
      %3174 = vmatprep.mubr.f32.mxu0 0.0
      %3175 = vmatmul.mubr.f32.gmra.mrb[0].mxu0 %v3033
      %v3176 = vpop.f32.mrb[0].mxu0
      %v3177 = vadd.f32 0.0, %v3176
      %v3178 = vpop.f32.mrb[0].mxu0
      %3179 = vdwg.mxu0
      %v3180 = vadd.f32 %v2890, %v3102
      %v3181 = vadd.f32 %v2895, %v3107
      %v3182 = vadd.f32 %v2900, %v3112
      %v3183 = vadd.f32 %v2905, %v3117
      %v3184 = vadd.f32 %v2910, %v3122
      %v3185 = vadd.f32 %v2915, %v3127
      %v3186 = vadd.f32 %v2920, %v3132
      %v3187 = vadd.f32 %v2925, %v3137
      %v3188 = vadd.f32 %v2930, %v3142
      %v3189 = vadd.f32 %v2935, %v3147
      %v3190 = vadd.f32 %v2940, %v3152
      %v3191 = vadd.f32 %v2945, %v3157
      %v3192 = vadd.f32 %v2950, %v3162
      %v3193 = vadd.f32 %v2955, %v3167
      %v3194 = vadd.f32 %v2960, %v3172
      %v3195 = vadd.f32 %v2965, %v3177
      %v3196 = vld [vmem:[%s2527] sm:$0xff]
      %v3197 = vld [vmem:[%s2527 + $0x8] sm:$0xff]
      %v3198 = vld [vmem:[%s2527 + $0x18] sm:$0xff]
      %v3199 = vld [vmem:[%s2527 + $0x20] sm:$0xff]
      %v3200 = vld [vmem:[%s2527 + $0x30] sm:$0xff]
      %v3201 = vld [vmem:[%s2527 + $0x38] sm:$0xff]
      %v3202 = vld [vmem:[%s2527 + $0x48] sm:$0xff]
      %v3203 = vld [vmem:[%s2527 + $0x50] sm:$0xff]
      %v3204 = vld [vmem:[%s2527 + $0x60] sm:$0xff]
      %v3205 = vld [vmem:[%s2527 + $0x68] sm:$0xff]
      %v3206 = vld [vmem:[%s2527 + $0x78] sm:$0xff]
      %v3207 = vld [vmem:[%s2527 + $0x80] sm:$0xff]
      %v3208 = vld [vmem:[%s2527 + $0x90] sm:$0xff]
      %v3209 = vld [vmem:[%s2527 + $0x98] sm:$0xff]
      %v3210 = vld [vmem:[%s2527 + $0xa8] sm:$0xff]
      %v3211 = vld [vmem:[%s2527 + $0xb0] sm:$0xff]
      %s3212 = scalar_lea.vmem %s3, 48
      %v3213 = vld [vmem:[%s3212] sm:$0xff]
      %v3214 = vld [vmem:[%s3212 + $0x8] sm:$0xff]
      %v3216 = vsel %vm2495, %v3196, 0
      %v3219 = vsel %vm2495, %v3197, 0
      %v3222 = vsel %vm2495, %v3198, 0
      %v3225 = vsel %vm2495, %v3199, 0
      %v3228 = vsel %vm2495, %v3200, 0
      %v3231 = vsel %vm2495, %v3201, 0
      %v3234 = vsel %vm2495, %v3202, 0
      %v3237 = vsel %vm2495, %v3203, 0
      %v3240 = vsel %vm2495, %v3204, 0
      %v3243 = vsel %vm2495, %v3205, 0
      %v3246 = vsel %vm2495, %v3206, 0
      %v3249 = vsel %vm2495, %v3207, 0
      %v3252 = vsel %vm2495, %v3208, 0
      %v3255 = vsel %vm2495, %v3209, 0
      %v3258 = vsel %vm2495, %v3210, 0
      %v3261 = vsel %vm2495, %v3211, 0
      %3263 = vmatprep.subr.mxu0 0.0
      %3264 = vmatpush1.msra.mxu0 %v3213
      %3265 = vmatprep.subr.mxu0 0.0
      %3266 = vmatpush1.msra.mxu0 %v3214
      %3267 = vmatprep.subr.mxu0 0.0
      %3268 = vmatpush1.msra.mxu0 0.0
      %3269 = vmatprep.subr.mxu0 0.0
      %3270 = vmatpush1.msra.mxu0 0.0
      %3271 = vmatprep.subr.mxu0 0.0
      %3272 = vmatpush1.msra.mxu0 0.0
      %3273 = vmatprep.subr.mxu0 0.0
      %3274 = vmatpush1.msra.mxu0 0.0
      %3275 = vmatprep.subr.mxu0 0.0
      %3276 = vmatpush1.msra.mxu0 0.0
      %3277 = vmatprep.subr.mxu0 0.0
      %3278 = vmatpush1.msra.mxu0 0.0
      %3279 = vmatprep.subr.mxu0 0.0
      %3280 = vmatpush1.msra.mxu0 0.0
      %3281 = vmatprep.subr.mxu0 0.0
      %3282 = vmatpush1.msra.mxu0 0.0
      %3283 = vmatprep.subr.mxu0 0.0
      %3284 = vmatpush1.msra.mxu0 0.0
      %3285 = vmatprep.subr.mxu0 0.0
      %3286 = vmatpush1.msra.mxu0 0.0
      %3287 = vmatprep.subr.mxu0 0.0
      %3288 = vmatpush1.msra.mxu0 0.0
      %3289 = vmatprep.subr.mxu0 0.0
      %3290 = vmatpush1.msra.mxu0 0.0
      %3291 = vmatprep.subr.mxu0 0.0
      %3292 = vmatpush1.msra.mxu0 0.0
      %3293 = vmatprep.subr.mxu0 0.0
      %3294 = vmatpush1.msra.mxu0 0.0
      %3295 = vmatprep.subr.mxu0 0.0
      %3296 = vmatpush1.msra.mxu0 0.0
      %3297 = vmatprep.subr.mxu0 0.0
      %3298 = vmatpush1.msra.mxu0 0.0
      %3299 = vmatprep.subr.mxu0 0.0
      %3300 = vmatpush1.msra.mxu0 0.0
      %3301 = vmatprep.subr.mxu0 0.0
      %3302 = vmatpush1.msra.mxu0 0.0
      %3303 = vmatprep.subr.mxu0 0.0
      %3304 = vmatpush1.msra.mxu0 0.0
      %3305 = vmatprep.subr.mxu0 0.0
      %3306 = vmatpush1.msra.mxu0 0.0
      %3307 = vmatprep.subr.mxu0 0.0
      %3308 = vmatpush1.msra.mxu0 0.0
      %3309 = vmatprep.subr.mxu0 0.0
      %3310 = vmatpush1.msra.mxu0 0.0
      %3311 = vmatprep.subr.mxu0 0.0
      %3312 = vmatpush1.msra.mxu0 0.0
      %3313 = vmatprep.subr.mxu0 0.0
      %3314 = vmatpush1.msra.mxu0 0.0
      %3315 = vmatprep.subr.mxu0 0.0
      %3316 = vmatpush1.msra.mxu0 0.0
      %3317 = vmatprep.subr.mxu0 0.0
      %3318 = vmatpush1.msra.mxu0 0.0
      %3319 = vmatprep.subr.mxu0 0.0
      %3320 = vmatpush1.msra.mxu0 0.0
      %3321 = vmatprep.subr.mxu0 0.0
      %3322 = vmatpush1.msra.mxu0 0.0
      %3323 = vmatprep.subr.mxu0 0.0
      %3324 = vmatpush1.msra.mxu0 0.0
      %3325 = vmatprep.subr.mxu0 0.0
      %3326 = vmatpush1.msra.mxu0 0.0
      %3327 = vmatprep.mubr.f32.mxu0 0.0
      %3328 = vmatmul.mubr.f32.gmra.mrb[0].mxu0 %v3216
      %v3329 = vpop.f32.mrb[0].mxu0
      %v3330 = vadd.f32 0.0, %v3329
      %v3331 = vpop.f32.mrb[0].mxu0
      %3332 = vmatprep.mubr.f32.mxu0 0.0
      %3333 = vmatmul.mubr.f32.gmra.mrb[0].mxu0 %v3219
      %v3334 = vpop.f32.mrb[0].mxu0
      %v3335 = vadd.f32 0.0, %v3334
      %v3336 = vpop.f32.mrb[0].mxu0
      %3337 = vmatprep.mubr.f32.mxu0 0.0
      %3338 = vmatmul.mubr.f32.gmra.mrb[0].mxu0 %v3222
      %v3339 = vpop.f32.mrb[0].mxu0
      %v3340 = vadd.f32 0.0, %v3339
      %v3341 = vpop.f32.mrb[0].mxu0
      %3342 = vmatprep.mubr.f32.mxu0 0.0
      %3343 = vmatmul.mubr.f32.gmra.mrb[0].mxu0 %v3225
      %v3344 = vpop.f32.mrb[0].mxu0
      %v3345 = vadd.f32 0.0, %v3344
      %v3346 = vpop.f32.mrb[0].mxu0
      %3347 = vmatprep.mubr.f32.mxu0 0.0
      %3348 = vmatmul.mubr.f32.gmra.mrb[0].mxu0 %v3228
      %v3349 = vpop.f32.mrb[0].mxu0
      %v3350 = vadd.f32 0.0, %v3349
      %v3351 = vpop.f32.mrb[0].mxu0
      %3352 = vmatprep.mubr.f32.mxu0 0.0
      %3353 = vmatmul.mubr.f32.gmra.mrb[0].mxu0 %v3231
      %v3354 = vpop.f32.mrb[0].mxu0
      %v3355 = vadd.f32 0.0, %v3354
      %v3356 = vpop.f32.mrb[0].mxu0
      %3357 = vmatprep.mubr.f32.mxu0 0.0
      %3358 = vmatmul.mubr.f32.gmra.mrb[0].mxu0 %v3234
      %v3359 = vpop.f32.mrb[0].mxu0
      %v3360 = vadd.f32 0.0, %v3359
      %v3361 = vpop.f32.mrb[0].mxu0
      %3362 = vmatprep.mubr.f32.mxu0 0.0
      %3363 = vmatmul.mubr.f32.gmra.mrb[0].mxu0 %v3237
      %v3364 = vpop.f32.mrb[0].mxu0
      %v3365 = vadd.f32 0.0, %v3364
      %v3366 = vpop.f32.mrb[0].mxu0
      %3367 = vmatprep.mubr.f32.mxu0 0.0
      %3368 = vmatmul.mubr.f32.gmra.mrb[0].mxu0 %v3240
      %v3369 = vpop.f32.mrb[0].mxu0
      %v3370 = vadd.f32 0.0, %v3369
      %v3371 = vpop.f32.mrb[0].mxu0
      %3372 = vmatprep.mubr.f32.mxu0 0.0
      %3373 = vmatmul.mubr.f32.gmra.mrb[0].mxu0 %v3243
      %v3374 = vpop.f32.mrb[0].mxu0
      %v3375 = vadd.f32 0.0, %v3374
      %v3376 = vpop.f32.mrb[0].mxu0
      %3377 = vmatprep.mubr.f32.mxu0 0.0
      %3378 = vmatmul.mubr.f32.gmra.mrb[0].mxu0 %v3246
      %v3379 = vpop.f32.mrb[0].mxu0
      %v3380 = vadd.f32 0.0, %v3379
      %v3381 = vpop.f32.mrb[0].mxu0
      %3382 = vmatprep.mubr.f32.mxu0 0.0
      %3383 = vmatmul.mubr.f32.gmra.mrb[0].mxu0 %v3249
      %v3384 = vpop.f32.mrb[0].mxu0
      %v3385 = vadd.f32 0.0, %v3384
      %v3386 = vpop.f32.mrb[0].mxu0
      %3387 = vmatprep.mubr.f32.mxu0 0.0
      %3388 = vmatmul.mubr.f32.gmra.mrb[0].mxu0 %v3252
      %v3389 = vpop.f32.mrb[0].mxu0
      %v3390 = vadd.f32 0.0, %v3389
      %v3391 = vpop.f32.mrb[0].mxu0
      %3392 = vmatprep.mubr.f32.mxu0 0.0
      %3393 = vmatmul.mubr.f32.gmra.mrb[0].mxu0 %v3255
      %v3394 = vpop.f32.mrb[0].mxu0
      %v3395 = vadd.f32 0.0, %v3394
      %v3396 = vpop.f32.mrb[0].mxu0
      %3397 = vmatprep.mubr.f32.mxu0 0.0
      %3398 = vmatmul.mubr.f32.gmra.mrb[0].mxu0 %v3258
      %v3399 = vpop.f32.mrb[0].mxu0
      %v3400 = vadd.f32 0.0, %v3399
      %v3401 = vpop.f32.mrb[0].mxu0
      %3402 = vmatprep.mubr.f32.mxu0 0.0
      %3403 = vmatmul.mubr.f32.gmra.mrb[0].mxu0 %v3261
      %v3404 = vpop.f32.mrb[0].mxu0
      %v3405 = vadd.f32 0.0, %v3404
      %v3406 = vpop.f32.mrb[0].mxu0
      %3407 = vdwg.mxu0
      %v3408 = vadd.f32 %v3180, %v3330
      %v3409 = vadd.f32 %v3181, %v3335
      %v3410 = vadd.f32 %v3182, %v3340
      %v3411 = vadd.f32 %v3183, %v3345
      %v3412 = vadd.f32 %v3184, %v3350
      %v3413 = vadd.f32 %v3185, %v3355
      %v3414 = vadd.f32 %v3186, %v3360
      %v3415 = vadd.f32 %v3187, %v3365
      %v3416 = vadd.f32 %v3188, %v3370
      %v3417 = vadd.f32 %v3189, %v3375
      %v3418 = vadd.f32 %v3190, %v3380
      %v3419 = vadd.f32 %v3191, %v3385
      %v3420 = vadd.f32 %v3192, %v3390
      %v3421 = vadd.f32 %v3193, %v3395
      %v3422 = vadd.f32 %v3194, %v3400
      %v3423 = vadd.f32 %v3195, %v3405
      %v3424 = vld [vmem:[%s2527 + $0x2] sm:$0xff]
      %v3425 = vld [vmem:[%s2527 + $0xa] sm:$0xff]
      %v3426 = vld [vmem:[%s2527 + $0x1a] sm:$0xff]
      %v3427 = vld [vmem:[%s2527 + $0x22] sm:$0xff]
      %v3428 = vld [vmem:[%s2527 + $0x32] sm:$0xff]
      %v3429 = vld [vmem:[%s2527 + $0x3a] sm:$0xff]
      %v3430 = vld [vmem:[%s2527 + $0x4a] sm:$0xff]
      %v3431 = vld [vmem:[%s2527 + $0x52] sm:$0xff]
      %v3432 = vld [vmem:[%s2527 + $0x62] sm:$0xff]
      %v3433 = vld [vmem:[%s2527 + $0x6a] sm:$0xff]
      %v3434 = vld [vmem:[%s2527 + $0x7a] sm:$0xff]
      %v3435 = vld [vmem:[%s2527 + $0x82] sm:$0xff]
      %v3436 = vld [vmem:[%s2527 + $0x92] sm:$0xff]
      %v3437 = vld [vmem:[%s2527 + $0x9a] sm:$0xff]
      %v3438 = vld [vmem:[%s2527 + $0xaa] sm:$0xff]
      %v3439 = vld [vmem:[%s2527 + $0xb2] sm:$0xff]
      %s3440 = scalar_lea.vmem %s3, 64
      %v3441 = vld [vmem:[%s3440] sm:$0xff]
      %v3442 = vld [vmem:[%s3440 + $0x8] sm:$0xff]
      %v3444 = vsel %vm2495, %v3424, 0
      %v3447 = vsel %vm2495, %v3425, 0
      %v3450 = vsel %vm2495, %v3426, 0
      %v3453 = vsel %vm2495, %v3427, 0
      %v3456 = vsel %vm2495, %v3428, 0
      %v3459 = vsel %vm2495, %v3429, 0
      %v3462 = vsel %vm2495, %v3430, 0
      %v3465 = vsel %vm2495, %v3431, 0
      %v3468 = vsel %vm2495, %v3432, 0
      %v3471 = vsel %vm2495, %v3433, 0
      %v3474 = vsel %vm2495, %v3434, 0
      %v3477 = vsel %vm2495, %v3435, 0
      %v3480 = vsel %vm2495, %v3436, 0
      %v3483 = vsel %vm2495, %v3437, 0
      %v3486 = vsel %vm2495, %v3438, 0
      %v3489 = vsel %vm2495, %v3439, 0
      %3491 = vmatprep.subr.mxu0 0.0
      %3492 = vmatpush1.msra.mxu0 %v3441
      %3493 = vmatprep.subr.mxu0 0.0
      %3494 = vmatpush1.msra.mxu0 %v3442
      %3495 = vmatprep.subr.mxu0 0.0
      %3496 = vmatpush1.msra.mxu0 0.0
      %3497 = vmatprep.subr.mxu0 0.0
      %3498 = vmatpush1.msra.mxu0 0.0
      %3499 = vmatprep.subr.mxu0 0.0
      %3500 = vmatpush1.msra.mxu0 0.0
      %3501 = vmatprep.subr.mxu0 0.0
      %3502 = vmatpush1.msra.mxu0 0.0
      %3503 = vmatprep.subr.mxu0 0.0
      %3504 = vmatpush1.msra.mxu0 0.0
      %3505 = vmatprep.subr.mxu0 0.0
      %3506 = vmatpush1.msra.mxu0 0.0
      %3507 = vmatprep.subr.mxu0 0.0
      %3508 = vmatpush1.msra.mxu0 0.0
      %3509 = vmatprep.subr.mxu0 0.0
      %3510 = vmatpush1.msra.mxu0 0.0
      %3511 = vmatprep.subr.mxu0 0.0
      %3512 = vmatpush1.msra.mxu0 0.0
      %3513 = vmatprep.subr.mxu0 0.0
      %3514 = vmatpush1.msra.mxu0 0.0
      %3515 = vmatprep.subr.mxu0 0.0
      %3516 = vmatpush1.msra.mxu0 0.0
      %3517 = vmatprep.subr.mxu0 0.0
      %3518 = vmatpush1.msra.mxu0 0.0
      %3519 = vmatprep.subr.mxu0 0.0
      %3520 = vmatpush1.msra.mxu0 0.0
      %3521 = vmatprep.subr.mxu0 0.0
      %3522 = vmatpush1.msra.mxu0 0.0
      %3523 = vmatprep.subr.mxu0 0.0
      %3524 = vmatpush1.msra.mxu0 0.0
      %3525 = vmatprep.subr.mxu0 0.0
      %3526 = vmatpush1.msra.mxu0 0.0
      %3527 = vmatprep.subr.mxu0 0.0
      %3528 = vmatpush1.msra.mxu0 0.0
      %3529 = vmatprep.subr.mxu0 0.0
      %3530 = vmatpush1.msra.mxu0 0.0
      %3531 = vmatprep.subr.mxu0 0.0
      %3532 = vmatpush1.msra.mxu0 0.0
      %3533 = vmatprep.subr.mxu0 0.0
      %3534 = vmatpush1.msra.mxu0 0.0
      %3535 = vmatprep.subr.mxu0 0.0
      %3536 = vmatpush1.msra.mxu0 0.0
      %3537 = vmatprep.subr.mxu0 0.0
      %3538 = vmatpush1.msra.mxu0 0.0
      %3539 = vmatprep.subr.mxu0 0.0
      %3540 = vmatpush1.msra.mxu0 0.0
      %3541 = vmatprep.subr.mxu0 0.0
      %3542 = vmatpush1.msra.mxu0 0.0
      %3543 = vmatprep.subr.mxu0 0.0
      %3544 = vmatpush1.msra.mxu0 0.0
      %3545 = vmatprep.subr.mxu0 0.0
      %3546 = vmatpush1.msra.mxu0 0.0
      %3547 = vmatprep.subr.mxu0 0.0
      %3548 = vmatpush1.msra.mxu0 0.0
      %3549 = vmatprep.subr.mxu0 0.0
      %3550 = vmatpush1.msra.mxu0 0.0
      %3551 = vmatprep.subr.mxu0 0.0
      %3552 = vmatpush1.msra.mxu0 0.0
      %3553 = vmatprep.subr.mxu0 0.0
      %3554 = vmatpush1.msra.mxu0 0.0
      %3555 = vmatprep.mubr.f32.mxu0 0.0
      %3556 = vmatmul.mubr.f32.gmra.mrb[0].mxu0 %v3444
      %v3557 = vpop.f32.mrb[0].mxu0
      %v3558 = vadd.f32 0.0, %v3557
      %v3559 = vpop.f32.mrb[0].mxu0
      %3560 = vmatprep.mubr.f32.mxu0 0.0
      %3561 = vmatmul.mubr.f32.gmra.mrb[0].mxu0 %v3447
      %v3562 = vpop.f32.mrb[0].mxu0
      %v3563 = vadd.f32 0.0, %v3562
      %v3564 = vpop.f32.mrb[0].mxu0
      %3565 = vmatprep.mubr.f32.mxu0 0.0
      %3566 = vmatmul.mubr.f32.gmra.mrb[0].mxu0 %v3450
      %v3567 = vpop.f32.mrb[0].mxu0
      %v3568 = vadd.f32 0.0, %v3567
      %v3569 = vpop.f32.mrb[0].mxu0
      %3570 = vmatprep.mubr.f32.mxu0 0.0
      %3571 = vmatmul.mubr.f32.gmra.mrb[0].mxu0 %v3453
      %v3572 = vpop.f32.mrb[0].mxu0
      %v3573 = vadd.f32 0.0, %v3572
      %v3574 = vpop.f32.mrb[0].mxu0
      %3575 = vmatprep.mubr.f32.mxu0 0.0
      %3576 = vmatmul.mubr.f32.gmra.mrb[0].mxu0 %v3456
      %v3577 = vpop.f32.mrb[0].mxu0
      %v3578 = vadd.f32 0.0, %v3577
      %v3579 = vpop.f32.mrb[0].mxu0
      %3580 = vmatprep.mubr.f32.mxu0 0.0
      %3581 = vmatmul.mubr.f32.gmra.mrb[0].mxu0 %v3459
      %v3582 = vpop.f32.mrb[0].mxu0
      %v3583 = vadd.f32 0.0, %v3582
      %v3584 = vpop.f32.mrb[0].mxu0
      %3585 = vmatprep.mubr.f32.mxu0 0.0
      %3586 = vmatmul.mubr.f32.gmra.mrb[0].mxu0 %v3462
      %v3587 = vpop.f32.mrb[0].mxu0
      %v3588 = vadd.f32 0.0, %v3587
      %v3589 = vpop.f32.mrb[0].mxu0
      %3590 = vmatprep.mubr.f32.mxu0 0.0
      %3591 = vmatmul.mubr.f32.gmra.mrb[0].mxu0 %v3465
      %v3592 = vpop.f32.mrb[0].mxu0
      %v3593 = vadd.f32 0.0, %v3592
      %v3594 = vpop.f32.mrb[0].mxu0
      %3595 = vmatprep.mubr.f32.mxu0 0.0
      %3596 = vmatmul.mubr.f32.gmra.mrb[0].mxu0 %v3468
      %v3597 = vpop.f32.mrb[0].mxu0
      %v3598 = vadd.f32 0.0, %v3597
      %v3599 = vpop.f32.mrb[0].mxu0
      %3600 = vmatprep.mubr.f32.mxu0 0.0
      %3601 = vmatmul.mubr.f32.gmra.mrb[0].mxu0 %v3471
      %v3602 = vpop.f32.mrb[0].mxu0
      %v3603 = vadd.f32 0.0, %v3602
      %v3604 = vpop.f32.mrb[0].mxu0
      %3605 = vmatprep.mubr.f32.mxu0 0.0
      %3606 = vmatmul.mubr.f32.gmra.mrb[0].mxu0 %v3474
      %v3607 = vpop.f32.mrb[0].mxu0
      %v3608 = vadd.f32 0.0, %v3607
      %v3609 = vpop.f32.mrb[0].mxu0
      %3610 = vmatprep.mubr.f32.mxu0 0.0
      %3611 = vmatmul.mubr.f32.gmra.mrb[0].mxu0 %v3477
      %v3612 = vpop.f32.mrb[0].mxu0
      %v3613 = vadd.f32 0.0, %v3612
      %v3614 = vpop.f32.mrb[0].mxu0
      %3615 = vmatprep.mubr.f32.mxu0 0.0
      %3616 = vmatmul.mubr.f32.gmra.mrb[0].mxu0 %v3480
      %v3617 = vpop.f32.mrb[0].mxu0
      %v3618 = vadd.f32 0.0, %v3617
      %v3619 = vpop.f32.mrb[0].mxu0
      %3620 = vmatprep.mubr.f32.mxu0 0.0
      %3621 = vmatmul.mubr.f32.gmra.mrb[0].mxu0 %v3483
      %v3622 = vpop.f32.mrb[0].mxu0
      %v3623 = vadd.f32 0.0, %v3622
      %v3624 = vpop.f32.mrb[0].mxu0
      %3625 = vmatprep.mubr.f32.mxu0 0.0
      %3626 = vmatmul.mubr.f32.gmra.mrb[0].mxu0 %v3486
      %v3627 = vpop.f32.mrb[0].mxu0
      %v3628 = vadd.f32 0.0, %v3627
      %v3629 = vpop.f32.mrb[0].mxu0
      %3630 = vmatprep.mubr.f32.mxu0 0.0
      %3631 = vmatmul.mubr.f32.gmra.mrb[0].mxu0 %v3489
      %v3632 = vpop.f32.mrb[0].mxu0
      %v3633 = vadd.f32 0.0, %v3632
      %v3634 = vpop.f32.mrb[0].mxu0
      %3635 = vdwg.mxu0
      %v3636 = vadd.f32 %v3408, %v3558
      %v3637 = vadd.f32 %v3409, %v3563
      %v3638 = vadd.f32 %v3410, %v3568
      %v3639 = vadd.f32 %v3411, %v3573
      %v3640 = vadd.f32 %v3412, %v3578
      %v3641 = vadd.f32 %v3413, %v3583
      %v3642 = vadd.f32 %v3414, %v3588
      %v3643 = vadd.f32 %v3415, %v3593
      %v3644 = vadd.f32 %v3416, %v3598
      %v3645 = vadd.f32 %v3417, %v3603
      %v3646 = vadd.f32 %v3418, %v3608
      %v3647 = vadd.f32 %v3419, %v3613
      %v3648 = vadd.f32 %v3420, %v3618
      %v3649 = vadd.f32 %v3421, %v3623
      %v3650 = vadd.f32 %v3422, %v3628
      %v3651 = vadd.f32 %v3423, %v3633
      %v3652 = vld [vmem:[%s2527 + $0x4] sm:$0xff]
      %v3653 = vld [vmem:[%s2527 + $0xc] sm:$0xff]
      %v3654 = vld [vmem:[%s2527 + $0x1c] sm:$0xff]
      %v3655 = vld [vmem:[%s2527 + $0x24] sm:$0xff]
      %v3656 = vld [vmem:[%s2527 + $0x34] sm:$0xff]
      %v3657 = vld [vmem:[%s2527 + $0x3c] sm:$0xff]
      %v3658 = vld [vmem:[%s2527 + $0x4c] sm:$0xff]
      %v3659 = vld [vmem:[%s2527 + $0x54] sm:$0xff]
      %v3660 = vld [vmem:[%s2527 + $0x64] sm:$0xff]
      %v3661 = vld [vmem:[%s2527 + $0x6c] sm:$0xff]
      %v3662 = vld [vmem:[%s2527 + $0x7c] sm:$0xff]
      %v3663 = vld [vmem:[%s2527 + $0x84] sm:$0xff]
      %v3664 = vld [vmem:[%s2527 + $0x94] sm:$0xff]
      %v3665 = vld [vmem:[%s2527 + $0x9c] sm:$0xff]
      %v3666 = vld [vmem:[%s2527 + $0xac] sm:$0xff]
      %v3667 = vld [vmem:[%s2527 + $0xb4] sm:$0xff]
      %s3668 = scalar_lea.vmem %s3, 80
      %v3669 = vld [vmem:[%s3668] sm:$0xff]
      %v3670 = vld [vmem:[%s3668 + $0x8] sm:$0xff]
      %v3672 = vsel %vm2495, %v3652, 0
      %v3675 = vsel %vm2495, %v3653, 0
      %v3678 = vsel %vm2495, %v3654, 0
      %v3681 = vsel %vm2495, %v3655, 0
      %v3684 = vsel %vm2495, %v3656, 0
      %v3687 = vsel %vm2495, %v3657, 0
      %v3690 = vsel %vm2495, %v3658, 0
      %v3693 = vsel %vm2495, %v3659, 0
      %v3696 = vsel %vm2495, %v3660, 0
      %v3699 = vsel %vm2495, %v3661, 0
      %v3702 = vsel %vm2495, %v3662, 0
      %v3705 = vsel %vm2495, %v3663, 0
      %v3708 = vsel %vm2495, %v3664, 0
      %v3711 = vsel %vm2495, %v3665, 0
      %v3714 = vsel %vm2495, %v3666, 0
      %v3717 = vsel %vm2495, %v3667, 0
      %3719 = vmatprep.subr.mxu0 0.0
      %3720 = vmatpush1.msra.mxu0 %v3669
      %3721 = vmatprep.subr.mxu0 0.0
      %3722 = vmatpush1.msra.mxu0 %v3670
      %3723 = vmatprep.subr.mxu0 0.0
      %3724 = vmatpush1.msra.mxu0 0.0
      %3725 = vmatprep.subr.mxu0 0.0
      %3726 = vmatpush1.msra.mxu0 0.0
      %3727 = vmatprep.subr.mxu0 0.0
      %3728 = vmatpush1.msra.mxu0 0.0
      %3729 = vmatprep.subr.mxu0 0.0
      %3730 = vmatpush1.msra.mxu0 0.0
      %3731 = vmatprep.subr.mxu0 0.0
      %3732 = vmatpush1.msra.mxu0 0.0
      %3733 = vmatprep.subr.mxu0 0.0
      %3734 = vmatpush1.msra.mxu0 0.0
      %3735 = vmatprep.subr.mxu0 0.0
      %3736 = vmatpush1.msra.mxu0 0.0
      %3737 = vmatprep.subr.mxu0 0.0
      %3738 = vmatpush1.msra.mxu0 0.0
      %3739 = vmatprep.subr.mxu0 0.0
      %3740 = vmatpush1.msra.mxu0 0.0
      %3741 = vmatprep.subr.mxu0 0.0
      %3742 = vmatpush1.msra.mxu0 0.0
      %3743 = vmatprep.subr.mxu0 0.0
      %3744 = vmatpush1.msra.mxu0 0.0
      %3745 = vmatprep.subr.mxu0 0.0
      %3746 = vmatpush1.msra.mxu0 0.0
      %3747 = vmatprep.subr.mxu0 0.0
      %3748 = vmatpush1.msra.mxu0 0.0
      %3749 = vmatprep.subr.mxu0 0.0
      %3750 = vmatpush1.msra.mxu0 0.0
      %3751 = vmatprep.subr.mxu0 0.0
      %3752 = vmatpush1.msra.mxu0 0.0
      %3753 = vmatprep.subr.mxu0 0.0
      %3754 = vmatpush1.msra.mxu0 0.0
      %3755 = vmatprep.subr.mxu0 0.0
      %3756 = vmatpush1.msra.mxu0 0.0
      %3757 = vmatprep.subr.mxu0 0.0
      %3758 = vmatpush1.msra.mxu0 0.0
      %3759 = vmatprep.subr.mxu0 0.0
      %3760 = vmatpush1.msra.mxu0 0.0
      %3761 = vmatprep.subr.mxu0 0.0
      %3762 = vmatpush1.msra.mxu0 0.0
      %3763 = vmatprep.subr.mxu0 0.0
      %3764 = vmatpush1.msra.mxu0 0.0
      %3765 = vmatprep.subr.mxu0 0.0
      %3766 = vmatpush1.msra.mxu0 0.0
      %3767 = vmatprep.subr.mxu0 0.0
      %3768 = vmatpush1.msra.mxu0 0.0
      %3769 = vmatprep.subr.mxu0 0.0
      %3770 = vmatpush1.msra.mxu0 0.0
      %3771 = vmatprep.subr.mxu0 0.0
      %3772 = vmatpush1.msra.mxu0 0.0
      %3773 = vmatprep.subr.mxu0 0.0
      %3774 = vmatpush1.msra.mxu0 0.0
      %3775 = vmatprep.subr.mxu0 0.0
      %3776 = vmatpush1.msra.mxu0 0.0
      %3777 = vmatprep.subr.mxu0 0.0
      %3778 = vmatpush1.msra.mxu0 0.0
      %3779 = vmatprep.subr.mxu0 0.0
      %3780 = vmatpush1.msra.mxu0 0.0
      %3781 = vmatprep.subr.mxu0 0.0
      %3782 = vmatpush1.msra.mxu0 0.0
      %3783 = vmatprep.mubr.f32.mxu0 0.0
      %3784 = vmatmul.mubr.f32.gmra.mrb[0].mxu0 %v3672
      %v3785 = vpop.f32.mrb[0].mxu0
      %v3786 = vadd.f32 0.0, %v3785
      %v3787 = vpop.f32.mrb[0].mxu0
      %3788 = vmatprep.mubr.f32.mxu0 0.0
      %3789 = vmatmul.mubr.f32.gmra.mrb[0].mxu0 %v3675
      %v3790 = vpop.f32.mrb[0].mxu0
      %v3791 = vadd.f32 0.0, %v3790
      %v3792 = vpop.f32.mrb[0].mxu0
      %3793 = vmatprep.mubr.f32.mxu0 0.0
      %3794 = vmatmul.mubr.f32.gmra.mrb[0].mxu0 %v3678
      %v3795 = vpop.f32.mrb[0].mxu0
      %v3796 = vadd.f32 0.0, %v3795
      %v3797 = vpop.f32.mrb[0].mxu0
      %3798 = vmatprep.mubr.f32.mxu0 0.0
      %3799 = vmatmul.mubr.f32.gmra.mrb[0].mxu0 %v3681
      %v3800 = vpop.f32.mrb[0].mxu0
      %v3801 = vadd.f32 0.0, %v3800
      %v3802 = vpop.f32.mrb[0].mxu0
      %3803 = vmatprep.mubr.f32.mxu0 0.0
      %3804 = vmatmul.mubr.f32.gmra.mrb[0].mxu0 %v3684
      %v3805 = vpop.f32.mrb[0].mxu0
      %v3806 = vadd.f32 0.0, %v3805
      %v3807 = vpop.f32.mrb[0].mxu0
      %3808 = vmatprep.mubr.f32.mxu0 0.0
      %3809 = vmatmul.mubr.f32.gmra.mrb[0].mxu0 %v3687
      %v3810 = vpop.f32.mrb[0].mxu0
      %v3811 = vadd.f32 0.0, %v3810
      %v3812 = vpop.f32.mrb[0].mxu0
      %3813 = vmatprep.mubr.f32.mxu0 0.0
      %3814 = vmatmul.mubr.f32.gmra.mrb[0].mxu0 %v3690
      %v3815 = vpop.f32.mrb[0].mxu0
      %v3816 = vadd.f32 0.0, %v3815
      %v3817 = vpop.f32.mrb[0].mxu0
      %3818 = vmatprep.mubr.f32.mxu0 0.0
      %3819 = vmatmul.mubr.f32.gmra.mrb[0].mxu0 %v3693
      %v3820 = vpop.f32.mrb[0].mxu0
      %v3821 = vadd.f32 0.0, %v3820
      %v3822 = vpop.f32.mrb[0].mxu0
      %3823 = vmatprep.mubr.f32.mxu0 0.0
      %3824 = vmatmul.mubr.f32.gmra.mrb[0].mxu0 %v3696
      %v3825 = vpop.f32.mrb[0].mxu0
      %v3826 = vadd.f32 0.0, %v3825
      %v3827 = vpop.f32.mrb[0].mxu0
      %3828 = vmatprep.mubr.f32.mxu0 0.0
      %3829 = vmatmul.mubr.f32.gmra.mrb[0].mxu0 %v3699
      %v3830 = vpop.f32.mrb[0].mxu0
      %v3831 = vadd.f32 0.0, %v3830
      %v3832 = vpop.f32.mrb[0].mxu0
      %3833 = vmatprep.mubr.f32.mxu0 0.0
      %3834 = vmatmul.mubr.f32.gmra.mrb[0].mxu0 %v3702
      %v3835 = vpop.f32.mrb[0].mxu0
      %v3836 = vadd.f32 0.0, %v3835
      %v3837 = vpop.f32.mrb[0].mxu0
      %3838 = vmatprep.mubr.f32.mxu0 0.0
      %3839 = vmatmul.mubr.f32.gmra.mrb[0].mxu0 %v3705
      %v3840 = vpop.f32.mrb[0].mxu0
      %v3841 = vadd.f32 0.0, %v3840
      %v3842 = vpop.f32.mrb[0].mxu0
      %3843 = vmatprep.mubr.f32.mxu0 0.0
      %3844 = vmatmul.mubr.f32.gmra.mrb[0].mxu0 %v3708
      %v3845 = vpop.f32.mrb[0].mxu0
      %v3846 = vadd.f32 0.0, %v3845
      %v3847 = vpop.f32.mrb[0].mxu0
      %3848 = vmatprep.mubr.f32.mxu0 0.0
      %3849 = vmatmul.mubr.f32.gmra.mrb[0].mxu0 %v3711
      %v3850 = vpop.f32.mrb[0].mxu0
      %v3851 = vadd.f32 0.0, %v3850
      %v3852 = vpop.f32.mrb[0].mxu0
      %3853 = vmatprep.mubr.f32.mxu0 0.0
      %3854 = vmatmul.mubr.f32.gmra.mrb[0].mxu0 %v3714
      %v3855 = vpop.f32.mrb[0].mxu0
      %v3856 = vadd.f32 0.0, %v3855
      %v3857 = vpop.f32.mrb[0].mxu0
      %3858 = vmatprep.mubr.f32.mxu0 0.0
      %3859 = vmatmul.mubr.f32.gmra.mrb[0].mxu0 %v3717
      %v3860 = vpop.f32.mrb[0].mxu0
      %v3861 = vadd.f32 0.0, %v3860
      %v3862 = vpop.f32.mrb[0].mxu0
      %3863 = vdwg.mxu0
      %v3864 = vadd.f32 %v3636, %v3786
      %v3865 = vadd.f32 %v3637, %v3791
      %v3866 = vadd.f32 %v3638, %v3796
      %v3867 = vadd.f32 %v3639, %v3801
      %v3868 = vadd.f32 %v3640, %v3806
      %v3869 = vadd.f32 %v3641, %v3811
      %v3870 = vadd.f32 %v3642, %v3816
      %v3871 = vadd.f32 %v3643, %v3821
      %v3872 = vadd.f32 %v3644, %v3826
      %v3873 = vadd.f32 %v3645, %v3831
      %v3874 = vadd.f32 %v3646, %v3836
      %v3875 = vadd.f32 %v3647, %v3841
      %v3876 = vadd.f32 %v3648, %v3846
      %v3877 = vadd.f32 %v3649, %v3851
      %v3878 = vadd.f32 %v3650, %v3856
      %v3879 = vadd.f32 %v3651, %v3861
      %s3880 = scalar_lea.vmem [#allocation2], 48
      %v3881 = vld [vmem:[%s3880] sm:$0xff]
      %v3882 = vld [vmem:[%s3880 + $0x8] sm:$0xff]
      %v3883 = vld [vmem:[%s3880 + $0x18] sm:$0xff]
      %v3884 = vld [vmem:[%s3880 + $0x20] sm:$0xff]
      %v3885 = vld [vmem:[%s3880 + $0x30] sm:$0xff]
      %v3886 = vld [vmem:[%s3880 + $0x38] sm:$0xff]
      %v3887 = vld [vmem:[%s3880 + $0x48] sm:$0xff]
      %v3888 = vld [vmem:[%s3880 + $0x50] sm:$0xff]
      %v3889 = vld [vmem:[%s3880 + $0x60] sm:$0xff]
      %v3890 = vld [vmem:[%s3880 + $0x68] sm:$0xff]
      %v3891 = vld [vmem:[%s3880 + $0x78] sm:$0xff]
      %v3892 = vld [vmem:[%s3880 + $0x80] sm:$0xff]
      %v3893 = vld [vmem:[%s3880 + $0x90] sm:$0xff]
      %v3894 = vld [vmem:[%s3880 + $0x98] sm:$0xff]
      %v3895 = vld [vmem:[%s3880 + $0xa8] sm:$0xff]
      %v3896 = vld [vmem:[%s3880 + $0xb0] sm:$0xff]
      %s3897 = scalar_lea.vmem %s3, 96
      %v3898 = vld [vmem:[%s3897] sm:$0xff]
      %v3899 = vld [vmem:[%s3897 + $0x8] sm:$0xff]
      %v3901 = vsel %vm2495, %v3881, 0
      %v3904 = vsel %vm2495, %v3882, 0
      %v3907 = vsel %vm2495, %v3883, 0
      %v3910 = vsel %vm2495, %v3884, 0
      %v3913 = vsel %vm2495, %v3885, 0
      %v3916 = vsel %vm2495, %v3886, 0
      %v3919 = vsel %vm2495, %v3887, 0
      %v3922 = vsel %vm2495, %v3888, 0
      %v3925 = vsel %vm2495, %v3889, 0
      %v3928 = vsel %vm2495, %v3890, 0
      %v3931 = vsel %vm2495, %v3891, 0
      %v3934 = vsel %vm2495, %v3892, 0
      %v3937 = vsel %vm2495, %v3893, 0
      %v3940 = vsel %vm2495, %v3894, 0
      %v3943 = vsel %vm2495, %v3895, 0
      %v3946 = vsel %vm2495, %v3896, 0
      %3948 = vmatprep.subr.mxu0 0.0
      %3949 = vmatpush1.msra.mxu0 %v3898
      %3950 = vmatprep.subr.mxu0 0.0
      %3951 = vmatpush1.msra.mxu0 %v3899
      %3952 = vmatprep.subr.mxu0 0.0
      %3953 = vmatpush1.msra.mxu0 0.0
      %3954 = vmatprep.subr.mxu0 0.0
      %3955 = vmatpush1.msra.mxu0 0.0
      %3956 = vmatprep.subr.mxu0 0.0
      %3957 = vmatpush1.msra.mxu0 0.0
      %3958 = vmatprep.subr.mxu0 0.0
      %3959 = vmatpush1.msra.mxu0 0.0
      %3960 = vmatprep.subr.mxu0 0.0
      %3961 = vmatpush1.msra.mxu0 0.0
      %3962 = vmatprep.subr.mxu0 0.0
      %3963 = vmatpush1.msra.mxu0 0.0
      %3964 = vmatprep.subr.mxu0 0.0
      %3965 = vmatpush1.msra.mxu0 0.0
      %3966 = vmatprep.subr.mxu0 0.0
      %3967 = vmatpush1.msra.mxu0 0.0
      %3968 = vmatprep.subr.mxu0 0.0
      %3969 = vmatpush1.msra.mxu0 0.0
      %3970 = vmatprep.subr.mxu0 0.0
      %3971 = vmatpush1.msra.mxu0 0.0
      %3972 = vmatprep.subr.mxu0 0.0
      %3973 = vmatpush1.msra.mxu0 0.0
      %3974 = vmatprep.subr.mxu0 0.0
      %3975 = vmatpush1.msra.mxu0 0.0
      %3976 = vmatprep.subr.mxu0 0.0
      %3977 = vmatpush1.msra.mxu0 0.0
      %3978 = vmatprep.subr.mxu0 0.0
      %3979 = vmatpush1.msra.mxu0 0.0
      %3980 = vmatprep.subr.mxu0 0.0
      %3981 = vmatpush1.msra.mxu0 0.0
      %3982 = vmatprep.subr.mxu0 0.0
      %3983 = vmatpush1.msra.mxu0 0.0
      %3984 = vmatprep.subr.mxu0 0.0
      %3985 = vmatpush1.msra.mxu0 0.0
      %3986 = vmatprep.subr.mxu0 0.0
      %3987 = vmatpush1.msra.mxu0 0.0
      %3988 = vmatprep.subr.mxu0 0.0
      %3989 = vmatpush1.msra.mxu0 0.0
      %3990 = vmatprep.subr.mxu0 0.0
      %3991 = vmatpush1.msra.mxu0 0.0
      %3992 = vmatprep.subr.mxu0 0.0
      %3993 = vmatpush1.msra.mxu0 0.0
      %3994 = vmatprep.subr.mxu0 0.0
      %3995 = vmatpush1.msra.mxu0 0.0
      %3996 = vmatprep.subr.mxu0 0.0
      %3997 = vmatpush1.msra.mxu0 0.0
      %3998 = vmatprep.subr.mxu0 0.0
      %3999 = vmatpush1.msra.mxu0 0.0
      %4000 = vmatprep.subr.mxu0 0.0
      %4001 = vmatpush1.msra.mxu0 0.0
      %4002 = vmatprep.subr.mxu0 0.0
      %4003 = vmatpush1.msra.mxu0 0.0
      %4004 = vmatprep.subr.mxu0 0.0
      %4005 = vmatpush1.msra.mxu0 0.0
      %4006 = vmatprep.subr.mxu0 0.0
      %4007 = vmatpush1.msra.mxu0 0.0
      %4008 = vmatprep.subr.mxu0 0.0
      %4009 = vmatpush1.msra.mxu0 0.0
      %4010 = vmatprep.subr.mxu0 0.0
      %4011 = vmatpush1.msra.mxu0 0.0
      %4012 = vmatprep.mubr.f32.mxu0 0.0
      %4013 = vmatmul.mubr.f32.gmra.mrb[0].mxu0 %v3901
      %v4014 = vpop.f32.mrb[0].mxu0
      %v4015 = vadd.f32 0.0, %v4014
      %v4016 = vpop.f32.mrb[0].mxu0
      %4017 = vmatprep.mubr.f32.mxu0 0.0
      %4018 = vmatmul.mubr.f32.gmra.mrb[0].mxu0 %v3904
      %v4019 = vpop.f32.mrb[0].mxu0
      %v4020 = vadd.f32 0.0, %v4019
      %v4021 = vpop.f32.mrb[0].mxu0
      %4022 = vmatprep.mubr.f32.mxu0 0.0
      %4023 = vmatmul.mubr.f32.gmra.mrb[0].mxu0 %v3907
      %v4024 = vpop.f32.mrb[0].mxu0
      %v4025 = vadd.f32 0.0, %v4024
      %v4026 = vpop.f32.mrb[0].mxu0
      %4027 = vmatprep.mubr.f32.mxu0 0.0
      %4028 = vmatmul.mubr.f32.gmra.mrb[0].mxu0 %v3910
      %v4029 = vpop.f32.mrb[0].mxu0
      %v4030 = vadd.f32 0.0, %v4029
      %v4031 = vpop.f32.mrb[0].mxu0
      %4032 = vmatprep.mubr.f32.mxu0 0.0
      %4033 = vmatmul.mubr.f32.gmra.mrb[0].mxu0 %v3913
      %v4034 = vpop.f32.mrb[0].mxu0
      %v4035 = vadd.f32 0.0, %v4034
      %v4036 = vpop.f32.mrb[0].mxu0
      %4037 = vmatprep.mubr.f32.mxu0 0.0
      %4038 = vmatmul.mubr.f32.gmra.mrb[0].mxu0 %v3916
      %v4039 = vpop.f32.mrb[0].mxu0
      %v4040 = vadd.f32 0.0, %v4039
      %v4041 = vpop.f32.mrb[0].mxu0
      %4042 = vmatprep.mubr.f32.mxu0 0.0
      %4043 = vmatmul.mubr.f32.gmra.mrb[0].mxu0 %v3919
      %v4044 = vpop.f32.mrb[0].mxu0
      %v4045 = vadd.f32 0.0, %v4044
      %v4046 = vpop.f32.mrb[0].mxu0
      %4047 = vmatprep.mubr.f32.mxu0 0.0
      %4048 = vmatmul.mubr.f32.gmra.mrb[0].mxu0 %v3922
      %v4049 = vpop.f32.mrb[0].mxu0
      %v4050 = vadd.f32 0.0, %v4049
      %v4051 = vpop.f32.mrb[0].mxu0
      %4052 = vmatprep.mubr.f32.mxu0 0.0
      %4053 = vmatmul.mubr.f32.gmra.mrb[0].mxu0 %v3925
      %v4054 = vpop.f32.mrb[0].mxu0
      %v4055 = vadd.f32 0.0, %v4054
      %v4056 = vpop.f32.mrb[0].mxu0
      %4057 = vmatprep.mubr.f32.mxu0 0.0
      %4058 = vmatmul.mubr.f32.gmra.mrb[0].mxu0 %v3928
      %v4059 = vpop.f32.mrb[0].mxu0
      %v4060 = vadd.f32 0.0, %v4059
      %v4061 = vpop.f32.mrb[0].mxu0
      %4062 = vmatprep.mubr.f32.mxu0 0.0
      %4063 = vmatmul.mubr.f32.gmra.mrb[0].mxu0 %v3931
      %v4064 = vpop.f32.mrb[0].mxu0
      %v4065 = vadd.f32 0.0, %v4064
      %v4066 = vpop.f32.mrb[0].mxu0
      %4067 = vmatprep.mubr.f32.mxu0 0.0
      %4068 = vmatmul.mubr.f32.gmra.mrb[0].mxu0 %v3934
      %v4069 = vpop.f32.mrb[0].mxu0
      %v4070 = vadd.f32 0.0, %v4069
      %v4071 = vpop.f32.mrb[0].mxu0
      %4072 = vmatprep.mubr.f32.mxu0 0.0
      %4073 = vmatmul.mubr.f32.gmra.mrb[0].mxu0 %v3937
      %v4074 = vpop.f32.mrb[0].mxu0
      %v4075 = vadd.f32 0.0, %v4074
      %v4076 = vpop.f32.mrb[0].mxu0
      %4077 = vmatprep.mubr.f32.mxu0 0.0
      %4078 = vmatmul.mubr.f32.gmra.mrb[0].mxu0 %v3940
      %v4079 = vpop.f32.mrb[0].mxu0
      %v4080 = vadd.f32 0.0, %v4079
      %v4081 = vpop.f32.mrb[0].mxu0
      %4082 = vmatprep.mubr.f32.mxu0 0.0
      %4083 = vmatmul.mubr.f32.gmra.mrb[0].mxu0 %v3943
      %v4084 = vpop.f32.mrb[0].mxu0
      %v4085 = vadd.f32 0.0, %v4084
      %v4086 = vpop.f32.mrb[0].mxu0
      %4087 = vmatprep.mubr.f32.mxu0 0.0
      %4088 = vmatmul.mubr.f32.gmra.mrb[0].mxu0 %v3946
      %v4089 = vpop.f32.mrb[0].mxu0
      %v4090 = vadd.f32 0.0, %v4089
      %v4091 = vpop.f32.mrb[0].mxu0
      %4092 = vdwg.mxu0
      %v4093 = vadd.f32 %v3864, %v4015
      %v4094 = vadd.f32 %v3865, %v4020
      %v4095 = vadd.f32 %v3866, %v4025
      %v4096 = vadd.f32 %v3867, %v4030
      %v4097 = vadd.f32 %v3868, %v4035
      %v4098 = vadd.f32 %v3869, %v4040
      %v4099 = vadd.f32 %v3870, %v4045
      %v4100 = vadd.f32 %v3871, %v4050
      %v4101 = vadd.f32 %v3872, %v4055
      %v4102 = vadd.f32 %v3873, %v4060
      %v4103 = vadd.f32 %v3874, %v4065
      %v4104 = vadd.f32 %v3875, %v4070
      %v4105 = vadd.f32 %v3876, %v4075
      %v4106 = vadd.f32 %v3877, %v4080
      %v4107 = vadd.f32 %v3878, %v4085
      %v4108 = vadd.f32 %v3879, %v4090
      %v4109 = vld [vmem:[%s3880 + $0x2] sm:$0xff]
      %v4110 = vld [vmem:[%s3880 + $0xa] sm:$0xff]
      %v4111 = vld [vmem:[%s3880 + $0x1a] sm:$0xff]
      %v4112 = vld [vmem:[%s3880 + $0x22] sm:$0xff]
      %v4113 = vld [vmem:[%s3880 + $0x32] sm:$0xff]
      %v4114 = vld [vmem:[%s3880 + $0x3a] sm:$0xff]
      %v4115 = vld [vmem:[%s3880 + $0x4a] sm:$0xff]
      %v4116 = vld [vmem:[%s3880 + $0x52] sm:$0xff]
      %v4117 = vld [vmem:[%s3880 + $0x62] sm:$0xff]
      %v4118 = vld [vmem:[%s3880 + $0x6a] sm:$0xff]
      %v4119 = vld [vmem:[%s3880 + $0x7a] sm:$0xff]
      %v4120 = vld [vmem:[%s3880 + $0x82] sm:$0xff]
      %v4121 = vld [vmem:[%s3880 + $0x92] sm:$0xff]
      %v4122 = vld [vmem:[%s3880 + $0x9a] sm:$0xff]
      %v4123 = vld [vmem:[%s3880 + $0xaa] sm:$0xff]
      %v4124 = vld [vmem:[%s3880 + $0xb2] sm:$0xff]
      %s4125 = scalar_lea.vmem %s3, 112
      %v4126 = vld [vmem:[%s4125] sm:$0xff]
      %v4127 = vld [vmem:[%s4125 + $0x8] sm:$0xff]
      %v4129 = vsel %vm2495, %v4109, 0
      %v4132 = vsel %vm2495, %v4110, 0
      %v4135 = vsel %vm2495, %v4111, 0
      %v4138 = vsel %vm2495, %v4112, 0
      %v4141 = vsel %vm2495, %v4113, 0
      %v4144 = vsel %vm2495, %v4114, 0
      %v4147 = vsel %vm2495, %v4115, 0
      %v4150 = vsel %vm2495, %v4116, 0
      %v4153 = vsel %vm2495, %v4117, 0
      %v4156 = vsel %vm2495, %v4118, 0
      %v4159 = vsel %vm2495, %v4119, 0
      %v4162 = vsel %vm2495, %v4120, 0
      %v4165 = vsel %vm2495, %v4121, 0
      %v4168 = vsel %vm2495, %v4122, 0
      %v4171 = vsel %vm2495, %v4123, 0
      %v4174 = vsel %vm2495, %v4124, 0
      %4176 = vmatprep.subr.mxu0 0.0
      %4177 = vmatpush1.msra.mxu0 %v4126
      %4178 = vmatprep.subr.mxu0 0.0
      %4179 = vmatpush1.msra.mxu0 %v4127
      %4180 = vmatprep.subr.mxu0 0.0
      %4181 = vmatpush1.msra.mxu0 0.0
      %4182 = vmatprep.subr.mxu0 0.0
      %4183 = vmatpush1.msra.mxu0 0.0
      %4184 = vmatprep.subr.mxu0 0.0
      %4185 = vmatpush1.msra.mxu0 0.0
      %4186 = vmatprep.subr.mxu0 0.0
      %4187 = vmatpush1.msra.mxu0 0.0
      %4188 = vmatprep.subr.mxu0 0.0
      %4189 = vmatpush1.msra.mxu0 0.0
      %4190 = vmatprep.subr.mxu0 0.0
      %4191 = vmatpush1.msra.mxu0 0.0
      %4192 = vmatprep.subr.mxu0 0.0
      %4193 = vmatpush1.msra.mxu0 0.0
      %4194 = vmatprep.subr.mxu0 0.0
      %4195 = vmatpush1.msra.mxu0 0.0
      %4196 = vmatprep.subr.mxu0 0.0
      %4197 = vmatpush1.msra.mxu0 0.0
      %4198 = vmatprep.subr.mxu0 0.0
      %4199 = vmatpush1.msra.mxu0 0.0
      %4200 = vmatprep.subr.mxu0 0.0
      %4201 = vmatpush1.msra.mxu0 0.0
      %4202 = vmatprep.subr.mxu0 0.0
      %4203 = vmatpush1.msra.mxu0 0.0
      %4204 = vmatprep.subr.mxu0 0.0
      %4205 = vmatpush1.msra.mxu0 0.0
      %4206 = vmatprep.subr.mxu0 0.0
      %4207 = vmatpush1.msra.mxu0 0.0
      %4208 = vmatprep.subr.mxu0 0.0
      %4209 = vmatpush1.msra.mxu0 0.0
      %4210 = vmatprep.subr.mxu0 0.0
      %4211 = vmatpush1.msra.mxu0 0.0
      %4212 = vmatprep.subr.mxu0 0.0
      %4213 = vmatpush1.msra.mxu0 0.0
      %4214 = vmatprep.subr.mxu0 0.0
      %4215 = vmatpush1.msra.mxu0 0.0
      %4216 = vmatprep.subr.mxu0 0.0
      %4217 = vmatpush1.msra.mxu0 0.0
      %4218 = vmatprep.subr.mxu0 0.0
      %4219 = vmatpush1.msra.mxu0 0.0
      %4220 = vmatprep.subr.mxu0 0.0
      %4221 = vmatpush1.msra.mxu0 0.0
      %4222 = vmatprep.subr.mxu0 0.0
      %4223 = vmatpush1.msra.mxu0 0.0
      %4224 = vmatprep.subr.mxu0 0.0
      %4225 = vmatpush1.msra.mxu0 0.0
      %4226 = vmatprep.subr.mxu0 0.0
      %4227 = vmatpush1.msra.mxu0 0.0
      %4228 = vmatprep.subr.mxu0 0.0
      %4229 = vmatpush1.msra.mxu0 0.0
      %4230 = vmatprep.subr.mxu0 0.0
      %4231 = vmatpush1.msra.mxu0 0.0
      %4232 = vmatprep.subr.mxu0 0.0
      %4233 = vmatpush1.msra.mxu0 0.0
      %4234 = vmatprep.subr.mxu0 0.0
      %4235 = vmatpush1.msra.mxu0 0.0
      %4236 = vmatprep.subr.mxu0 0.0
      %4237 = vmatpush1.msra.mxu0 0.0
      %4238 = vmatprep.subr.mxu0 0.0
      %4239 = vmatpush1.msra.mxu0 0.0
      %4240 = vmatprep.mubr.f32.mxu0 0.0
      %4241 = vmatmul.mubr.f32.gmra.mrb[0].mxu0 %v4129
      %v4242 = vpop.f32.mrb[0].mxu0
      %v4243 = vadd.f32 0.0, %v4242
      %v4244 = vpop.f32.mrb[0].mxu0
      %4245 = vmatprep.mubr.f32.mxu0 0.0
      %4246 = vmatmul.mubr.f32.gmra.mrb[0].mxu0 %v4132
      %v4247 = vpop.f32.mrb[0].mxu0
      %v4248 = vadd.f32 0.0, %v4247
      %v4249 = vpop.f32.mrb[0].mxu0
      %4250 = vmatprep.mubr.f32.mxu0 0.0
      %4251 = vmatmul.mubr.f32.gmra.mrb[0].mxu0 %v4135
      %v4252 = vpop.f32.mrb[0].mxu0
      %v4253 = vadd.f32 0.0, %v4252
      %v4254 = vpop.f32.mrb[0].mxu0
      %4255 = vmatprep.mubr.f32.mxu0 0.0
      %4256 = vmatmul.mubr.f32.gmra.mrb[0].mxu0 %v4138
      %v4257 = vpop.f32.mrb[0].mxu0
      %v4258 = vadd.f32 0.0, %v4257
      %v4259 = vpop.f32.mrb[0].mxu0
      %4260 = vmatprep.mubr.f32.mxu0 0.0
      %4261 = vmatmul.mubr.f32.gmra.mrb[0].mxu0 %v4141
      %v4262 = vpop.f32.mrb[0].mxu0
      %v4263 = vadd.f32 0.0, %v4262
      %v4264 = vpop.f32.mrb[0].mxu0
      %4265 = vmatprep.mubr.f32.mxu0 0.0
      %4266 = vmatmul.mubr.f32.gmra.mrb[0].mxu0 %v4144
      %v4267 = vpop.f32.mrb[0].mxu0
      %v4268 = vadd.f32 0.0, %v4267
      %v4269 = vpop.f32.mrb[0].mxu0
      %4270 = vmatprep.mubr.f32.mxu0 0.0
      %4271 = vmatmul.mubr.f32.gmra.mrb[0].mxu0 %v4147
      %v4272 = vpop.f32.mrb[0].mxu0
      %v4273 = vadd.f32 0.0, %v4272
      %v4274 = vpop.f32.mrb[0].mxu0
      %4275 = vmatprep.mubr.f32.mxu0 0.0
      %4276 = vmatmul.mubr.f32.gmra.mrb[0].mxu0 %v4150
      %v4277 = vpop.f32.mrb[0].mxu0
      %v4278 = vadd.f32 0.0, %v4277
      %v4279 = vpop.f32.mrb[0].mxu0
      %4280 = vmatprep.mubr.f32.mxu0 0.0
      %4281 = vmatmul.mubr.f32.gmra.mrb[0].mxu0 %v4153
      %v4282 = vpop.f32.mrb[0].mxu0
      %v4283 = vadd.f32 0.0, %v4282
      %v4284 = vpop.f32.mrb[0].mxu0
      %4285 = vmatprep.mubr.f32.mxu0 0.0
      %4286 = vmatmul.mubr.f32.gmra.mrb[0].mxu0 %v4156
      %v4287 = vpop.f32.mrb[0].mxu0
      %v4288 = vadd.f32 0.0, %v4287
      %v4289 = vpop.f32.mrb[0].mxu0
      %4290 = vmatprep.mubr.f32.mxu0 0.0
      %4291 = vmatmul.mubr.f32.gmra.mrb[0].mxu0 %v4159
      %v4292 = vpop.f32.mrb[0].mxu0
      %v4293 = vadd.f32 0.0, %v4292
      %v4294 = vpop.f32.mrb[0].mxu0
      %4295 = vmatprep.mubr.f32.mxu0 0.0
      %4296 = vmatmul.mubr.f32.gmra.mrb[0].mxu0 %v4162
      %v4297 = vpop.f32.mrb[0].mxu0
      %v4298 = vadd.f32 0.0, %v4297
      %v4299 = vpop.f32.mrb[0].mxu0
      %4300 = vmatprep.mubr.f32.mxu0 0.0
      %4301 = vmatmul.mubr.f32.gmra.mrb[0].mxu0 %v4165
      %v4302 = vpop.f32.mrb[0].mxu0
      %v4303 = vadd.f32 0.0, %v4302
      %v4304 = vpop.f32.mrb[0].mxu0
      %4305 = vmatprep.mubr.f32.mxu0 0.0
      %4306 = vmatmul.mubr.f32.gmra.mrb[0].mxu0 %v4168
      %v4307 = vpop.f32.mrb[0].mxu0
      %v4308 = vadd.f32 0.0, %v4307
      %v4309 = vpop.f32.mrb[0].mxu0
      %4310 = vmatprep.mubr.f32.mxu0 0.0
      %4311 = vmatmul.mubr.f32.gmra.mrb[0].mxu0 %v4171
      %v4312 = vpop.f32.mrb[0].mxu0
      %v4313 = vadd.f32 0.0, %v4312
      %v4314 = vpop.f32.mrb[0].mxu0
      %4315 = vmatprep.mubr.f32.mxu0 0.0
      %4316 = vmatmul.mubr.f32.gmra.mrb[0].mxu0 %v4174
      %v4317 = vpop.f32.mrb[0].mxu0
      %v4318 = vadd.f32 0.0, %v4317
      %v4319 = vpop.f32.mrb[0].mxu0
      %4320 = vdwg.mxu0
      %v4321 = vadd.f32 %v4093, %v4243
      %v4322 = vadd.f32 %v4094, %v4248
      %v4323 = vadd.f32 %v4095, %v4253
      %v4324 = vadd.f32 %v4096, %v4258
      %v4325 = vadd.f32 %v4097, %v4263
      %v4326 = vadd.f32 %v4098, %v4268
      %v4327 = vadd.f32 %v4099, %v4273
      %v4328 = vadd.f32 %v4100, %v4278
      %v4329 = vadd.f32 %v4101, %v4283
      %v4330 = vadd.f32 %v4102, %v4288
      %v4331 = vadd.f32 %v4103, %v4293
      %v4332 = vadd.f32 %v4104, %v4298
      %v4333 = vadd.f32 %v4105, %v4303
      %v4334 = vadd.f32 %v4106, %v4308
      %v4335 = vadd.f32 %v4107, %v4313
      %v4336 = vadd.f32 %v4108, %v4318
      %v4337 = vld [vmem:[%s3880 + $0x4] sm:$0xff]
      %v4338 = vld [vmem:[%s3880 + $0xc] sm:$0xff]
      %v4339 = vld [vmem:[%s3880 + $0x1c] sm:$0xff]
      %v4340 = vld [vmem:[%s3880 + $0x24] sm:$0xff]
      %v4341 = vld [vmem:[%s3880 + $0x34] sm:$0xff]
      %v4342 = vld [vmem:[%s3880 + $0x3c] sm:$0xff]
      %v4343 = vld [vmem:[%s3880 + $0x4c] sm:$0xff]
      %v4344 = vld [vmem:[%s3880 + $0x54] sm:$0xff]
      %v4345 = vld [vmem:[%s3880 + $0x64] sm:$0xff]
      %v4346 = vld [vmem:[%s3880 + $0x6c] sm:$0xff]
      %v4347 = vld [vmem:[%s3880 + $0x7c] sm:$0xff]
      %v4348 = vld [vmem:[%s3880 + $0x84] sm:$0xff]
      %v4349 = vld [vmem:[%s3880 + $0x94] sm:$0xff]
      %v4350 = vld [vmem:[%s3880 + $0x9c] sm:$0xff]
      %v4351 = vld [vmem:[%s3880 + $0xac] sm:$0xff]
      %v4352 = vld [vmem:[%s3880 + $0xb4] sm:$0xff]
      %s4353 = scalar_lea.vmem %s3, 128
      %v4354 = vld [vmem:[%s4353] sm:$0xff]
      %v4355 = vld [vmem:[%s4353 + $0x8] sm:$0xff]
      %v4357 = vsel %vm2495, %v4337, 0
      %v4360 = vsel %vm2495, %v4338, 0
      %v4363 = vsel %vm2495, %v4339, 0
      %v4366 = vsel %vm2495, %v4340, 0
      %v4369 = vsel %vm2495, %v4341, 0
      %v4372 = vsel %vm2495, %v4342, 0
      %v4375 = vsel %vm2495, %v4343, 0
      %v4378 = vsel %vm2495, %v4344, 0
      %v4381 = vsel %vm2495, %v4345, 0
      %v4384 = vsel %vm2495, %v4346, 0
      %v4387 = vsel %vm2495, %v4347, 0
      %v4390 = vsel %vm2495, %v4348, 0
      %v4393 = vsel %vm2495, %v4349, 0
      %v4396 = vsel %vm2495, %v4350, 0
      %v4399 = vsel %vm2495, %v4351, 0
      %v4402 = vsel %vm2495, %v4352, 0
      %4404 = vmatprep.subr.mxu0 0.0
      %4405 = vmatpush1.msra.mxu0 %v4354
      %4406 = vmatprep.subr.mxu0 0.0
      %4407 = vmatpush1.msra.mxu0 %v4355
      %4408 = vmatprep.subr.mxu0 0.0
      %4409 = vmatpush1.msra.mxu0 0.0
      %4410 = vmatprep.subr.mxu0 0.0
      %4411 = vmatpush1.msra.mxu0 0.0
      %4412 = vmatprep.subr.mxu0 0.0
      %4413 = vmatpush1.msra.mxu0 0.0
      %4414 = vmatprep.subr.mxu0 0.0
      %4415 = vmatpush1.msra.mxu0 0.0
      %4416 = vmatprep.subr.mxu0 0.0
      %4417 = vmatpush1.msra.mxu0 0.0
      %4418 = vmatprep.subr.mxu0 0.0
      %4419 = vmatpush1.msra.mxu0 0.0
      %4420 = vmatprep.subr.mxu0 0.0
      %4421 = vmatpush1.msra.mxu0 0.0
      %4422 = vmatprep.subr.mxu0 0.0
      %4423 = vmatpush1.msra.mxu0 0.0
      %4424 = vmatprep.subr.mxu0 0.0
      %4425 = vmatpush1.msra.mxu0 0.0
      %4426 = vmatprep.subr.mxu0 0.0
      %4427 = vmatpush1.msra.mxu0 0.0
      %4428 = vmatprep.subr.mxu0 0.0
      %4429 = vmatpush1.msra.mxu0 0.0
      %4430 = vmatprep.subr.mxu0 0.0
      %4431 = vmatpush1.msra.mxu0 0.0
      %4432 = vmatprep.subr.mxu0 0.0
      %4433 = vmatpush1.msra.mxu0 0.0
      %4434 = vmatprep.subr.mxu0 0.0
      %4435 = vmatpush1.msra.mxu0 0.0
      %4436 = vmatprep.subr.mxu0 0.0
      %4437 = vmatpush1.msra.mxu0 0.0
      %4438 = vmatprep.subr.mxu0 0.0
      %4439 = vmatpush1.msra.mxu0 0.0
      %4440 = vmatprep.subr.mxu0 0.0
      %4441 = vmatpush1.msra.mxu0 0.0
      %4442 = vmatprep.subr.mxu0 0.0
      %4443 = vmatpush1.msra.mxu0 0.0
      %4444 = vmatprep.subr.mxu0 0.0
      %4445 = vmatpush1.msra.mxu0 0.0
      %4446 = vmatprep.subr.mxu0 0.0
      %4447 = vmatpush1.msra.mxu0 0.0
      %4448 = vmatprep.subr.mxu0 0.0
      %4449 = vmatpush1.msra.mxu0 0.0
      %4450 = vmatprep.subr.mxu0 0.0
      %4451 = vmatpush1.msra.mxu0 0.0
      %4452 = vmatprep.subr.mxu0 0.0
      %4453 = vmatpush1.msra.mxu0 0.0
      %4454 = vmatprep.subr.mxu0 0.0
      %4455 = vmatpush1.msra.mxu0 0.0
      %4456 = vmatprep.subr.mxu0 0.0
      %4457 = vmatpush1.msra.mxu0 0.0
      %4458 = vmatprep.subr.mxu0 0.0
      %4459 = vmatpush1.msra.mxu0 0.0
      %4460 = vmatprep.subr.mxu0 0.0
      %4461 = vmatpush1.msra.mxu0 0.0
      %4462 = vmatprep.subr.mxu0 0.0
      %4463 = vmatpush1.msra.mxu0 0.0
      %4464 = vmatprep.subr.mxu0 0.0
      %4465 = vmatpush1.msra.mxu0 0.0
      %4466 = vmatprep.subr.mxu0 0.0
      %4467 = vmatpush1.msra.mxu0 0.0
      %4468 = vmatprep.mubr.f32.mxu0 0.0
      %4469 = vmatmul.mubr.f32.gmra.mrb[0].mxu0 %v4357
      %v4470 = vpop.f32.mrb[0].mxu0
      %v4471 = vadd.f32 0.0, %v4470
      %v4472 = vpop.f32.mrb[0].mxu0
      %4473 = vmatprep.mubr.f32.mxu0 0.0
      %4474 = vmatmul.mubr.f32.gmra.mrb[0].mxu0 %v4360
      %v4475 = vpop.f32.mrb[0].mxu0
      %v4476 = vadd.f32 0.0, %v4475
      %v4477 = vpop.f32.mrb[0].mxu0
      %4478 = vmatprep.mubr.f32.mxu0 0.0
      %4479 = vmatmul.mubr.f32.gmra.mrb[0].mxu0 %v4363
      %v4480 = vpop.f32.mrb[0].mxu0
      %v4481 = vadd.f32 0.0, %v4480
      %v4482 = vpop.f32.mrb[0].mxu0
      %4483 = vmatprep.mubr.f32.mxu0 0.0
      %4484 = vmatmul.mubr.f32.gmra.mrb[0].mxu0 %v4366
      %v4485 = vpop.f32.mrb[0].mxu0
      %v4486 = vadd.f32 0.0, %v4485
      %v4487 = vpop.f32.mrb[0].mxu0
      %4488 = vmatprep.mubr.f32.mxu0 0.0
      %4489 = vmatmul.mubr.f32.gmra.mrb[0].mxu0 %v4369
      %v4490 = vpop.f32.mrb[0].mxu0
      %v4491 = vadd.f32 0.0, %v4490
      %v4492 = vpop.f32.mrb[0].mxu0
      %4493 = vmatprep.mubr.f32.mxu0 0.0
      %4494 = vmatmul.mubr.f32.gmra.mrb[0].mxu0 %v4372
      %v4495 = vpop.f32.mrb[0].mxu0
      %v4496 = vadd.f32 0.0, %v4495
      %v4497 = vpop.f32.mrb[0].mxu0
      %4498 = vmatprep.mubr.f32.mxu0 0.0
      %4499 = vmatmul.mubr.f32.gmra.mrb[0].mxu0 %v4375
      %v4500 = vpop.f32.mrb[0].mxu0
      %v4501 = vadd.f32 0.0, %v4500
      %v4502 = vpop.f32.mrb[0].mxu0
      %4503 = vmatprep.mubr.f32.mxu0 0.0
      %4504 = vmatmul.mubr.f32.gmra.mrb[0].mxu0 %v4378
      %v4505 = vpop.f32.mrb[0].mxu0
      %v4506 = vadd.f32 0.0, %v4505
      %v4507 = vpop.f32.mrb[0].mxu0
      %4508 = vmatprep.mubr.f32.mxu0 0.0
      %4509 = vmatmul.mubr.f32.gmra.mrb[0].mxu0 %v4381
      %v4510 = vpop.f32.mrb[0].mxu0
      %v4511 = vadd.f32 0.0, %v4510
      %v4512 = vpop.f32.mrb[0].mxu0
      %4513 = vmatprep.mubr.f32.mxu0 0.0
      %4514 = vmatmul.mubr.f32.gmra.mrb[0].mxu0 %v4384
      %v4515 = vpop.f32.mrb[0].mxu0
      %v4516 = vadd.f32 0.0, %v4515
      %v4517 = vpop.f32.mrb[0].mxu0
      %4518 = vmatprep.mubr.f32.mxu0 0.0
      %4519 = vmatmul.mubr.f32.gmra.mrb[0].mxu0 %v4387
      %v4520 = vpop.f32.mrb[0].mxu0
      %v4521 = vadd.f32 0.0, %v4520
      %v4522 = vpop.f32.mrb[0].mxu0
      %4523 = vmatprep.mubr.f32.mxu0 0.0
      %4524 = vmatmul.mubr.f32.gmra.mrb[0].mxu0 %v4390
      %v4525 = vpop.f32.mrb[0].mxu0
      %v4526 = vadd.f32 0.0, %v4525
      %v4527 = vpop.f32.mrb[0].mxu0
      %4528 = vmatprep.mubr.f32.mxu0 0.0
      %4529 = vmatmul.mubr.f32.gmra.mrb[0].mxu0 %v4393
      %v4530 = vpop.f32.mrb[0].mxu0
      %v4531 = vadd.f32 0.0, %v4530
      %v4532 = vpop.f32.mrb[0].mxu0
      %4533 = vmatprep.mubr.f32.mxu0 0.0
      %4534 = vmatmul.mubr.f32.gmra.mrb[0].mxu0 %v4396
      %v4535 = vpop.f32.mrb[0].mxu0
      %v4536 = vadd.f32 0.0, %v4535
      %v4537 = vpop.f32.mrb[0].mxu0
      %4538 = vmatprep.mubr.f32.mxu0 0.0
      %4539 = vmatmul.mubr.f32.gmra.mrb[0].mxu0 %v4399
      %v4540 = vpop.f32.mrb[0].mxu0
      %v4541 = vadd.f32 0.0, %v4540
      %v4542 = vpop.f32.mrb[0].mxu0
      %4543 = vmatprep.mubr.f32.mxu0 0.0
      %4544 = vmatmul.mubr.f32.gmra.mrb[0].mxu0 %v4402
      %v4545 = vpop.f32.mrb[0].mxu0
      %v4546 = vadd.f32 0.0, %v4545
      %v4547 = vpop.f32.mrb[0].mxu0
      %4548 = vdwg.mxu0
      %v4549 = vadd.f32 %v4321, %v4471
      %v4550 = vadd.f32 %v4322, %v4476
      %v4551 = vadd.f32 %v4323, %v4481
      %v4552 = vadd.f32 %v4324, %v4486
      %v4553 = vadd.f32 %v4325, %v4491
      %v4554 = vadd.f32 %v4326, %v4496
      %v4555 = vadd.f32 %v4327, %v4501
      %v4556 = vadd.f32 %v4328, %v4506
      %v4557 = vadd.f32 %v4329, %v4511
      %v4558 = vadd.f32 %v4330, %v4516
      %v4559 = vadd.f32 %v4331, %v4521
      %v4560 = vadd.f32 %v4332, %v4526
      %v4561 = vadd.f32 %v4333, %v4531
      %v4562 = vadd.f32 %v4334, %v4536
      %v4563 = vadd.f32 %v4335, %v4541
      %v4564 = vadd.f32 %v4336, %v4546
      %v4565 = vld [vmem:[%s4] sm:$0x1]
      %v4567 = vlaneseq
      %v4568 = vshrl.u32 %v4567, 7
      %v4569 = vsub.s32 0, %v4568
      %v4570 = vrot.slane %v4565, %v4569
      %v4572 = vadd.f32 %v4549, %v4570
      %v4573 = vadd.f32 %v4550, %v4570
      %v4574 = vadd.f32 %v4551, %v4570
      %v4575 = vadd.f32 %v4552, %v4570
      %v4576 = vadd.f32 %v4553, %v4570
      %v4577 = vadd.f32 %v4554, %v4570
      %v4578 = vadd.f32 %v4555, %v4570
      %v4579 = vadd.f32 %v4556, %v4570
      %v4580 = vadd.f32 %v4557, %v4570
      %v4581 = vadd.f32 %v4558, %v4570
      %v4582 = vadd.f32 %v4559, %v4570
      %v4583 = vadd.f32 %v4560, %v4570
      %v4584 = vadd.f32 %v4561, %v4570
      %v4585 = vadd.f32 %v4562, %v4570
      %v4586 = vadd.f32 %v4563, %v4570
      %v4587 = vadd.f32 %v4564, %v4570
      %v4588 = vmax.f32 %v4572, 0.0
      %v4589 = vmax.f32 %v4573, 0.0
      %v4590 = vmax.f32 %v4574, 0.0
      %v4591 = vmax.f32 %v4575, 0.0
      %v4592 = vmax.f32 %v4576, 0.0
      %v4593 = vmax.f32 %v4577, 0.0
      %v4594 = vmax.f32 %v4578, 0.0
      %v4595 = vmax.f32 %v4579, 0.0
      %v4596 = vmax.f32 %v4580, 0.0
      %v4597 = vmax.f32 %v4581, 0.0
      %v4598 = vmax.f32 %v4582, 0.0
      %v4599 = vmax.f32 %v4583, 0.0
      %v4600 = vmax.f32 %v4584, 0.0
      %v4601 = vmax.f32 %v4585, 0.0
      %v4602 = vmax.f32 %v4586, 0.0
      %v4603 = vmax.f32 %v4587, 0.0
      %v4604 = vmax.f32 %v4588, %v4590
      %v4605 = vmax.f32 %v4589, %v4591
      %v4606 = vmax.f32 %v4592, %v4594
      %v4607 = vmax.f32 %v4593, %v4595
      %v4608 = vmax.f32 %v4596, %v4598
      %v4609 = vmax.f32 %v4597, %v4599
      %v4610 = vmax.f32 %v4600, %v4602
      %v4611 = vmax.f32 %v4601, %v4603
      %vm4612 = vcmask 31744
      %4613 = vst.msk [vmem:[#allocation3] sm:$0xff] %vm4612, 0.0
      %4614 = vst.msk [vmem:[#allocation3 + $0x8] sm:$0xff] %vm4612, 0.0
      %vm4615 = vcmask 25600
      %4616 = vst.msk [vmem:[#allocation3 + $0x10] sm:$0x3] %vm4615, 0.0
      %4617 = vst.msk [vmem:[#allocation3 + $0x18] sm:$0xff] %vm4612, 0.0
      %4618 = vst.msk [vmem:[#allocation3 + $0x20] sm:$0xff] %vm4612, 0.0
      %4619 = vst.msk [vmem:[#allocation3 + $0x28] sm:$0x3] %vm4615, 0.0
      %4620 = vst.msk [vmem:[#allocation3 + $0x30] sm:$0xff] %vm4612, 0.0
      %4621 = vst.msk [vmem:[#allocation3 + $0x38] sm:$0xff] %vm4612, 0.0
      %4622 = vst.msk [vmem:[#allocation3 + $0x40] sm:$0x3] %vm4615, 0.0
      %4623 = vst.msk [vmem:[#allocation3 + $0x48] sm:$0xff] %vm4612, 0.0
      %4624 = vst.msk [vmem:[#allocation3 + $0x50] sm:$0xff] %vm4612, 0.0
      %4625 = vst.msk [vmem:[#allocation3 + $0x58] sm:$0x3] %vm4615, 0.0
      %4626 = vst.msk [vmem:[#allocation3] sm:$0xff] %vm4612, %v4604
      %4627 = vst.msk [vmem:[#allocation3 + $0x8] sm:$0xff] %vm4612, %v4605
      %4628 = vst.msk [vmem:[#allocation3 + $0x18] sm:$0xff] %vm4612, %v4606
      %4629 = vst.msk [vmem:[#allocation3 + $0x20] sm:$0xff] %vm4612, %v4607
      %4630 = vst.msk [vmem:[#allocation3 + $0x30] sm:$0xff] %vm4612, %v4608
      %4631 = vst.msk [vmem:[#allocation3 + $0x38] sm:$0xff] %vm4612, %v4609
      %4632 = vst.msk [vmem:[#allocation3 + $0x48] sm:$0xff] %vm4612, %v4610
      %4633 = vst.msk [vmem:[#allocation3 + $0x50] sm:$0xff] %vm4612, %v4611
      %v4634 = vld [vmem:[#allocation3] sm:$0xff]
      %v4635 = vld [vmem:[#allocation3 + $0x8] sm:$0xff]
      %v4636 = vld [vmem:[#allocation3 + $0x18] sm:$0xff]
      %v4637 = vld [vmem:[#allocation3 + $0x20] sm:$0xff]
      %v4638 = vld [vmem:[#allocation3 + $0x30] sm:$0xff]
      %v4639 = vld [vmem:[#allocation3 + $0x38] sm:$0xff]
      %v4640 = vld [vmem:[#allocation3 + $0x48] sm:$0xff]
      %v4641 = vld [vmem:[#allocation3 + $0x50] sm:$0xff]
      %v4642 = vld [vmem:[#allocation3 + $0x2] sm:$0xff]
      %v4643 = vld [vmem:[#allocation3 + $0xa] sm:$0xff]
      %v4644 = vld [vmem:[#allocation3 + $0x1a] sm:$0xff]
      %v4645 = vld [vmem:[#allocation3 + $0x22] sm:$0xff]
      %v4646 = vld [vmem:[#allocation3 + $0x32] sm:$0xff]
      %v4647 = vld [vmem:[#allocation3 + $0x3a] sm:$0xff]
      %v4648 = vld [vmem:[#allocation3 + $0x4a] sm:$0xff]
      %v4649 = vld [vmem:[#allocation3 + $0x52] sm:$0xff]
      %v4650 = vmax.f32 %v4634, %v4642
      %v4651 = vmax.f32 %v4635, %v4643
      %v4652 = vmax.f32 %v4636, %v4644
      %v4653 = vmax.f32 %v4637, %v4645
      %v4654 = vmax.f32 %v4638, %v4646
      %v4655 = vmax.f32 %v4639, %v4647
      %v4656 = vmax.f32 %v4640, %v4648
      %v4657 = vmax.f32 %v4641, %v4649
      %vm4658 = vcmask 24576
      %4659 = vst.msk [vmem:[#allocation4] sm:$0x1] %vm4658, %v4650
      %vm4660 = vcmask 28676
      %4661 = vst.msk [vmem:[#allocation4 - $0x3] sm:$0x10] %vm4660, %v4650
      %4662 = vst.msk [vmem:[#allocation4 + $0x2] sm:$0x1] %vm4658, %v4651
      %4663 = vst.msk [vmem:[#allocation4 - $0x1] sm:$0x10] %vm4660, %v4651
      %4664 = vst.msk [vmem:[#allocation4 + $0x4] sm:$0x1] %vm4658, %v4652
      %4665 = vst.msk [vmem:[#allocation4 + $0x1] sm:$0x10] %vm4660, %v4652
      %4666 = vst.msk [vmem:[#allocation4 + $0x6] sm:$0x1] %vm4658, %v4653
      %4667 = vst.msk [vmem:[#allocation4 + $0x3] sm:$0x10] %vm4660, %v4653
      %4668 = vst.msk [vmem:[#allocation4 + $0x8] sm:$0x1] %vm4658, %v4654
      %4669 = vst.msk [vmem:[#allocation4 + $0x5] sm:$0x10] %vm4660, %v4654
      %4670 = vst.msk [vmem:[#allocation4 + $0xa] sm:$0x1] %vm4658, %v4655
      %4671 = vst.msk [vmem:[#allocation4 + $0x7] sm:$0x10] %vm4660, %v4655
      %4672 = vst.msk [vmem:[#allocation4 + $0xc] sm:$0x1] %vm4658, %v4656
      %4673 = vst.msk [vmem:[#allocation4 + $0x9] sm:$0x10] %vm4660, %v4656
      %4674 = vst.msk [vmem:[#allocation4 + $0xe] sm:$0x1] %vm4658, %v4657
      %4675 = vst.msk [vmem:[#allocation4 + $0xb] sm:$0x10] %vm4660, %v4657
      %v4676 = vld [vmem:[#allocation4] sm:$0xff]
      %v4677 = vld [vmem:[#allocation4 + $0x8] sm:$0xff]
      %v4678 = vld [vmem:[%s5] sm:$0x1]
      %4680 = vset.pattern.permute.xlu0 0
      %4681 = vperm.xlu0 %4680, %v4676
      %v4682 = vpop.permute.xlu0 %4681
      %4685 = vset.pattern.permute.xlu0 0
      %4686 = vperm.xlu0 %4685, %v4677
      %v4687 = vpop.permute.xlu0 %4686
      %v4689 = vlaneseq
      %v4690 = vshrl.u32 %v4689, 7
      %v4691 = vsub.s32 0, %v4690
      %v4692 = vrot.slane %v4678, %v4691
      %v4693 = vmul.f32 %v4682, %v4692
      %v4694 = vmul.f32 %v4687, %v4692
      %v4695 = vadd.f32 %v4693, 0.0
      %v4696 = vadd.f32 %v4694, 0.0
      %v4697 = vld [vmem:[%s5 + $0x1] sm:$0x1]
      %4698 = vset.pattern.permute.xlu0 1
      %4699 = vperm.xlu0 %4698, %v4676
      %v4700 = vpop.permute.xlu0 %4699
      %4702 = vset.pattern.permute.xlu0 1
      %4703 = vperm.xlu0 %4702, %v4677
      %v4704 = vpop.permute.xlu0 %4703
      %v4706 = vlaneseq
      %v4707 = vshrl.u32 %v4706, 7
      %v4708 = vsub.s32 0, %v4707
      %v4709 = vrot.slane %v4697, %v4708
      %v4710 = vmul.f32 %v4700, %v4709
      %v4711 = vmul.f32 %v4704, %v4709
      %v4712 = vadd.f32 %v4695, %v4710
      %v4713 = vadd.f32 %v4696, %v4711
      %v4714 = vld [vmem:[%s5 + $0x2] sm:$0x1]
      %4715 = vset.pattern.permute.xlu0 2
      %4716 = vperm.xlu0 %4715, %v4676
      %v4717 = vpop.permute.xlu0 %4716
      %4719 = vset.pattern.permute.xlu0 2
      %4720 = vperm.xlu0 %4719, %v4677
      %v4721 = vpop.permute.xlu0 %4720
      %v4723 = vlaneseq
      %v4724 = vshrl.u32 %v4723, 7
      %v4725 = vsub.s32 0, %v4724
      %v4726 = vrot.slane %v4714, %v4725
      %v4727 = vmul.f32 %v4717, %v4726
      %v4728 = vmul.f32 %v4721, %v4726
      %v4729 = vadd.f32 %v4712, %v4727
      %v4730 = vadd.f32 %v4713, %v4728
      %v4731 = vld [vmem:[%s5 + $0x3] sm:$0x1]
      %4732 = vset.pattern.permute.xlu0 3
      %4733 = vperm.xlu0 %4732, %v4676
      %v4734 = vpop.permute.xlu0 %4733
      %4736 = vset.pattern.permute.xlu0 3
      %4737 = vperm.xlu0 %4736, %v4677
      %v4738 = vpop.permute.xlu0 %4737
      %v4740 = vlaneseq
      %v4741 = vshrl.u32 %v4740, 7
      %v4742 = vsub.s32 0, %v4741
      %v4743 = vrot.slane %v4731, %v4742
      %v4744 = vmul.f32 %v4734, %v4743
      %v4745 = vmul.f32 %v4738, %v4743
      %v4746 = vadd.f32 %v4729, %v4744
      %v4747 = vadd.f32 %v4730, %v4745
      %v4748 = vld [vmem:[%s6] sm:$0x1]
      %v4750 = vlaneseq
      %v4751 = vshrl.u32 %v4750, 7
      %v4752 = vsub.s32 0, %v4751
      %v4753 = vrot.slane %v4748, %v4752
      %v4755 = vadd.f32 %v4746, %v4753
      %v4756 = vadd.f32 %v4747, %v4753
      %v4757 = vmax.f32 %v4755, 0.0
      %v4758 = vmax.f32 %v4756, 0.0
      %v4759 = vld [vmem:[%s7] sm:$0xff]
      %v4760 = vld [vmem:[%s7 + $0x8] sm:$0xff]
      %v4761 = vld [vmem:[%s7 + $0x10] sm:$0xff]
      %v4762 = vld [vmem:[%s7 + $0x18] sm:$0xff]
      %v4763 = vld [vmem:[%s7 + $0x20] sm:$0xff]
      %v4764 = vld [vmem:[%s7 + $0x28] sm:$0xff]
      %v4765 = vld [vmem:[%s7 + $0x30] sm:$0xff]
      %v4766 = vld [vmem:[%s7 + $0x38] sm:$0xff]
      %v4767 = vld [vmem:[%s8] sm:$0x1]
      %v4769 = vlaneseq
      %v4770 = vshrl.u32 %v4769, 7
      %v4771 = vsub.s32 0, %v4770
      %v4772 = vrot.slane %v4767, %v4771
      %vm4774 = vcmask 523264
      %v4776 = vsel %vm4774, %v4757, 0
      %v4779 = vsel %vm4774, %v4758, 0
      %4781 = vmatprep.subr.mxu0 0.0
      %4782 = vmatpush1.msra.mxu0 %v4759
      %4783 = vmatprep.subr.mxu0 0.0
      %4784 = vmatpush1.msra.mxu0 %v4760
      %4785 = vmatprep.subr.mxu0 0.0
      %4786 = vmatpush1.msra.mxu0 %v4761
      %4787 = vmatprep.subr.mxu0 0.0
      %4788 = vmatpush1.msra.mxu0 %v4762
      %4789 = vmatprep.subr.mxu0 0.0
      %4790 = vmatpush1.msra.mxu0 %v4763
      %4791 = vmatprep.subr.mxu0 0.0
      %4792 = vmatpush1.msra.mxu0 %v4764
      %4793 = vmatprep.subr.mxu0 0.0
      %4794 = vmatpush1.msra.mxu0 %v4765
      %4795 = vmatprep.subr.mxu0 0.0
      %4796 = vmatpush1.msra.mxu0 %v4766
      %4797 = vmatprep.subr.mxu0 0.0
      %4798 = vmatpush1.msra.mxu0 0.0
      %4799 = vmatprep.subr.mxu0 0.0
      %4800 = vmatpush1.msra.mxu0 0.0
      %4801 = vmatprep.subr.mxu0 0.0
      %4802 = vmatpush1.msra.mxu0 0.0
      %4803 = vmatprep.subr.mxu0 0.0
      %4804 = vmatpush1.msra.mxu0 0.0
      %4805 = vmatprep.subr.mxu0 0.0
      %4806 = vmatpush1.msra.mxu0 0.0
      %4807 = vmatprep.subr.mxu0 0.0
      %4808 = vmatpush1.msra.mxu0 0.0
      %4809 = vmatprep.subr.mxu0 0.0
      %4810 = vmatpush1.msra.mxu0 0.0
      %4811 = vmatprep.subr.mxu0 0.0
      %4812 = vmatpush1.msra.mxu0 0.0
      %4813 = vmatprep.subr.mxu0 0.0
      %4814 = vmatpush1.msra.mxu0 0.0
      %4815 = vmatprep.subr.mxu0 0.0
      %4816 = vmatpush1.msra.mxu0 0.0
      %4817 = vmatprep.subr.mxu0 0.0
      %4818 = vmatpush1.msra.mxu0 0.0
      %4819 = vmatprep.subr.mxu0 0.0
      %4820 = vmatpush1.msra.mxu0 0.0
      %4821 = vmatprep.subr.mxu0 0.0
      %4822 = vmatpush1.msra.mxu0 0.0
      %4823 = vmatprep.subr.mxu0 0.0
      %4824 = vmatpush1.msra.mxu0 0.0
      %4825 = vmatprep.subr.mxu0 0.0
      %4826 = vmatpush1.msra.mxu0 0.0
      %4827 = vmatprep.subr.mxu0 0.0
      %4828 = vmatpush1.msra.mxu0 0.0
      %4829 = vmatprep.subr.mxu0 0.0
      %4830 = vmatpush1.msra.mxu0 0.0
      %4831 = vmatprep.subr.mxu0 0.0
      %4832 = vmatpush1.msra.mxu0 0.0
      %4833 = vmatprep.subr.mxu0 0.0
      %4834 = vmatpush1.msra.mxu0 0.0
      %4835 = vmatprep.subr.mxu0 0.0
      %4836 = vmatpush1.msra.mxu0 0.0
      %4837 = vmatprep.subr.mxu0 0.0
      %4838 = vmatpush1.msra.mxu0 0.0
      %4839 = vmatprep.subr.mxu0 0.0
      %4840 = vmatpush1.msra.mxu0 0.0
      %4841 = vmatprep.subr.mxu0 0.0
      %4842 = vmatpush1.msra.mxu0 0.0
      %4843 = vmatprep.subr.mxu0 0.0
      %4844 = vmatpush1.msra.mxu0 0.0
      %4845 = vmatprep.mubr.f32.mxu0 0.0
      %4846 = vmatmul.mubr.f32.gmra.mrb[0].mxu0 %v4776
      %v4847 = vpop.f32.mrb[0].mxu0
      %v4848 = vadd.f32 %v4772, %v4847
      %v4849 = vpop.f32.mrb[0].mxu0
      %4850 = vmatprep.mubr.f32.mxu0 0.0
      %4851 = vmatmul.mubr.f32.gmra.mrb[0].mxu0 %v4779
      %v4852 = vpop.f32.mrb[0].mxu0
      %v4853 = vadd.f32 %v4772, %v4852
      %v4854 = vpop.f32.mrb[0].mxu0
      %4855 = vdwg.mxu0
      %v4856 = vsub.f32 0.0, %v4848
      %v4857 = vsub.f32 0.0, %v4853
      %v4858 = vmul.f32 %v4856, 1.442695
      %v4859 = vpow.pop %v4858
      %v4860 = vmul.f32 %v4857, 1.442695
      %v4861 = vpow.pop %v4860
      %v4862 = vadd.f32 %v4859, 1.0
      %v4863 = vadd.f32 %v4861, 1.0
      %v4864 = vrcp.pop %v4862
      %v4865 = vrcp.pop %v4863
      %4866 = vst.msk [vmem:[%s332] sm:$0xff] %vm2495, %v4864
      %4867 = vst.msk [vmem:[%s332 + $0x8] sm:$0xff] %vm2495, %v4865
      %p4868 = scmp.lt.s32.totalorder %s20, 1
      %s4869 = scalar_select %p4868, %s20, 1
      %s4870 = smul.addr %s4869, 2
      %s4871 = smul.addr %s4870, 8
      %s4872 = scalar_lea.vmem %s9, %s4871
      // Predicated region
      $region57: #{conv_autoencoder_forward.1} parent=55 // pred_check
        %p4873 = pneg %p232
      $region58: #{conv_autoencoder_forward.1} parent=55 // pred_check_branch
        %4875 = sbr.rel (%p4873) target = $region60
      $region59: #{conv_autoencoder_forward.1} parent=55 // pred_region
        _
      $region60: #{conv_autoencoder_forward.1} parent=55 // pred_fallthru
        _
    $region56: #{conv_autoencoder_forward.1} parent=5 // pred_fallthru
      _
    %p4876 = scmp.le.s32.totalorder 2, %s15
    // Predicated region
    $region61: #{conv_autoencoder_forward.1} parent=5 // pred_check
      %p4877 = pneg %p4876
    $region62: #{conv_autoencoder_forward.1} parent=5 // pred_check_branch
      %4879 = sbr.rel (%p4877) target = $region64
    $region63: #{conv_autoencoder_forward.1} parent=5 // pred_region
      %s4880 = ssub.s32 %s15, 2
      // Predicated region
      $region65: #{conv_autoencoder_forward.1} parent=63 // pred_check
        %p4881 = pneg %p238
      $region66: #{conv_autoencoder_forward.1} parent=63 // pred_check_branch
        %4883 = sbr.rel (%p4881) target = $region68
      $region67: #{conv_autoencoder_forward.1} parent=63 // pred_region
        %p4884 = scmp.lt.s32.totalorder %s21, 1
        %s4885 = scalar_select %p4884, %s21, 1
        %s4886 = smul.addr %s4885, 2
        %s4887 = smul.addr %s4886, 8
        %s4888 = scalar_lea.vmem %s9, %s4887
      $region68: #{conv_autoencoder_forward.1} parent=63 // pred_fallthru
        _
    $region64: #{conv_autoencoder_forward.1} parent=5 // pred_fallthru
      _
  $region6: #{conv_autoencoder_forward.1} parent=0 // loop_footer
    %s19 = sadd.s32 1, %s15
  $region7: #{conv_autoencoder_forward.1} parent=0 // loop_footer_branch
    %14 = sbr.rel target = $region3
  $region8: #{conv_autoencoder_forward.1} parent=0 // loop_exit
    _

</llo_original>
